<compile_context>
chip_gen: v6e
topology: v6e:2x2x1
jax: 0.10.0
libtpu: 0.0.40
codegen_flags: <defaults>
</compile_context>

<pallas_src>
import jax
import jax.numpy as jnp
import numpy as np
from jax import lax
from jax.experimental import pallas as pl
from jax.experimental.pallas import tpu as pltpu

H1 = 50            # hidden size of lstm_1 (fixed by the module)
GP = 128           # lanes per gate block (i | f | g | o)
DOFF = 64          # lane offset of the bwd direction inside a gate block
GW = 4 * GP        # total gate width  (512)
SW = GP            # packed state width [h_fwd(0:64) | h_bwd(64:128)] = 128

_SIG_GATES = (0, 1, 3)          # i, f, o are sigmoid gates (g=tanh is gate 2)


# --------------------------------------------------------------------------
# kernel
# --------------------------------------------------------------------------
def encoder_kernel(xf_ref, xr_ref,                       # (T*BP, 1) each
                   w1f_ref, w1b_ref, b1_ref, w1hh_ref,   # (1,GW),(1,GW),(1,GW),(SW,GW)
                   wA_ref, wB_ref, b2_ref, w2hh_ref,     # (SW,GW),(SW,GW),(1,GW),(SW,GW)
                   out_ref,                              # (BP, SW)
                   gx_ref,                               # (T*BP, GW)  scratch, reused L1/L2
                   a_ref, b_ref):                        # (T*BP, SW)  scratch
    BP = out_ref.shape[0]
    T = gx_ref.shape[0] // BP
    f32 = jnp.float32
    unroll = next(u for u in (8, 4, 2, 1) if T % u == 0)

    def cell(gates, c):
        # 0.5 pre-scale of i/f/o pre-activations is folded into the weights, so
        # a single tanh over the whole (BP, GW) tile + a per-gate affine gives
        # sigmoid(z) = 0.5*tanh(0.5*z) + 0.5 for i/f/o and tanh(z) for g.
        t = jnp.tanh(gates)
        i = 0.5 * t[:, 0 * GP:1 * GP] + 0.5
        f = 0.5 * t[:, 1 * GP:2 * GP] + 0.5
        g = t[:, 2 * GP:3 * GP]
        o = 0.5 * t[:, 3 * GP:4 * GP] + 0.5
        c_new = f * c + i * g
        h_new = o * jnp.tanh(c_new)
        return h_new, c_new
        # padded lanes: pre-act 0 -> i=f=o=0.5, g=0 -> c,h stay exactly 0.

    # ---- layer-1 input projection: one vectorized broadcast expression ----
    # row (s*BP + b): fwd gate cols from x[b, s], bwd gate cols from x[b, T-1-s]
    gx_ref[...] = (xf_ref[...] * w1f_ref[...]
                   + xr_ref[...] * w1b_ref[...]
                   + b1_ref[...])

    # ---- layer-1 fused fwd/bwd recurrence ----------------------------------
    w1hh = w1hh_ref[...]
    zeros_state = jnp.zeros((BP, SW), f32)

    def step1(s, carry):
        h, c = carry                         # h = [h1_fwd(s-1) | h1_bwd(T-s)]
        r = pl.multiple_of(s * BP, BP)
        gates = gx_ref[pl.ds(r, BP), :] + jnp.dot(h, w1hh,
                                                  preferred_element_type=f32)
        h, c = cell(gates, c)                # h = [h1_fwd(s) | h1_bwd(T-1-s)]
        a_ref[pl.ds(r, BP), :] = h           # step order:      A[s]     = h
        rr = pl.multiple_of((T - 1 - s) * BP, BP)
        b_ref[pl.ds(rr, BP), :] = h          # reversed order:  Bv[T-1-s] = h
        return (h, c)

    lax.fori_loop(0, T, step1, (zeros_state, zeros_state), unroll=unroll)

    # ---- layer-2 input projection: two big matmuls, gx buffer reused -------
    # gx2[s] needs fwd gates from o1(s) and bwd gates from o1(T-1-s):
    #   A[s]  = [h1_fwd(s)     | h1_bwd(T-1-s)]
    #   Bv[s] = [h1_fwd(T-1-s) | h1_bwd(s)    ]
    # W_A / W_B route each half to the correct gate columns (see packers).
    gx_ref[...] = (jnp.dot(a_ref[...], wA_ref[...], preferred_element_type=f32)
                   + jnp.dot(b_ref[...], wB_ref[...], preferred_element_type=f32)
                   + b2_ref[...])

    # ---- layer-2 fused fwd/bwd recurrence ----------------------------------
    w2hh = w2hh_ref[...]

    def step2(s, carry):
        h, c = carry
        r = pl.multiple_of(s * BP, BP)
        gates = gx_ref[pl.ds(r, BP), :] + jnp.dot(h, w2hh,
                                                  preferred_element_type=f32)
        return cell(gates, c)

    h2, _ = lax.fori_loop(0, T, step2, (zeros_state, zeros_state), unroll=unroll)

    # final state: fwd final at lanes 0:H2, bwd final at lanes 64:64+H2
    out_ref[...] = h2


# --------------------------------------------------------------------------
# weight packers (run once per parameter set, outside the kernel)
# 0.5 sigmoid pre-scale folded into all contributions to i/f/o gate columns.
# --------------------------------------------------------------------------
def _g_scale(gi):
    return 0.5 if gi in _SIG_GATES else 1.0


def _pack_bias(b_f, b_b, H):
    out = jnp.zeros((1, GW), jnp.float32)
    for gi in range(4):
        s, c0 = _g_scale(gi), gi * GP
        out = out.at[0, c0:c0 + H].set(s * b_f[gi * H:(gi + 1) * H])
        out = out.at[0, c0 + DOFF:c0 + DOFF + H].set(s * b_b[gi * H:(gi + 1) * H])
    return out


def _pack_hh(w_hh_f, w_hh_b, H):
    W = jnp.zeros((SW, GW), jnp.float32)
    for gi in range(4):
        s, c0 = _g_scale(gi), gi * GP
        W = W.at[0:H, c0:c0 + H].set(s * w_hh_f[gi * H:(gi + 1) * H, :].T)
        W = W.at[DOFF:DOFF + H, c0 + DOFF:c0 + DOFF + H].set(
            s * w_hh_b[gi * H:(gi + 1) * H, :].T)
    return W


def _pack_l1_ih(w_ih, H, direction):
    """(1, GW): input_size==1 projection row for one direction's gate columns."""
    out = jnp.zeros((1, GW), jnp.float32)
    for gi in range(4):
        s = _g_scale(gi)
        c0 = gi * GP + (DOFF if direction else 0)
        out = out.at[0, c0:c0 + H].set(s * w_ih[gi * H:(gi + 1) * H, 0])
    return out


def _pack_l2_A(w_ih_f, w_ih_b, H2):
    """Maps A[s] = [h1_fwd(s) | h1_bwd(T-1-s)] to layer-2 gate columns."""
    W = jnp.zeros((SW, GW), jnp.float32)
    for gi in range(4):
        s, c0 = _g_scale(gi), gi * GP
        # h1_fwd(s) -> fwd gate cols via fwd-LSTM w_ih (columns 0:H1)
        W = W.at[0:H1, c0:c0 + H2].set(s * w_ih_f[gi * H2:(gi + 1) * H2, 0:H1].T)
        # h1_bwd(T-1-s) -> bwd gate cols via bwd-LSTM w_ih (columns H1:2H1)
        W = W.at[DOFF:DOFF + H1, c0 + DOFF:c0 + DOFF + H2].set(
            s * w_ih_b[gi * H2:(gi + 1) * H2, H1:2 * H1].T)
    return W


def _pack_l2_B(w_ih_f, w_ih_b, H2):
    """Maps Bv[s] = [h1_fwd(T-1-s) | h1_bwd(s)] to layer-2 gate columns."""
    W = jnp.zeros((SW, GW), jnp.float32)
    for gi in range(4):
        s, c0 = _g_scale(gi), gi * GP
        # h1_fwd(T-1-s) -> bwd gate cols via bwd-LSTM w_ih (columns 0:H1)
        W = W.at[0:H1, c0 + DOFF:c0 + DOFF + H2].set(
            s * w_ih_b[gi * H2:(gi + 1) * H2, 0:H1].T)
        # h1_bwd(s) -> fwd gate cols via fwd-LSTM w_ih (columns H1:2H1)
        W = W.at[DOFF:DOFF + H1, c0:c0 + H2].set(
            s * w_ih_f[gi * H2:(gi + 1) * H2, H1:2 * H1].T)
    return W


# --------------------------------------------------------------------------
# parameter init (deterministic, PyTorch-style U(-1/sqrt(H), 1/sqrt(H)))
# --------------------------------------------------------------------------
def init_params(key, embedding_dim):
    H2 = embedding_dim // 2

    def lstm_dir(k, in_size, H):
        bound = 1.0 / float(np.sqrt(H))
        ks = jax.random.split(k, 4)
        u = lambda kk, shape: jax.random.uniform(kk, shape, jnp.float32, -bound, bound)
        return dict(w_ih=u(ks[0], (4 * H, in_size)),
                    w_hh=u(ks[1], (4 * H, H)),
                    b_ih=u(ks[2], (4 * H,)),
                    b_hh=u(ks[3], (4 * H,)))

    ks = jax.random.split(key, 4)
    return dict(l1f=lstm_dir(ks[0], 1, H1),
                l1b=lstm_dir(ks[1], 1, H1),
                l2f=lstm_dir(ks[2], 2 * H1, H2),
                l2b=lstm_dir(ks[3], 2 * H1, H2))


# --------------------------------------------------------------------------
# wrapper
# --------------------------------------------------------------------------
def encoder_forward(x, params, embedding_dim):
    """x: (B, 1, T) float32 (PyTorch NCT). Returns (B, 1, embedding_dim)."""
    B, C, T = x.shape
    assert C == 1
    H2 = embedding_dim // 2
    assert H1 <= DOFF and H2 <= DOFF, \
        "packed fwd/bwd gate layout requires hidden <= 64 (embedding_dim <= 128)"

    BP = ((B + 7) // 8) * 8                      # sublane-pad the batch

    xt = x[:, 0, :].T.astype(jnp.float32)        # (T, B)
    xt = jnp.pad(xt, ((0, 0), (0, BP - B)))      # (T, BP)
    x_fwd = xt.reshape(T * BP, 1)                # row s*BP+b = x[b, s]
    x_rev = xt[::-1].reshape(T * BP, 1)          # row s*BP+b = x[b, T-1-s]

    p1f, p1b = params["l1f"], params["l1b"]
    p2f, p2b = params["l2f"], params["l2b"]

    w1f = _pack_l1_ih(p1f["w_ih"], H1, 0)
    w1b = _pack_l1_ih(p1b["w_ih"], H1, 1)
    b1 = _pack_bias(p1f["b_ih"] + p1f["b_hh"], p1b["b_ih"] + p1b["b_hh"], H1)
    w1hh = _pack_hh(p1f["w_hh"], p1b["w_hh"], H1)

    wA = _pack_l2_A(p2f["w_ih"], p2b["w_ih"], H2)
    wB = _pack_l2_B(p2f["w_ih"], p2b["w_ih"], H2)
    b2 = _pack_bias(p2f["b_ih"] + p2f["b_hh"], p2b["b_ih"] + p2b["b_hh"], H2)
    w2hh = _pack_hh(p2f["w_hh"], p2b["w_hh"], H2)

    vmem = pl.BlockSpec(memory_space=pltpu.MemorySpace.VMEM)
    out = pl.pallas_call(
        encoder_kernel,
        out_shape=jax.ShapeDtypeStruct((BP, SW), jnp.float32),
        in_specs=[vmem] * 10,
        out_specs=vmem,
        scratch_shapes=[
            pltpu.VMEM((T * BP, GW), jnp.float32),   # gx (reused by both layers)
            pltpu.VMEM((T * BP, SW), jnp.float32),   # layer-1 out, step order
            pltpu.VMEM((T * BP, SW), jnp.float32),   # layer-1 out, reversed order
        ],
        compiler_params=pltpu.CompilerParams(vmem_limit_bytes=64 * 1024 * 1024),
    )(x_fwd, x_rev, w1f, w1b, b1, w1hh, wA, wB, b2, w2hh)

    # h_n of lstm_2: [forward final ; backward final] per batch row
    hn = jnp.concatenate([out[:B, 0:H2], out[:B, DOFF:DOFF + H2]], axis=-1)
    return hn.reshape(B, 1, 2 * H2)


# --------------------------------------------------------------------------
# pure-JAX reference (mirrors torch.nn.LSTM semantics)
# --------------------------------------------------------------------------
def _sigmoid_ref(x):
    return 1.0 / (1.0 + jnp.exp(-x))


def _lstm_dir_ref(x_seq, p, H):
    T, B, _ = x_seq.shape
    h = jnp.zeros((B, H), jnp.float32)
    c = jnp.zeros((B, H), jnp.float32)
    outs = []
    for t in range(T):
        gates = x_seq[t] @ p["w_ih"].T + p["b_ih"] + h @ p["w_hh"].T + p["b_hh"]
        i = _sigmoid_ref(gates[:, 0 * H:1 * H])
        f = _sigmoid_ref(gates[:, 1 * H:2 * H])
        g = jnp.tanh(gates[:, 2 * H:3 * H])
        o = _sigmoid_ref(gates[:, 3 * H:4 * H])
        c = f * c + i * g
        h = o * jnp.tanh(c)
        outs.append(h)
    return jnp.stack(outs), h


def encoder_ref(x, params, embedding_dim):
    B, _, T = x.shape
    H2 = embedding_dim // 2
    xs = jnp.transpose(x, (2, 0, 1)).astype(jnp.float32)      # (T, B, 1)
    of, _ = _lstm_dir_ref(xs, params["l1f"], H1)
    ob_rev, _ = _lstm_dir_ref(xs[::-1], params["l1b"], H1)
    o1 = jnp.concatenate([of, ob_rev[::-1]], axis=-1)          # (T, B, 2*H1)
    _, hf = _lstm_dir_ref(o1, params["l2f"], H2)
    _, hb = _lstm_dir_ref(o1[::-1], params["l2b"], H2)
    hn = jnp.concatenate([hf, hb], axis=-1)                    # (B, 2*H2)
    return hn.reshape(B, 1, embedding_dim)


if __name__ == "__main__":
    B, T = 2, 8
    embedding_dim = 32

    key = jax.random.PRNGKey(0)
    key, xk = jax.random.split(key)
    x = jax.random.normal(xk, (B, 1, T), dtype=jnp.float32)
    params = init_params(key, embedding_dim)

    out = encoder_forward(x, params, embedding_dim)
    out = jax.block_until_ready(out)
    assert out.shape == (B, 1, embedding_dim)

    ref = jax.block_until_ready(encoder_ref(x, params, embedding_dim))
    np.testing.assert_allclose(np.asarray(out), np.asarray(ref), rtol=1e-3, atol=1e-3)

    print("KERNEL_OK")
</pallas_src>

<mosaic_0001>
module attributes {stable_mosaic.version = 11 : i64} {
  func.func @encoder_kernel(%arg0: memref<64x1xf32, #tpu.memory_space<vmem>>, %arg1: memref<64x1xf32, #tpu.memory_space<vmem>>, %arg2: memref<1x512xf32, #tpu.memory_space<vmem>>, %arg3: memref<1x512xf32, #tpu.memory_space<vmem>>, %arg4: memref<1x512xf32, #tpu.memory_space<vmem>>, %arg5: memref<128x512xf32, #tpu.memory_space<vmem>>, %arg6: memref<128x512xf32, #tpu.memory_space<vmem>>, %arg7: memref<128x512xf32, #tpu.memory_space<vmem>>, %arg8: memref<1x512xf32, #tpu.memory_space<vmem>>, %arg9: memref<128x512xf32, #tpu.memory_space<vmem>>, %arg10: memref<8x128xf32, #tpu.memory_space<vmem>>, %arg11: memref<64x512xf32, #tpu.memory_space<vmem>>, %arg12: memref<64x128xf32, #tpu.memory_space<vmem>>, %arg13: memref<64x128xf32, #tpu.memory_space<vmem>>) attributes {dimension_semantics = [], scalar_prefetch = 0 : i64, scratch_operands = 3 : i64, tpu.core_type = #tpu.core_type<tc>} {
    %c0 = arith.constant 0 : index
    %c0_0 = arith.constant 0 : index
    %0 = vector.load %arg0[%c0, %c0_0] : memref<64x1xf32, #tpu.memory_space<vmem>>, vector<64x1xf32>
    %c0_1 = arith.constant 0 : index
    %c0_2 = arith.constant 0 : index
    %1 = vector.load %arg2[%c0_1, %c0_2] : memref<1x512xf32, #tpu.memory_space<vmem>>, vector<1x512xf32>
    %2 = vector.broadcast %0 : vector<64x1xf32> to vector<64x512xf32>
    %3 = vector.broadcast %1 : vector<1x512xf32> to vector<64x512xf32>
    %4 = arith.mulf %2, %3 : vector<64x512xf32>
    %c0_3 = arith.constant 0 : index
    %c0_4 = arith.constant 0 : index
    %5 = vector.load %arg1[%c0_3, %c0_4] : memref<64x1xf32, #tpu.memory_space<vmem>>, vector<64x1xf32>
    %c0_5 = arith.constant 0 : index
    %c0_6 = arith.constant 0 : index
    %6 = vector.load %arg3[%c0_5, %c0_6] : memref<1x512xf32, #tpu.memory_space<vmem>>, vector<1x512xf32>
    %7 = vector.broadcast %5 : vector<64x1xf32> to vector<64x512xf32>
    %8 = vector.broadcast %6 : vector<1x512xf32> to vector<64x512xf32>
    %9 = arith.mulf %7, %8 : vector<64x512xf32>
    %10 = arith.addf %4, %9 : vector<64x512xf32>
    %c0_7 = arith.constant 0 : index
    %c0_8 = arith.constant 0 : index
    %11 = vector.load %arg4[%c0_7, %c0_8] : memref<1x512xf32, #tpu.memory_space<vmem>>, vector<1x512xf32>
    %12 = vector.broadcast %11 : vector<1x512xf32> to vector<64x512xf32>
    %13 = arith.addf %10, %12 : vector<64x512xf32>
    %c0_9 = arith.constant 0 : index
    %c0_10 = arith.constant 0 : index
    %14 = vector.load %arg11[%c0_9, %c0_10] : memref<64x512xf32, #tpu.memory_space<vmem>>, vector<64x512xf32>
    tpu.vector_store %arg11[%c0_9, %c0_10], %13 {strides = array<i32>} : memref<64x512xf32, #tpu.memory_space<vmem>>, vector<64x512xf32>,
    %c0_11 = arith.constant 0 : index
    %c0_12 = arith.constant 0 : index
    %15 = vector.load %arg5[%c0_11, %c0_12] : memref<128x512xf32, #tpu.memory_space<vmem>>, vector<128x512xf32>
    %cst = arith.constant 0.000000e+00 : f32
    %16 = vector.broadcast %cst : f32 to vector<8x128xf32>
    %c0_i32 = arith.constant 0 : i32
    %c8_i32 = arith.constant 8 : i32
    %17 = arith.muli %c0_i32, %c8_i32 : i32
    %18 = tpu.assume_multiple %17, 8 : i32
    %19 = arith.index_cast %18 : i32 to index
    %c0_13 = arith.constant 0 : index
    %20 = vector.load %arg11[%19, %c0_13] : memref<64x512xf32, #tpu.memory_space<vmem>>, vector<8x512xf32>
    %cst_14 = arith.constant dense<0.000000e+00> : vector<8x512xf32>
    %21 = tpu.matmul %16, %15, %cst_14 {dimension_numbers = #tpu.dot_dimension_numbers<[1], [0], [0], [1], [0, 0, 1, 1], [], []>} : vector<8x128xf32>, vector<128x512xf32>, vector<8x512xf32> -> vector<8x512xf32>
    %22 = arith.addf %20, %21 : vector<8x512xf32>
    %23 = math.tanh %22 : vector<8x512xf32>
    %24 = vector.extract_strided_slice %23 {offsets = [0, 0], sizes = [8, 128], strides = [1, 1]} : vector<8x512xf32> to vector<8x128xf32>
    %cst_15 = arith.constant 5.000000e-01 : f32
    %25 = vector.broadcast %cst_15 : f32 to vector<8x128xf32>
    %26 = arith.mulf %25, %24 : vector<8x128xf32>
    %cst_16 = arith.constant 5.000000e-01 : f32
    %27 = vector.broadcast %cst_16 : f32 to vector<8x128xf32>
    %28 = arith.addf %26, %27 : vector<8x128xf32>
    %29 = vector.extract_strided_slice %23 {offsets = [0, 128], sizes = [8, 128], strides = [1, 1]} : vector<8x512xf32> to vector<8x128xf32>
    %cst_17 = arith.constant 5.000000e-01 : f32
    %30 = vector.broadcast %cst_17 : f32 to vector<8x128xf32>
    %31 = arith.mulf %30, %29 : vector<8x128xf32>
    %cst_18 = arith.constant 5.000000e-01 : f32
    %32 = vector.broadcast %cst_18 : f32 to vector<8x128xf32>
    %33 = arith.addf %31, %32 : vector<8x128xf32>
    %34 = vector.extract_strided_slice %23 {offsets = [0, 256], sizes = [8, 128], strides = [1, 1]} : vector<8x512xf32> to vector<8x128xf32>
    %35 = vector.extract_strided_slice %23 {offsets = [0, 384], sizes = [8, 128], strides = [1, 1]} : vector<8x512xf32> to vector<8x128xf32>
    %cst_19 = arith.constant 5.000000e-01 : f32
    %36 = vector.broadcast %cst_19 : f32 to vector<8x128xf32>
    %37 = arith.mulf %36, %35 : vector<8x128xf32>
    %cst_20 = arith.constant 5.000000e-01 : f32
    %38 = vector.broadcast %cst_20 : f32 to vector<8x128xf32>
    %39 = arith.addf %37, %38 : vector<8x128xf32>
    %40 = arith.mulf %33, %16 : vector<8x128xf32>
    %41 = arith.mulf %28, %34 : vector<8x128xf32>
    %42 = arith.addf %40, %41 : vector<8x128xf32>
    %43 = math.tanh %42 : vector<8x128xf32>
    %44 = arith.mulf %39, %43 : vector<8x128xf32>
    %45 = arith.index_cast %18 : i32 to index
    %c0_21 = arith.constant 0 : index
    %46 = vector.load %arg12[%45, %c0_21] : memref<64x128xf32, #tpu.memory_space<vmem>>, vector<8x128xf32>
    tpu.vector_store %arg12[%45, %c0_21], %44 {strides = array<i32>} : memref<64x128xf32, #tpu.memory_space<vmem>>, vector<8x128xf32>,
    %c7_i32 = arith.constant 7 : i32
    %47 = arith.subi %c7_i32, %c0_i32 : i32
    %c8_i32_22 = arith.constant 8 : i32
    %48 = arith.muli %47, %c8_i32_22 : i32
    %49 = tpu.assume_multiple %48, 8 : i32
    %50 = arith.index_cast %49 : i32 to index
    %c0_23 = arith.constant 0 : index
    %51 = vector.load %arg13[%50, %c0_23] : memref<64x128xf32, #tpu.memory_space<vmem>>, vector<8x128xf32>
    tpu.vector_store %arg13[%50, %c0_23], %44 {strides = array<i32>} : memref<64x128xf32, #tpu.memory_space<vmem>>, vector<8x128xf32>,
    %c1_i32 = arith.constant 1 : i32
    %c8_i32_24 = arith.constant 8 : i32
    %52 = arith.muli %c1_i32, %c8_i32_24 : i32
    %53 = tpu.assume_multiple %52, 8 : i32
    %54 = arith.index_cast %53 : i32 to index
    %c0_25 = arith.constant 0 : index
    %55 = vector.load %arg11[%54, %c0_25] : memref<64x512xf32, #tpu.memory_space<vmem>>, vector<8x512xf32>
    %cst_26 = arith.constant dense<0.000000e+00> : vector<8x512xf32>
    %56 = tpu.matmul %44, %15, %cst_26 {dimension_numbers = #tpu.dot_dimension_numbers<[1], [0], [0], [1], [0, 0, 1, 1], [], []>} : vector<8x128xf32>, vector<128x512xf32>, vector<8x512xf32> -> vector<8x512xf32>
    %57 = arith.addf %55, %56 : vector<8x512xf32>
    %58 = math.tanh %57 : vector<8x512xf32>
    %59 = vector.extract_strided_slice %58 {offsets = [0, 0], sizes = [8, 128], strides = [1, 1]} : vector<8x512xf32> to vector<8x128xf32>
    %cst_27 = arith.constant 5.000000e-01 : f32
    %60 = vector.broadcast %cst_27 : f32 to vector<8x128xf32>
    %61 = arith.mulf %60, %59 : vector<8x128xf32>
    %cst_28 = arith.constant 5.000000e-01 : f32
    %62 = vector.broadcast %cst_28 : f32 to vector<8x128xf32>
    %63 = arith.addf %61, %62 : vector<8x128xf32>
    %64 = vector.extract_strided_slice %58 {offsets = [0, 128], sizes = [8, 128], strides = [1, 1]} : vector<8x512xf32> to vector<8x128xf32>
    %cst_29 = arith.constant 5.000000e-01 : f32
    %65 = vector.broadcast %cst_29 : f32 to vector<8x128xf32>
    %66 = arith.mulf %65, %64 : vector<8x128xf32>
    %cst_30 = arith.constant 5.000000e-01 : f32
    %67 = vector.broadcast %cst_30 : f32 to vector<8x128xf32>
    %68 = arith.addf %66, %67 : vector<8x128xf32>
    %69 = vector.extract_strided_slice %58 {offsets = [0, 256], sizes = [8, 128], strides = [1, 1]} : vector<8x512xf32> to vector<8x128xf32>
    %70 = vector.extract_strided_slice %58 {offsets = [0, 384], sizes = [8, 128], strides = [1, 1]} : vector<8x512xf32> to vector<8x128xf32>
    %cst_31 = arith.constant 5.000000e-01 : f32
    %71 = vector.broadcast %cst_31 : f32 to vector<8x128xf32>
    %72 = arith.mulf %71, %70 : vector<8x128xf32>
    %cst_32 = arith.constant 5.000000e-01 : f32
    %73 = vector.broadcast %cst_32 : f32 to vector<8x128xf32>
    %74 = arith.addf %72, %73 : vector<8x128xf32>
    %75 = arith.mulf %68, %42 : vector<8x128xf32>
    %76 = arith.mulf %63, %69 : vector<8x128xf32>
    %77 = arith.addf %75, %76 : vector<8x128xf32>
    %78 = math.tanh %77 : vector<8x128xf32>
    %79 = arith.mulf %74, %78 : vector<8x128xf32>
    %80 = arith.index_cast %53 : i32 to index
    %c0_33 = arith.constant 0 : index
    %81 = vector.load %arg12[%80, %c0_33] : memref<64x128xf32, #tpu.memory_space<vmem>>, vector<8x128xf32>
    tpu.vector_store %arg12[%80, %c0_33], %79 {strides = array<i32>} : memref<64x128xf32, #tpu.memory_space<vmem>>, vector<8x128xf32>,
    %c7_i32_34 = arith.constant 7 : i32
    %82 = arith.subi %c7_i32_34, %c1_i32 : i32
    %c8_i32_35 = arith.constant 8 : i32
    %83 = arith.muli %82, %c8_i32_35 : i32
    %84 = tpu.assume_multiple %83, 8 : i32
    %85 = arith.index_cast %84 : i32 to index
    %c0_36 = arith.constant 0 : index
    %86 = vector.load %arg13[%85, %c0_36] : memref<64x128xf32, #tpu.memory_space<vmem>>, vector<8x128xf32>
    tpu.vector_store %arg13[%85, %c0_36], %79 {strides = array<i32>} : memref<64x128xf32, #tpu.memory_space<vmem>>, vector<8x128xf32>,
    %c2_i32 = arith.constant 2 : i32
    %c8_i32_37 = arith.constant 8 : i32
    %87 = arith.muli %c2_i32, %c8_i32_37 : i32
    %88 = tpu.assume_multiple %87, 8 : i32
    %89 = arith.index_cast %88 : i32 to index
    %c0_38 = arith.constant 0 : index
    %90 = vector.load %arg11[%89, %c0_38] : memref<64x512xf32, #tpu.memory_space<vmem>>, vector<8x512xf32>
    %cst_39 = arith.constant dense<0.000000e+00> : vector<8x512xf32>
    %91 = tpu.matmul %79, %15, %cst_39 {dimension_numbers = #tpu.dot_dimension_numbers<[1], [0], [0], [1], [0, 0, 1, 1], [], []>} : vector<8x128xf32>, vector<128x512xf32>, vector<8x512xf32> -> vector<8x512xf32>
    %92 = arith.addf %90, %91 : vector<8x512xf32>
    %93 = math.tanh %92 : vector<8x512xf32>
    %94 = vector.extract_strided_slice %93 {offsets = [0, 0], sizes = [8, 128], strides = [1, 1]} : vector<8x512xf32> to vector<8x128xf32>
    %cst_40 = arith.constant 5.000000e-01 : f32
    %95 = vector.broadcast %cst_40 : f32 to vector<8x128xf32>
    %96 = arith.mulf %95, %94 : vector<8x128xf32>
    %cst_41 = arith.constant 5.000000e-01 : f32
    %97 = vector.broadcast %cst_41 : f32 to vector<8x128xf32>
    %98 = arith.addf %96, %97 : vector<8x128xf32>
    %99 = vector.extract_strided_slice %93 {offsets = [0, 128], sizes = [8, 128], strides = [1, 1]} : vector<8x512xf32> to vector<8x128xf32>
    %cst_42 = arith.constant 5.000000e-01 : f32
    %100 = vector.broadcast %cst_42 : f32 to vector<8x128xf32>
    %101 = arith.mulf %100, %99 : vector<8x128xf32>
    %cst_43 = arith.constant 5.000000e-01 : f32
    %102 = vector.broadcast %cst_43 : f32 to vector<8x128xf32>
    %103 = arith.addf %101, %102 : vector<8x128xf32>
    %104 = vector.extract_strided_slice %93 {offsets = [0, 256], sizes = [8, 128], strides = [1, 1]} : vector<8x512xf32> to vector<8x128xf32>
    %105 = vector.extract_strided_slice %93 {offsets = [0, 384], sizes = [8, 128], strides = [1, 1]} : vector<8x512xf32> to vector<8x128xf32>
    %cst_44 = arith.constant 5.000000e-01 : f32
    %106 = vector.broadcast %cst_44 : f32 to vector<8x128xf32>
    %107 = arith.mulf %106, %105 : vector<8x128xf32>
    %cst_45 = arith.constant 5.000000e-01 : f32
    %108 = vector.broadcast %cst_45 : f32 to vector<8x128xf32>
    %109 = arith.addf %107, %108 : vector<8x128xf32>
    %110 = arith.mulf %103, %77 : vector<8x128xf32>
    %111 = arith.mulf %98, %104 : vector<8x128xf32>
    %112 = arith.addf %110, %111 : vector<8x128xf32>
    %113 = math.tanh %112 : vector<8x128xf32>
    %114 = arith.mulf %109, %113 : vector<8x128xf32>
    %115 = arith.index_cast %88 : i32 to index
    %c0_46 = arith.constant 0 : index
    %116 = vector.load %arg12[%115, %c0_46] : memref<64x128xf32, #tpu.memory_space<vmem>>, vector<8x128xf32>
    tpu.vector_store %arg12[%115, %c0_46], %114 {strides = array<i32>} : memref<64x128xf32, #tpu.memory_space<vmem>>, vector<8x128xf32>,
    %c7_i32_47 = arith.constant 7 : i32
    %117 = arith.subi %c7_i32_47, %c2_i32 : i32
    %c8_i32_48 = arith.constant 8 : i32
    %118 = arith.muli %117, %c8_i32_48 : i32
    %119 = tpu.assume_multiple %118, 8 : i32
    %120 = arith.index_cast %119 : i32 to index
    %c0_49 = arith.constant 0 : index
    %121 = vector.load %arg13[%120, %c0_49] : memref<64x128xf32, #tpu.memory_space<vmem>>, vector<8x128xf32>
    tpu.vector_store %arg13[%120, %c0_49], %114 {strides = array<i32>} : memref<64x128xf32, #tpu.memory_space<vmem>>, vector<8x128xf32>,
    %c3_i32 = arith.constant 3 : i32
    %c8_i32_50 = arith.constant 8 : i32
    %122 = arith.muli %c3_i32, %c8_i32_50 : i32
    %123 = tpu.assume_multiple %122, 8 : i32
    %124 = arith.index_cast %123 : i32 to index
    %c0_51 = arith.constant 0 : index
    %125 = vector.load %arg11[%124, %c0_51] : memref<64x512xf32, #tpu.memory_space<vmem>>, vector<8x512xf32>
    %cst_52 = arith.constant dense<0.000000e+00> : vector<8x512xf32>
    %126 = tpu.matmul %114, %15, %cst_52 {dimension_numbers = #tpu.dot_dimension_numbers<[1], [0], [0], [1], [0, 0, 1, 1], [], []>} : vector<8x128xf32>, vector<128x512xf32>, vector<8x512xf32> -> vector<8x512xf32>
    %127 = arith.addf %125, %126 : vector<8x512xf32>
    %128 = math.tanh %127 : vector<8x512xf32>
    %129 = vector.extract_strided_slice %128 {offsets = [0, 0], sizes = [8, 128], strides = [1, 1]} : vector<8x512xf32> to vector<8x128xf32>
    %cst_53 = arith.constant 5.000000e-01 : f32
    %130 = vector.broadcast %cst_53 : f32 to vector<8x128xf32>
    %131 = arith.mulf %130, %129 : vector<8x128xf32>
    %cst_54 = arith.constant 5.000000e-01 : f32
    %132 = vector.broadcast %cst_54 : f32 to vector<8x128xf32>
    %133 = arith.addf %131, %132 : vector<8x128xf32>
    %134 = vector.extract_strided_slice %128 {offsets = [0, 128], sizes = [8, 128], strides = [1, 1]} : vector<8x512xf32> to vector<8x128xf32>
    %cst_55 = arith.constant 5.000000e-01 : f32
    %135 = vector.broadcast %cst_55 : f32 to vector<8x128xf32>
    %136 = arith.mulf %135, %134 : vector<8x128xf32>
    %cst_56 = arith.constant 5.000000e-01 : f32
    %137 = vector.broadcast %cst_56 : f32 to vector<8x128xf32>
    %138 = arith.addf %136, %137 : vector<8x128xf32>
    %139 = vector.extract_strided_slice %128 {offsets = [0, 256], sizes = [8, 128], strides = [1, 1]} : vector<8x512xf32> to vector<8x128xf32>
    %140 = vector.extract_strided_slice %128 {offsets = [0, 384], sizes = [8, 128], strides = [1, 1]} : vector<8x512xf32> to vector<8x128xf32>
    %cst_57 = arith.constant 5.000000e-01 : f32
    %141 = vector.broadcast %cst_57 : f32 to vector<8x128xf32>
    %142 = arith.mulf %141, %140 : vector<8x128xf32>
    %cst_58 = arith.constant 5.000000e-01 : f32
    %143 = vector.broadcast %cst_58 : f32 to vector<8x128xf32>
    %144 = arith.addf %142, %143 : vector<8x128xf32>
    %145 = arith.mulf %138, %112 : vector<8x128xf32>
    %146 = arith.mulf %133, %139 : vector<8x128xf32>
    %147 = arith.addf %145, %146 : vector<8x128xf32>
    %148 = math.tanh %147 : vector<8x128xf32>
    %149 = arith.mulf %144, %148 : vector<8x128xf32>
    %150 = arith.index_cast %123 : i32 to index
    %c0_59 = arith.constant 0 : index
    %151 = vector.load %arg12[%150, %c0_59] : memref<64x128xf32, #tpu.memory_space<vmem>>, vector<8x128xf32>
    tpu.vector_store %arg12[%150, %c0_59], %149 {strides = array<i32>} : memref<64x128xf32, #tpu.memory_space<vmem>>, vector<8x128xf32>,
    %c7_i32_60 = arith.constant 7 : i32
    %152 = arith.subi %c7_i32_60, %c3_i32 : i32
    %c8_i32_61 = arith.constant 8 : i32
    %153 = arith.muli %152, %c8_i32_61 : i32
    %154 = tpu.assume_multiple %153, 8 : i32
    %155 = arith.index_cast %154 : i32 to index
    %c0_62 = arith.constant 0 : index
    %156 = vector.load %arg13[%155, %c0_62] : memref<64x128xf32, #tpu.memory_space<vmem>>, vector<8x128xf32>
    tpu.vector_store %arg13[%155, %c0_62], %149 {strides = array<i32>} : memref<64x128xf32, #tpu.memory_space<vmem>>, vector<8x128xf32>,
    %c4_i32 = arith.constant 4 : i32
    %c8_i32_63 = arith.constant 8 : i32
    %157 = arith.muli %c4_i32, %c8_i32_63 : i32
    %158 = tpu.assume_multiple %157, 8 : i32
    %159 = arith.index_cast %158 : i32 to index
    %c0_64 = arith.constant 0 : index
    %160 = vector.load %arg11[%159, %c0_64] : memref<64x512xf32, #tpu.memory_space<vmem>>, vector<8x512xf32>
    %cst_65 = arith.constant dense<0.000000e+00> : vector<8x512xf32>
    %161 = tpu.matmul %149, %15, %cst_65 {dimension_numbers = #tpu.dot_dimension_numbers<[1], [0], [0], [1], [0, 0, 1, 1], [], []>} : vector<8x128xf32>, vector<128x512xf32>, vector<8x512xf32> -> vector<8x512xf32>
    %162 = arith.addf %160, %161 : vector<8x512xf32>
    %163 = math.tanh %162 : vector<8x512xf32>
    %164 = vector.extract_strided_slice %163 {offsets = [0, 0], sizes = [8, 128], strides = [1, 1]} : vector<8x512xf32> to vector<8x128xf32>
    %cst_66 = arith.constant 5.000000e-01 : f32
    %165 = vector.broadcast %cst_66 : f32 to vector<8x128xf32>
    %166 = arith.mulf %165, %164 : vector<8x128xf32>
    %cst_67 = arith.constant 5.000000e-01 : f32
    %167 = vector.broadcast %cst_67 : f32 to vector<8x128xf32>
    %168 = arith.addf %166, %167 : vector<8x128xf32>
    %169 = vector.extract_strided_slice %163 {offsets = [0, 128], sizes = [8, 128], strides = [1, 1]} : vector<8x512xf32> to vector<8x128xf32>
    %cst_68 = arith.constant 5.000000e-01 : f32
    %170 = vector.broadcast %cst_68 : f32 to vector<8x128xf32>
    %171 = arith.mulf %170, %169 : vector<8x128xf32>
    %cst_69 = arith.constant 5.000000e-01 : f32
    %172 = vector.broadcast %cst_69 : f32 to vector<8x128xf32>
    %173 = arith.addf %171, %172 : vector<8x128xf32>
    %174 = vector.extract_strided_slice %163 {offsets = [0, 256], sizes = [8, 128], strides = [1, 1]} : vector<8x512xf32> to vector<8x128xf32>
    %175 = vector.extract_strided_slice %163 {offsets = [0, 384], sizes = [8, 128], strides = [1, 1]} : vector<8x512xf32> to vector<8x128xf32>
    %cst_70 = arith.constant 5.000000e-01 : f32
    %176 = vector.broadcast %cst_70 : f32 to vector<8x128xf32>
    %177 = arith.mulf %176, %175 : vector<8x128xf32>
    %cst_71 = arith.constant 5.000000e-01 : f32
    %178 = vector.broadcast %cst_71 : f32 to vector<8x128xf32>
    %179 = arith.addf %177, %178 : vector<8x128xf32>
    %180 = arith.mulf %173, %147 : vector<8x128xf32>
    %181 = arith.mulf %168, %174 : vector<8x128xf32>
    %182 = arith.addf %180, %181 : vector<8x128xf32>
    %183 = math.tanh %182 : vector<8x128xf32>
    %184 = arith.mulf %179, %183 : vector<8x128xf32>
    %185 = arith.index_cast %158 : i32 to index
    %c0_72 = arith.constant 0 : index
    %186 = vector.load %arg12[%185, %c0_72] : memref<64x128xf32, #tpu.memory_space<vmem>>, vector<8x128xf32>
    tpu.vector_store %arg12[%185, %c0_72], %184 {strides = array<i32>} : memref<64x128xf32, #tpu.memory_space<vmem>>, vector<8x128xf32>,
    %c7_i32_73 = arith.constant 7 : i32
    %187 = arith.subi %c7_i32_73, %c4_i32 : i32
    %c8_i32_74 = arith.constant 8 : i32
    %188 = arith.muli %187, %c8_i32_74 : i32
    %189 = tpu.assume_multiple %188, 8 : i32
    %190 = arith.index_cast %189 : i32 to index
    %c0_75 = arith.constant 0 : index
    %191 = vector.load %arg13[%190, %c0_75] : memref<64x128xf32, #tpu.memory_space<vmem>>, vector<8x128xf32>
    tpu.vector_store %arg13[%190, %c0_75], %184 {strides = array<i32>} : memref<64x128xf32, #tpu.memory_space<vmem>>, vector<8x128xf32>,
    %c5_i32 = arith.constant 5 : i32
    %c8_i32_76 = arith.constant 8 : i32
    %192 = arith.muli %c5_i32, %c8_i32_76 : i32
    %193 = tpu.assume_multiple %192, 8 : i32
    %194 = arith.index_cast %193 : i32 to index
    %c0_77 = arith.constant 0 : index
    %195 = vector.load %arg11[%194, %c0_77] : memref<64x512xf32, #tpu.memory_space<vmem>>, vector<8x512xf32>
    %cst_78 = arith.constant dense<0.000000e+00> : vector<8x512xf32>
    %196 = tpu.matmul %184, %15, %cst_78 {dimension_numbers = #tpu.dot_dimension_numbers<[1], [0], [0], [1], [0, 0, 1, 1], [], []>} : vector<8x128xf32>, vector<128x512xf32>, vector<8x512xf32> -> vector<8x512xf32>
    %197 = arith.addf %195, %196 : vector<8x512xf32>
    %198 = math.tanh %197 : vector<8x512xf32>
    %199 = vector.extract_strided_slice %198 {offsets = [0, 0], sizes = [8, 128], strides = [1, 1]} : vector<8x512xf32> to vector<8x128xf32>
    %cst_79 = arith.constant 5.000000e-01 : f32
    %200 = vector.broadcast %cst_79 : f32 to vector<8x128xf32>
    %201 = arith.mulf %200, %199 : vector<8x128xf32>
    %cst_80 = arith.constant 5.000000e-01 : f32
    %202 = vector.broadcast %cst_80 : f32 to vector<8x128xf32>
    %203 = arith.addf %201, %202 : vector<8x128xf32>
    %204 = vector.extract_strided_slice %198 {offsets = [0, 128], sizes = [8, 128], strides = [1, 1]} : vector<8x512xf32> to vector<8x128xf32>
    %cst_81 = arith.constant 5.000000e-01 : f32
    %205 = vector.broadcast %cst_81 : f32 to vector<8x128xf32>
    %206 = arith.mulf %205, %204 : vector<8x128xf32>
    %cst_82 = arith.constant 5.000000e-01 : f32
    %207 = vector.broadcast %cst_82 : f32 to vector<8x128xf32>
    %208 = arith.addf %206, %207 : vector<8x128xf32>
    %209 = vector.extract_strided_slice %198 {offsets = [0, 256], sizes = [8, 128], strides = [1, 1]} : vector<8x512xf32> to vector<8x128xf32>
    %210 = vector.extract_strided_slice %198 {offsets = [0, 384], sizes = [8, 128], strides = [1, 1]} : vector<8x512xf32> to vector<8x128xf32>
    %cst_83 = arith.constant 5.000000e-01 : f32
    %211 = vector.broadcast %cst_83 : f32 to vector<8x128xf32>
    %212 = arith.mulf %211, %210 : vector<8x128xf32>
    %cst_84 = arith.constant 5.000000e-01 : f32
    %213 = vector.broadcast %cst_84 : f32 to vector<8x128xf32>
    %214 = arith.addf %212, %213 : vector<8x128xf32>
    %215 = arith.mulf %208, %182 : vector<8x128xf32>
    %216 = arith.mulf %203, %209 : vector<8x128xf32>
    %217 = arith.addf %215, %216 : vector<8x128xf32>
    %218 = math.tanh %217 : vector<8x128xf32>
    %219 = arith.mulf %214, %218 : vector<8x128xf32>
    %220 = arith.index_cast %193 : i32 to index
    %c0_85 = arith.constant 0 : index
    %221 = vector.load %arg12[%220, %c0_85] : memref<64x128xf32, #tpu.memory_space<vmem>>, vector<8x128xf32>
    tpu.vector_store %arg12[%220, %c0_85], %219 {strides = array<i32>} : memref<64x128xf32, #tpu.memory_space<vmem>>, vector<8x128xf32>,
    %c7_i32_86 = arith.constant 7 : i32
    %222 = arith.subi %c7_i32_86, %c5_i32 : i32
    %c8_i32_87 = arith.constant 8 : i32
    %223 = arith.muli %222, %c8_i32_87 : i32
    %224 = tpu.assume_multiple %223, 8 : i32
    %225 = arith.index_cast %224 : i32 to index
    %c0_88 = arith.constant 0 : index
    %226 = vector.load %arg13[%225, %c0_88] : memref<64x128xf32, #tpu.memory_space<vmem>>, vector<8x128xf32>
    tpu.vector_store %arg13[%225, %c0_88], %219 {strides = array<i32>} : memref<64x128xf32, #tpu.memory_space<vmem>>, vector<8x128xf32>,
    %c6_i32 = arith.constant 6 : i32
    %c8_i32_89 = arith.constant 8 : i32
    %227 = arith.muli %c6_i32, %c8_i32_89 : i32
    %228 = tpu.assume_multiple %227, 8 : i32
    %229 = arith.index_cast %228 : i32 to index
    %c0_90 = arith.constant 0 : index
    %230 = vector.load %arg11[%229, %c0_90] : memref<64x512xf32, #tpu.memory_space<vmem>>, vector<8x512xf32>
    %cst_91 = arith.constant dense<0.000000e+00> : vector<8x512xf32>
    %231 = tpu.matmul %219, %15, %cst_91 {dimension_numbers = #tpu.dot_dimension_numbers<[1], [0], [0], [1], [0, 0, 1, 1], [], []>} : vector<8x128xf32>, vector<128x512xf32>, vector<8x512xf32> -> vector<8x512xf32>
    %232 = arith.addf %230, %231 : vector<8x512xf32>
    %233 = math.tanh %232 : vector<8x512xf32>
    %234 = vector.extract_strided_slice %233 {offsets = [0, 0], sizes = [8, 128], strides = [1, 1]} : vector<8x512xf32> to vector<8x128xf32>
    %cst_92 = arith.constant 5.000000e-01 : f32
    %235 = vector.broadcast %cst_92 : f32 to vector<8x128xf32>
    %236 = arith.mulf %235, %234 : vector<8x128xf32>
    %cst_93 = arith.constant 5.000000e-01 : f32
    %237 = vector.broadcast %cst_93 : f32 to vector<8x128xf32>
    %238 = arith.addf %236, %237 : vector<8x128xf32>
    %239 = vector.extract_strided_slice %233 {offsets = [0, 128], sizes = [8, 128], strides = [1, 1]} : vector<8x512xf32> to vector<8x128xf32>
    %cst_94 = arith.constant 5.000000e-01 : f32
    %240 = vector.broadcast %cst_94 : f32 to vector<8x128xf32>
    %241 = arith.mulf %240, %239 : vector<8x128xf32>
    %cst_95 = arith.constant 5.000000e-01 : f32
    %242 = vector.broadcast %cst_95 : f32 to vector<8x128xf32>
    %243 = arith.addf %241, %242 : vector<8x128xf32>
    %244 = vector.extract_strided_slice %233 {offsets = [0, 256], sizes = [8, 128], strides = [1, 1]} : vector<8x512xf32> to vector<8x128xf32>
    %245 = vector.extract_strided_slice %233 {offsets = [0, 384], sizes = [8, 128], strides = [1, 1]} : vector<8x512xf32> to vector<8x128xf32>
    %cst_96 = arith.constant 5.000000e-01 : f32
    %246 = vector.broadcast %cst_96 : f32 to vector<8x128xf32>
    %247 = arith.mulf %246, %245 : vector<8x128xf32>
    %cst_97 = arith.constant 5.000000e-01 : f32
    %248 = vector.broadcast %cst_97 : f32 to vector<8x128xf32>
    %249 = arith.addf %247, %248 : vector<8x128xf32>
    %250 = arith.mulf %243, %217 : vector<8x128xf32>
    %251 = arith.mulf %238, %244 : vector<8x128xf32>
    %252 = arith.addf %250, %251 : vector<8x128xf32>
    %253 = math.tanh %252 : vector<8x128xf32>
    %254 = arith.mulf %249, %253 : vector<8x128xf32>
    %255 = arith.index_cast %228 : i32 to index
    %c0_98 = arith.constant 0 : index
    %256 = vector.load %arg12[%255, %c0_98] : memref<64x128xf32, #tpu.memory_space<vmem>>, vector<8x128xf32>
    tpu.vector_store %arg12[%255, %c0_98], %254 {strides = array<i32>} : memref<64x128xf32, #tpu.memory_space<vmem>>, vector<8x128xf32>,
    %c7_i32_99 = arith.constant 7 : i32
    %257 = arith.subi %c7_i32_99, %c6_i32 : i32
    %c8_i32_100 = arith.constant 8 : i32
    %258 = arith.muli %257, %c8_i32_100 : i32
    %259 = tpu.assume_multiple %258, 8 : i32
    %260 = arith.index_cast %259 : i32 to index
    %c0_101 = arith.constant 0 : index
    %261 = vector.load %arg13[%260, %c0_101] : memref<64x128xf32, #tpu.memory_space<vmem>>, vector<8x128xf32>
    tpu.vector_store %arg13[%260, %c0_101], %254 {strides = array<i32>} : memref<64x128xf32, #tpu.memory_space<vmem>>, vector<8x128xf32>,
    %c7_i32_102 = arith.constant 7 : i32
    %c8_i32_103 = arith.constant 8 : i32
    %262 = arith.muli %c7_i32_102, %c8_i32_103 : i32
    %263 = tpu.assume_multiple %262, 8 : i32
    %264 = arith.index_cast %263 : i32 to index
    %c0_104 = arith.constant 0 : index
    %265 = vector.load %arg11[%264, %c0_104] : memref<64x512xf32, #tpu.memory_space<vmem>>, vector<8x512xf32>
    %cst_105 = arith.constant dense<0.000000e+00> : vector<8x512xf32>
    %266 = tpu.matmul %254, %15, %cst_105 {dimension_numbers = #tpu.dot_dimension_numbers<[1], [0], [0], [1], [0, 0, 1, 1], [], []>} : vector<8x128xf32>, vector<128x512xf32>, vector<8x512xf32> -> vector<8x512xf32>
    %267 = arith.addf %265, %266 : vector<8x512xf32>
    %268 = math.tanh %267 : vector<8x512xf32>
    %269 = vector.extract_strided_slice %268 {offsets = [0, 0], sizes = [8, 128], strides = [1, 1]} : vector<8x512xf32> to vector<8x128xf32>
    %cst_106 = arith.constant 5.000000e-01 : f32
    %270 = vector.broadcast %cst_106 : f32 to vector<8x128xf32>
    %271 = arith.mulf %270, %269 : vector<8x128xf32>
    %cst_107 = arith.constant 5.000000e-01 : f32
    %272 = vector.broadcast %cst_107 : f32 to vector<8x128xf32>
    %273 = arith.addf %271, %272 : vector<8x128xf32>
    %274 = vector.extract_strided_slice %268 {offsets = [0, 128], sizes = [8, 128], strides = [1, 1]} : vector<8x512xf32> to vector<8x128xf32>
    %cst_108 = arith.constant 5.000000e-01 : f32
    %275 = vector.broadcast %cst_108 : f32 to vector<8x128xf32>
    %276 = arith.mulf %275, %274 : vector<8x128xf32>
    %cst_109 = arith.constant 5.000000e-01 : f32
    %277 = vector.broadcast %cst_109 : f32 to vector<8x128xf32>
    %278 = arith.addf %276, %277 : vector<8x128xf32>
    %279 = vector.extract_strided_slice %268 {offsets = [0, 256], sizes = [8, 128], strides = [1, 1]} : vector<8x512xf32> to vector<8x128xf32>
    %280 = vector.extract_strided_slice %268 {offsets = [0, 384], sizes = [8, 128], strides = [1, 1]} : vector<8x512xf32> to vector<8x128xf32>
    %cst_110 = arith.constant 5.000000e-01 : f32
    %281 = vector.broadcast %cst_110 : f32 to vector<8x128xf32>
    %282 = arith.mulf %281, %280 : vector<8x128xf32>
    %cst_111 = arith.constant 5.000000e-01 : f32
    %283 = vector.broadcast %cst_111 : f32 to vector<8x128xf32>
    %284 = arith.addf %282, %283 : vector<8x128xf32>
    %285 = arith.mulf %278, %252 : vector<8x128xf32>
    %286 = arith.mulf %273, %279 : vector<8x128xf32>
    %287 = arith.addf %285, %286 : vector<8x128xf32>
    %288 = math.tanh %287 : vector<8x128xf32>
    %289 = arith.mulf %284, %288 : vector<8x128xf32>
    %290 = arith.index_cast %263 : i32 to index
    %c0_112 = arith.constant 0 : index
    %291 = vector.load %arg12[%290, %c0_112] : memref<64x128xf32, #tpu.memory_space<vmem>>, vector<8x128xf32>
    tpu.vector_store %arg12[%290, %c0_112], %289 {strides = array<i32>} : memref<64x128xf32, #tpu.memory_space<vmem>>, vector<8x128xf32>,
    %c7_i32_113 = arith.constant 7 : i32
    %292 = arith.subi %c7_i32_113, %c7_i32_102 : i32
    %c8_i32_114 = arith.constant 8 : i32
    %293 = arith.muli %292, %c8_i32_114 : i32
    %294 = tpu.assume_multiple %293, 8 : i32
    %295 = arith.index_cast %294 : i32 to index
    %c0_115 = arith.constant 0 : index
    %296 = vector.load %arg13[%295, %c0_115] : memref<64x128xf32, #tpu.memory_space<vmem>>, vector<8x128xf32>
    tpu.vector_store %arg13[%295, %c0_115], %289 {strides = array<i32>} : memref<64x128xf32, #tpu.memory_space<vmem>>, vector<8x128xf32>,
    %c8_i32_116 = arith.constant 8 : i32
    %c0_117 = arith.constant 0 : index
    %c0_118 = arith.constant 0 : index
    %297 = vector.load %arg12[%c0_117, %c0_118] : memref<64x128xf32, #tpu.memory_space<vmem>>, vector<64x128xf32>
    %c0_119 = arith.constant 0 : index
    %c0_120 = arith.constant 0 : index
    %298 = vector.load %arg6[%c0_119, %c0_120] : memref<128x512xf32, #tpu.memory_space<vmem>>, vector<128x512xf32>
    %cst_121 = arith.constant dense<0.000000e+00> : vector<64x512xf32>
    %299 = tpu.matmul %297, %298, %cst_121 {dimension_numbers = #tpu.dot_dimension_numbers<[1], [0], [0], [1], [0, 0, 1, 1], [], []>} : vector<64x128xf32>, vector<128x512xf32>, vector<64x512xf32> -> vector<64x512xf32>
    %c0_122 = arith.constant 0 : index
    %c0_123 = arith.constant 0 : index
    %300 = vector.load %arg13[%c0_122, %c0_123] : memref<64x128xf32, #tpu.memory_space<vmem>>, vector<64x128xf32>
    %c0_124 = arith.constant 0 : index
    %c0_125 = arith.constant 0 : index
    %301 = vector.load %arg7[%c0_124, %c0_125] : memref<128x512xf32, #tpu.memory_space<vmem>>, vector<128x512xf32>
    %cst_126 = arith.constant dense<0.000000e+00> : vector<64x512xf32>
    %302 = tpu.matmul %300, %301, %cst_126 {dimension_numbers = #tpu.dot_dimension_numbers<[1], [0], [0], [1], [0, 0, 1, 1], [], []>} : vector<64x128xf32>, vector<128x512xf32>, vector<64x512xf32> -> vector<64x512xf32>
    %303 = arith.addf %299, %302 : vector<64x512xf32>
    %c0_127 = arith.constant 0 : index
    %c0_128 = arith.constant 0 : index
    %304 = vector.load %arg8[%c0_127, %c0_128] : memref<1x512xf32, #tpu.memory_space<vmem>>, vector<1x512xf32>
    %305 = vector.broadcast %304 : vector<1x512xf32> to vector<64x512xf32>
    %306 = arith.addf %303, %305 : vector<64x512xf32>
    %c0_129 = arith.constant 0 : index
    %c0_130 = arith.constant 0 : index
    %307 = vector.load %arg11[%c0_129, %c0_130] : memref<64x512xf32, #tpu.memory_space<vmem>>, vector<64x512xf32>
    tpu.vector_store %arg11[%c0_129, %c0_130], %306 {strides = array<i32>} : memref<64x512xf32, #tpu.memory_space<vmem>>, vector<64x512xf32>,
    %c0_131 = arith.constant 0 : index
    %c0_132 = arith.constant 0 : index
    %308 = vector.load %arg9[%c0_131, %c0_132] : memref<128x512xf32, #tpu.memory_space<vmem>>, vector<128x512xf32>
    %c0_i32_133 = arith.constant 0 : i32
    %c8_i32_134 = arith.constant 8 : i32
    %309 = arith.muli %c0_i32_133, %c8_i32_134 : i32
    %310 = tpu.assume_multiple %309, 8 : i32
    %311 = arith.index_cast %310 : i32 to index
    %c0_135 = arith.constant 0 : index
    %312 = vector.load %arg11[%311, %c0_135] : memref<64x512xf32, #tpu.memory_space<vmem>>, vector<8x512xf32>
    %cst_136 = arith.constant dense<0.000000e+00> : vector<8x512xf32>
    %313 = tpu.matmul %16, %308, %cst_136 {dimension_numbers = #tpu.dot_dimension_numbers<[1], [0], [0], [1], [0, 0, 1, 1], [], []>} : vector<8x128xf32>, vector<128x512xf32>, vector<8x512xf32> -> vector<8x512xf32>
    %314 = arith.addf %312, %313 : vector<8x512xf32>
    %315 = math.tanh %314 : vector<8x512xf32>
    %316 = vector.extract_strided_slice %315 {offsets = [0, 0], sizes = [8, 128], strides = [1, 1]} : vector<8x512xf32> to vector<8x128xf32>
    %cst_137 = arith.constant 5.000000e-01 : f32
    %317 = vector.broadcast %cst_137 : f32 to vector<8x128xf32>
    %318 = arith.mulf %317, %316 : vector<8x128xf32>
    %cst_138 = arith.constant 5.000000e-01 : f32
    %319 = vector.broadcast %cst_138 : f32 to vector<8x128xf32>
    %320 = arith.addf %318, %319 : vector<8x128xf32>
    %321 = vector.extract_strided_slice %315 {offsets = [0, 128], sizes = [8, 128], strides = [1, 1]} : vector<8x512xf32> to vector<8x128xf32>
    %cst_139 = arith.constant 5.000000e-01 : f32
    %322 = vector.broadcast %cst_139 : f32 to vector<8x128xf32>
    %323 = arith.mulf %322, %321 : vector<8x128xf32>
    %cst_140 = arith.constant 5.000000e-01 : f32
    %324 = vector.broadcast %cst_140 : f32 to vector<8x128xf32>
    %325 = arith.addf %323, %324 : vector<8x128xf32>
    %326 = vector.extract_strided_slice %315 {offsets = [0, 256], sizes = [8, 128], strides = [1, 1]} : vector<8x512xf32> to vector<8x128xf32>
    %327 = vector.extract_strided_slice %315 {offsets = [0, 384], sizes = [8, 128], strides = [1, 1]} : vector<8x512xf32> to vector<8x128xf32>
    %cst_141 = arith.constant 5.000000e-01 : f32
    %328 = vector.broadcast %cst_141 : f32 to vector<8x128xf32>
    %329 = arith.mulf %328, %327 : vector<8x128xf32>
    %cst_142 = arith.constant 5.000000e-01 : f32
    %330 = vector.broadcast %cst_142 : f32 to vector<8x128xf32>
    %331 = arith.addf %329, %330 : vector<8x128xf32>
    %332 = arith.mulf %325, %16 : vector<8x128xf32>
    %333 = arith.mulf %320, %326 : vector<8x128xf32>
    %334 = arith.addf %332, %333 : vector<8x128xf32>
    %335 = math.tanh %334 : vector<8x128xf32>
    %336 = arith.mulf %331, %335 : vector<8x128xf32>
    %c1_i32_143 = arith.constant 1 : i32
    %c8_i32_144 = arith.constant 8 : i32
    %337 = arith.muli %c1_i32_143, %c8_i32_144 : i32
    %338 = tpu.assume_multiple %337, 8 : i32
    %339 = arith.index_cast %338 : i32 to index
    %c0_145 = arith.constant 0 : index
    %340 = vector.load %arg11[%339, %c0_145] : memref<64x512xf32, #tpu.memory_space<vmem>>, vector<8x512xf32>
    %cst_146 = arith.constant dense<0.000000e+00> : vector<8x512xf32>
    %341 = tpu.matmul %336, %308, %cst_146 {dimension_numbers = #tpu.dot_dimension_numbers<[1], [0], [0], [1], [0, 0, 1, 1], [], []>} : vector<8x128xf32>, vector<128x512xf32>, vector<8x512xf32> -> vector<8x512xf32>
    %342 = arith.addf %340, %341 : vector<8x512xf32>
    %343 = math.tanh %342 : vector<8x512xf32>
    %344 = vector.extract_strided_slice %343 {offsets = [0, 0], sizes = [8, 128], strides = [1, 1]} : vector<8x512xf32> to vector<8x128xf32>
    %cst_147 = arith.constant 5.000000e-01 : f32
    %345 = vector.broadcast %cst_147 : f32 to vector<8x128xf32>
    %346 = arith.mulf %345, %344 : vector<8x128xf32>
    %cst_148 = arith.constant 5.000000e-01 : f32
    %347 = vector.broadcast %cst_148 : f32 to vector<8x128xf32>
    %348 = arith.addf %346, %347 : vector<8x128xf32>
    %349 = vector.extract_strided_slice %343 {offsets = [0, 128], sizes = [8, 128], strides = [1, 1]} : vector<8x512xf32> to vector<8x128xf32>
    %cst_149 = arith.constant 5.000000e-01 : f32
    %350 = vector.broadcast %cst_149 : f32 to vector<8x128xf32>
    %351 = arith.mulf %350, %349 : vector<8x128xf32>
    %cst_150 = arith.constant 5.000000e-01 : f32
    %352 = vector.broadcast %cst_150 : f32 to vector<8x128xf32>
    %353 = arith.addf %351, %352 : vector<8x128xf32>
    %354 = vector.extract_strided_slice %343 {offsets = [0, 256], sizes = [8, 128], strides = [1, 1]} : vector<8x512xf32> to vector<8x128xf32>
    %355 = vector.extract_strided_slice %343 {offsets = [0, 384], sizes = [8, 128], strides = [1, 1]} : vector<8x512xf32> to vector<8x128xf32>
    %cst_151 = arith.constant 5.000000e-01 : f32
    %356 = vector.broadcast %cst_151 : f32 to vector<8x128xf32>
    %357 = arith.mulf %356, %355 : vector<8x128xf32>
    %cst_152 = arith.constant 5.000000e-01 : f32
    %358 = vector.broadcast %cst_152 : f32 to vector<8x128xf32>
    %359 = arith.addf %357, %358 : vector<8x128xf32>
    %360 = arith.mulf %353, %334 : vector<8x128xf32>
    %361 = arith.mulf %348, %354 : vector<8x128xf32>
    %362 = arith.addf %360, %361 : vector<8x128xf32>
    %363 = math.tanh %362 : vector<8x128xf32>
    %364 = arith.mulf %359, %363 : vector<8x128xf32>
    %c2_i32_153 = arith.constant 2 : i32
    %c8_i32_154 = arith.constant 8 : i32
    %365 = arith.muli %c2_i32_153, %c8_i32_154 : i32
    %366 = tpu.assume_multiple %365, 8 : i32
    %367 = arith.index_cast %366 : i32 to index
    %c0_155 = arith.constant 0 : index
    %368 = vector.load %arg11[%367, %c0_155] : memref<64x512xf32, #tpu.memory_space<vmem>>, vector<8x512xf32>
    %cst_156 = arith.constant dense<0.000000e+00> : vector<8x512xf32>
    %369 = tpu.matmul %364, %308, %cst_156 {dimension_numbers = #tpu.dot_dimension_numbers<[1], [0], [0], [1], [0, 0, 1, 1], [], []>} : vector<8x128xf32>, vector<128x512xf32>, vector<8x512xf32> -> vector<8x512xf32>
    %370 = arith.addf %368, %369 : vector<8x512xf32>
    %371 = math.tanh %370 : vector<8x512xf32>
    %372 = vector.extract_strided_slice %371 {offsets = [0, 0], sizes = [8, 128], strides = [1, 1]} : vector<8x512xf32> to vector<8x128xf32>
    %cst_157 = arith.constant 5.000000e-01 : f32
    %373 = vector.broadcast %cst_157 : f32 to vector<8x128xf32>
    %374 = arith.mulf %373, %372 : vector<8x128xf32>
    %cst_158 = arith.constant 5.000000e-01 : f32
    %375 = vector.broadcast %cst_158 : f32 to vector<8x128xf32>
    %376 = arith.addf %374, %375 : vector<8x128xf32>
    %377 = vector.extract_strided_slice %371 {offsets = [0, 128], sizes = [8, 128], strides = [1, 1]} : vector<8x512xf32> to vector<8x128xf32>
    %cst_159 = arith.constant 5.000000e-01 : f32
    %378 = vector.broadcast %cst_159 : f32 to vector<8x128xf32>
    %379 = arith.mulf %378, %377 : vector<8x128xf32>
    %cst_160 = arith.constant 5.000000e-01 : f32
    %380 = vector.broadcast %cst_160 : f32 to vector<8x128xf32>
    %381 = arith.addf %379, %380 : vector<8x128xf32>
    %382 = vector.extract_strided_slice %371 {offsets = [0, 256], sizes = [8, 128], strides = [1, 1]} : vector<8x512xf32> to vector<8x128xf32>
    %383 = vector.extract_strided_slice %371 {offsets = [0, 384], sizes = [8, 128], strides = [1, 1]} : vector<8x512xf32> to vector<8x128xf32>
    %cst_161 = arith.constant 5.000000e-01 : f32
    %384 = vector.broadcast %cst_161 : f32 to vector<8x128xf32>
    %385 = arith.mulf %384, %383 : vector<8x128xf32>
    %cst_162 = arith.constant 5.000000e-01 : f32
    %386 = vector.broadcast %cst_162 : f32 to vector<8x128xf32>
    %387 = arith.addf %385, %386 : vector<8x128xf32>
    %388 = arith.mulf %381, %362 : vector<8x128xf32>
    %389 = arith.mulf %376, %382 : vector<8x128xf32>
    %390 = arith.addf %388, %389 : vector<8x128xf32>
    %391 = math.tanh %390 : vector<8x128xf32>
    %392 = arith.mulf %387, %391 : vector<8x128xf32>
    %c3_i32_163 = arith.constant 3 : i32
    %c8_i32_164 = arith.constant 8 : i32
    %393 = arith.muli %c3_i32_163, %c8_i32_164 : i32
    %394 = tpu.assume_multiple %393, 8 : i32
    %395 = arith.index_cast %394 : i32 to index
    %c0_165 = arith.constant 0 : index
    %396 = vector.load %arg11[%395, %c0_165] : memref<64x512xf32, #tpu.memory_space<vmem>>, vector<8x512xf32>
    %cst_166 = arith.constant dense<0.000000e+00> : vector<8x512xf32>
    %397 = tpu.matmul %392, %308, %cst_166 {dimension_numbers = #tpu.dot_dimension_numbers<[1], [0], [0], [1], [0, 0, 1, 1], [], []>} : vector<8x128xf32>, vector<128x512xf32>, vector<8x512xf32> -> vector<8x512xf32>
    %398 = arith.addf %396, %397 : vector<8x512xf32>
    %399 = math.tanh %398 : vector<8x512xf32>
    %400 = vector.extract_strided_slice %399 {offsets = [0, 0], sizes = [8, 128], strides = [1, 1]} : vector<8x512xf32> to vector<8x128xf32>
    %cst_167 = arith.constant 5.000000e-01 : f32
    %401 = vector.broadcast %cst_167 : f32 to vector<8x128xf32>
    %402 = arith.mulf %401, %400 : vector<8x128xf32>
    %cst_168 = arith.constant 5.000000e-01 : f32
    %403 = vector.broadcast %cst_168 : f32 to vector<8x128xf32>
    %404 = arith.addf %402, %403 : vector<8x128xf32>
    %405 = vector.extract_strided_slice %399 {offsets = [0, 128], sizes = [8, 128], strides = [1, 1]} : vector<8x512xf32> to vector<8x128xf32>
    %cst_169 = arith.constant 5.000000e-01 : f32
    %406 = vector.broadcast %cst_169 : f32 to vector<8x128xf32>
    %407 = arith.mulf %406, %405 : vector<8x128xf32>
    %cst_170 = arith.constant 5.000000e-01 : f32
    %408 = vector.broadcast %cst_170 : f32 to vector<8x128xf32>
    %409 = arith.addf %407, %408 : vector<8x128xf32>
    %410 = vector.extract_strided_slice %399 {offsets = [0, 256], sizes = [8, 128], strides = [1, 1]} : vector<8x512xf32> to vector<8x128xf32>
    %411 = vector.extract_strided_slice %399 {offsets = [0, 384], sizes = [8, 128], strides = [1, 1]} : vector<8x512xf32> to vector<8x128xf32>
    %cst_171 = arith.constant 5.000000e-01 : f32
    %412 = vector.broadcast %cst_171 : f32 to vector<8x128xf32>
    %413 = arith.mulf %412, %411 : vector<8x128xf32>
    %cst_172 = arith.constant 5.000000e-01 : f32
    %414 = vector.broadcast %cst_172 : f32 to vector<8x128xf32>
    %415 = arith.addf %413, %414 : vector<8x128xf32>
    %416 = arith.mulf %409, %390 : vector<8x128xf32>
    %417 = arith.mulf %404, %410 : vector<8x128xf32>
    %418 = arith.addf %416, %417 : vector<8x128xf32>
    %419 = math.tanh %418 : vector<8x128xf32>
    %420 = arith.mulf %415, %419 : vector<8x128xf32>
    %c4_i32_173 = arith.constant 4 : i32
    %c8_i32_174 = arith.constant 8 : i32
    %421 = arith.muli %c4_i32_173, %c8_i32_174 : i32
    %422 = tpu.assume_multiple %421, 8 : i32
    %423 = arith.index_cast %422 : i32 to index
    %c0_175 = arith.constant 0 : index
    %424 = vector.load %arg11[%423, %c0_175] : memref<64x512xf32, #tpu.memory_space<vmem>>, vector<8x512xf32>
    %cst_176 = arith.constant dense<0.000000e+00> : vector<8x512xf32>
    %425 = tpu.matmul %420, %308, %cst_176 {dimension_numbers = #tpu.dot_dimension_numbers<[1], [0], [0], [1], [0, 0, 1, 1], [], []>} : vector<8x128xf32>, vector<128x512xf32>, vector<8x512xf32> -> vector<8x512xf32>
    %426 = arith.addf %424, %425 : vector<8x512xf32>
    %427 = math.tanh %426 : vector<8x512xf32>
    %428 = vector.extract_strided_slice %427 {offsets = [0, 0], sizes = [8, 128], strides = [1, 1]} : vector<8x512xf32> to vector<8x128xf32>
    %cst_177 = arith.constant 5.000000e-01 : f32
    %429 = vector.broadcast %cst_177 : f32 to vector<8x128xf32>
    %430 = arith.mulf %429, %428 : vector<8x128xf32>
    %cst_178 = arith.constant 5.000000e-01 : f32
    %431 = vector.broadcast %cst_178 : f32 to vector<8x128xf32>
    %432 = arith.addf %430, %431 : vector<8x128xf32>
    %433 = vector.extract_strided_slice %427 {offsets = [0, 128], sizes = [8, 128], strides = [1, 1]} : vector<8x512xf32> to vector<8x128xf32>
    %cst_179 = arith.constant 5.000000e-01 : f32
    %434 = vector.broadcast %cst_179 : f32 to vector<8x128xf32>
    %435 = arith.mulf %434, %433 : vector<8x128xf32>
    %cst_180 = arith.constant 5.000000e-01 : f32
    %436 = vector.broadcast %cst_180 : f32 to vector<8x128xf32>
    %437 = arith.addf %435, %436 : vector<8x128xf32>
    %438 = vector.extract_strided_slice %427 {offsets = [0, 256], sizes = [8, 128], strides = [1, 1]} : vector<8x512xf32> to vector<8x128xf32>
    %439 = vector.extract_strided_slice %427 {offsets = [0, 384], sizes = [8, 128], strides = [1, 1]} : vector<8x512xf32> to vector<8x128xf32>
    %cst_181 = arith.constant 5.000000e-01 : f32
    %440 = vector.broadcast %cst_181 : f32 to vector<8x128xf32>
    %441 = arith.mulf %440, %439 : vector<8x128xf32>
    %cst_182 = arith.constant 5.000000e-01 : f32
    %442 = vector.broadcast %cst_182 : f32 to vector<8x128xf32>
    %443 = arith.addf %441, %442 : vector<8x128xf32>
    %444 = arith.mulf %437, %418 : vector<8x128xf32>
    %445 = arith.mulf %432, %438 : vector<8x128xf32>
    %446 = arith.addf %444, %445 : vector<8x128xf32>
    %447 = math.tanh %446 : vector<8x128xf32>
    %448 = arith.mulf %443, %447 : vector<8x128xf32>
    %c5_i32_183 = arith.constant 5 : i32
    %c8_i32_184 = arith.constant 8 : i32
    %449 = arith.muli %c5_i32_183, %c8_i32_184 : i32
    %450 = tpu.assume_multiple %449, 8 : i32
    %451 = arith.index_cast %450 : i32 to index
    %c0_185 = arith.constant 0 : index
    %452 = vector.load %arg11[%451, %c0_185] : memref<64x512xf32, #tpu.memory_space<vmem>>, vector<8x512xf32>
    %cst_186 = arith.constant dense<0.000000e+00> : vector<8x512xf32>
    %453 = tpu.matmul %448, %308, %cst_186 {dimension_numbers = #tpu.dot_dimension_numbers<[1], [0], [0], [1], [0, 0, 1, 1], [], []>} : vector<8x128xf32>, vector<128x512xf32>, vector<8x512xf32> -> vector<8x512xf32>
    %454 = arith.addf %452, %453 : vector<8x512xf32>
    %455 = math.tanh %454 : vector<8x512xf32>
    %456 = vector.extract_strided_slice %455 {offsets = [0, 0], sizes = [8, 128], strides = [1, 1]} : vector<8x512xf32> to vector<8x128xf32>
    %cst_187 = arith.constant 5.000000e-01 : f32
    %457 = vector.broadcast %cst_187 : f32 to vector<8x128xf32>
    %458 = arith.mulf %457, %456 : vector<8x128xf32>
    %cst_188 = arith.constant 5.000000e-01 : f32
    %459 = vector.broadcast %cst_188 : f32 to vector<8x128xf32>
    %460 = arith.addf %458, %459 : vector<8x128xf32>
    %461 = vector.extract_strided_slice %455 {offsets = [0, 128], sizes = [8, 128], strides = [1, 1]} : vector<8x512xf32> to vector<8x128xf32>
    %cst_189 = arith.constant 5.000000e-01 : f32
    %462 = vector.broadcast %cst_189 : f32 to vector<8x128xf32>
    %463 = arith.mulf %462, %461 : vector<8x128xf32>
    %cst_190 = arith.constant 5.000000e-01 : f32
    %464 = vector.broadcast %cst_190 : f32 to vector<8x128xf32>
    %465 = arith.addf %463, %464 : vector<8x128xf32>
    %466 = vector.extract_strided_slice %455 {offsets = [0, 256], sizes = [8, 128], strides = [1, 1]} : vector<8x512xf32> to vector<8x128xf32>
    %467 = vector.extract_strided_slice %455 {offsets = [0, 384], sizes = [8, 128], strides = [1, 1]} : vector<8x512xf32> to vector<8x128xf32>
    %cst_191 = arith.constant 5.000000e-01 : f32
    %468 = vector.broadcast %cst_191 : f32 to vector<8x128xf32>
    %469 = arith.mulf %468, %467 : vector<8x128xf32>
    %cst_192 = arith.constant 5.000000e-01 : f32
    %470 = vector.broadcast %cst_192 : f32 to vector<8x128xf32>
    %471 = arith.addf %469, %470 : vector<8x128xf32>
    %472 = arith.mulf %465, %446 : vector<8x128xf32>
    %473 = arith.mulf %460, %466 : vector<8x128xf32>
    %474 = arith.addf %472, %473 : vector<8x128xf32>
    %475 = math.tanh %474 : vector<8x128xf32>
    %476 = arith.mulf %471, %475 : vector<8x128xf32>
    %c6_i32_193 = arith.constant 6 : i32
    %c8_i32_194 = arith.constant 8 : i32
    %477 = arith.muli %c6_i32_193, %c8_i32_194 : i32
    %478 = tpu.assume_multiple %477, 8 : i32
    %479 = arith.index_cast %478 : i32 to index
    %c0_195 = arith.constant 0 : index
    %480 = vector.load %arg11[%479, %c0_195] : memref<64x512xf32, #tpu.memory_space<vmem>>, vector<8x512xf32>
    %cst_196 = arith.constant dense<0.000000e+00> : vector<8x512xf32>
    %481 = tpu.matmul %476, %308, %cst_196 {dimension_numbers = #tpu.dot_dimension_numbers<[1], [0], [0], [1], [0, 0, 1, 1], [], []>} : vector<8x128xf32>, vector<128x512xf32>, vector<8x512xf32> -> vector<8x512xf32>
    %482 = arith.addf %480, %481 : vector<8x512xf32>
    %483 = math.tanh %482 : vector<8x512xf32>
    %484 = vector.extract_strided_slice %483 {offsets = [0, 0], sizes = [8, 128], strides = [1, 1]} : vector<8x512xf32> to vector<8x128xf32>
    %cst_197 = arith.constant 5.000000e-01 : f32
    %485 = vector.broadcast %cst_197 : f32 to vector<8x128xf32>
    %486 = arith.mulf %485, %484 : vector<8x128xf32>
    %cst_198 = arith.constant 5.000000e-01 : f32
    %487 = vector.broadcast %cst_198 : f32 to vector<8x128xf32>
    %488 = arith.addf %486, %487 : vector<8x128xf32>
    %489 = vector.extract_strided_slice %483 {offsets = [0, 128], sizes = [8, 128], strides = [1, 1]} : vector<8x512xf32> to vector<8x128xf32>
    %cst_199 = arith.constant 5.000000e-01 : f32
    %490 = vector.broadcast %cst_199 : f32 to vector<8x128xf32>
    %491 = arith.mulf %490, %489 : vector<8x128xf32>
    %cst_200 = arith.constant 5.000000e-01 : f32
    %492 = vector.broadcast %cst_200 : f32 to vector<8x128xf32>
    %493 = arith.addf %491, %492 : vector<8x128xf32>
    %494 = vector.extract_strided_slice %483 {offsets = [0, 256], sizes = [8, 128], strides = [1, 1]} : vector<8x512xf32> to vector<8x128xf32>
    %495 = vector.extract_strided_slice %483 {offsets = [0, 384], sizes = [8, 128], strides = [1, 1]} : vector<8x512xf32> to vector<8x128xf32>
    %cst_201 = arith.constant 5.000000e-01 : f32
    %496 = vector.broadcast %cst_201 : f32 to vector<8x128xf32>
    %497 = arith.mulf %496, %495 : vector<8x128xf32>
    %cst_202 = arith.constant 5.000000e-01 : f32
    %498 = vector.broadcast %cst_202 : f32 to vector<8x128xf32>
    %499 = arith.addf %497, %498 : vector<8x128xf32>
    %500 = arith.mulf %493, %474 : vector<8x128xf32>
    %501 = arith.mulf %488, %494 : vector<8x128xf32>
    %502 = arith.addf %500, %501 : vector<8x128xf32>
    %503 = math.tanh %502 : vector<8x128xf32>
    %504 = arith.mulf %499, %503 : vector<8x128xf32>
    %c7_i32_203 = arith.constant 7 : i32
    %c8_i32_204 = arith.constant 8 : i32
    %505 = arith.muli %c7_i32_203, %c8_i32_204 : i32
    %506 = tpu.assume_multiple %505, 8 : i32
    %507 = arith.index_cast %506 : i32 to index
    %c0_205 = arith.constant 0 : index
    %508 = vector.load %arg11[%507, %c0_205] : memref<64x512xf32, #tpu.memory_space<vmem>>, vector<8x512xf32>
    %cst_206 = arith.constant dense<0.000000e+00> : vector<8x512xf32>
    %509 = tpu.matmul %504, %308, %cst_206 {dimension_numbers = #tpu.dot_dimension_numbers<[1], [0], [0], [1], [0, 0, 1, 1], [], []>} : vector<8x128xf32>, vector<128x512xf32>, vector<8x512xf32> -> vector<8x512xf32>
    %510 = arith.addf %508, %509 : vector<8x512xf32>
    %511 = math.tanh %510 : vector<8x512xf32>
    %512 = vector.extract_strided_slice %511 {offsets = [0, 0], sizes = [8, 128], strides = [1, 1]} : vector<8x512xf32> to vector<8x128xf32>
    %cst_207 = arith.constant 5.000000e-01 : f32
    %513 = vector.broadcast %cst_207 : f32 to vector<8x128xf32>
    %514 = arith.mulf %513, %512 : vector<8x128xf32>
    %cst_208 = arith.constant 5.000000e-01 : f32
    %515 = vector.broadcast %cst_208 : f32 to vector<8x128xf32>
    %516 = arith.addf %514, %515 : vector<8x128xf32>
    %517 = vector.extract_strided_slice %511 {offsets = [0, 128], sizes = [8, 128], strides = [1, 1]} : vector<8x512xf32> to vector<8x128xf32>
    %cst_209 = arith.constant 5.000000e-01 : f32
    %518 = vector.broadcast %cst_209 : f32 to vector<8x128xf32>
    %519 = arith.mulf %518, %517 : vector<8x128xf32>
    %cst_210 = arith.constant 5.000000e-01 : f32
    %520 = vector.broadcast %cst_210 : f32 to vector<8x128xf32>
    %521 = arith.addf %519, %520 : vector<8x128xf32>
    %522 = vector.extract_strided_slice %511 {offsets = [0, 256], sizes = [8, 128], strides = [1, 1]} : vector<8x512xf32> to vector<8x128xf32>
    %523 = vector.extract_strided_slice %511 {offsets = [0, 384], sizes = [8, 128], strides = [1, 1]} : vector<8x512xf32> to vector<8x128xf32>
    %cst_211 = arith.constant 5.000000e-01 : f32
    %524 = vector.broadcast %cst_211 : f32 to vector<8x128xf32>
    %525 = arith.mulf %524, %523 : vector<8x128xf32>
    %cst_212 = arith.constant 5.000000e-01 : f32
    %526 = vector.broadcast %cst_212 : f32 to vector<8x128xf32>
    %527 = arith.addf %525, %526 : vector<8x128xf32>
    %528 = arith.mulf %521, %502 : vector<8x128xf32>
    %529 = arith.mulf %516, %522 : vector<8x128xf32>
    %530 = arith.addf %528, %529 : vector<8x128xf32>
    %531 = math.tanh %530 : vector<8x128xf32>
    %532 = arith.mulf %527, %531 : vector<8x128xf32>
    %c8_i32_213 = arith.constant 8 : i32
    %c0_214 = arith.constant 0 : index
    %c0_215 = arith.constant 0 : index
    %533 = vector.load %arg10[%c0_214, %c0_215] : memref<8x128xf32, #tpu.memory_space<vmem>>, vector<8x128xf32>
    tpu.vector_store %arg10[%c0_214, %c0_215], %532 {strides = array<i32>} : memref<8x128xf32, #tpu.memory_space<vmem>>, vector<8x128xf32>,
    return
  }
}

</mosaic_0001>

<llo_original>
// kernel: tpu_custom_call.1
$region0: #{tpu_custom_call.1}
  #allocation0 [shape = 'u32[]', space=smem, size = 0x4, offset = 0x4, fixed_abs, tag = 'smem constant byte address 0x4 - core index']
  #allocation1 [shape = 'u32[144,128]{1,0:T(1,128)}', space=vmem, size = 0x12000, scoped, tag = 'internal scratch']
  #allocation2 [shape = 'f32[64,512]{1,0:T(8,128)}', space=vmem, size = 0x20000, scoped, tag = 'scratch operand']
  #allocation3 [shape = 'f32[64,128]{1,0:T(8,128)}', space=vmem, size = 0x8000, scoped, tag = 'scratch operand']
  #allocation4 [shape = 'f32[64,128]{1,0:T(8,128)}', space=vmem, size = 0x8000, scoped, tag = 'scratch operand']
  %s0 = inlined_call_operand.vmem [shape: f32[64,1], index: 0, kind: input, shape index: {}]
  %s1 = inlined_call_operand.vmem [shape: f32[64,1], index: 1, kind: input, shape index: {}]
  %s2 = inlined_call_operand.vmem [shape: f32[1,512], index: 2, kind: input, shape index: {}]
  %s3 = inlined_call_operand.vmem [shape: f32[1,512], index: 3, kind: input, shape index: {}]
  %s4 = inlined_call_operand.vmem [shape: f32[1,512], index: 4, kind: input, shape index: {}]
  %s5 = inlined_call_operand.hbm [shape: f32[128,512], index: 5, kind: input, shape index: {}]
  %s6 = inlined_call_operand.hbm [shape: f32[128,512], index: 6, kind: input, shape index: {}]
  %s7 = inlined_call_operand.hbm [shape: f32[128,512], index: 7, kind: input, shape index: {}]
  %s8 = inlined_call_operand.vmem [shape: f32[1,512], index: 8, kind: input, shape index: {}]
  %s9 = inlined_call_operand.hbm [shape: f32[128,512], index: 9, kind: input, shape index: {}]
  %s10 = inlined_call_operand.hbm [shape: f32[8,128], index: 10, kind: output, shape index: {}]
  %s11 = sld [smem:[#allocation0]]
  $region66: #{tpu_custom_call.1} parent=0
    _
  %s13 = ssub.s32 1, %s11
  %s14 = scalar_select 0, %s13, %s11
  $region1: #{tpu_custom_call.1} parent=0
    #allocation5 [shape = 'u8[262144]{0}', space=vmem, size = 0x40000, scoped, tag = 'input window, operand 5, single buffered']
    #allocation6 [shape = 's32[1]{0}', space=sflag, size = 0x4, scoped, tag = 'scoped memory for tpu_custom_call.1']
    #allocation7 [shape = 's32[1]{0}', space=sflag, size = 0x4, scoped, tag = 'scoped memory for tpu_custom_call.1']
    #allocation8 [shape = 'u8[262144]{0}', space=vmem, size = 0x40000, scoped, tag = 'input window, operand 6, single buffered']
    #allocation9 [shape = 's32[1]{0}', space=sflag, size = 0x4, scoped, tag = 'scoped memory for tpu_custom_call.1']
    #allocation10 [shape = 'u8[262144]{0}', space=vmem, size = 0x40000, scoped, tag = 'input window, operand 7, single buffered']
    #allocation11 [shape = 'u8[262144]{0}', space=vmem, size = 0x40000, scoped, tag = 'input window, operand 9, single buffered']
    #allocation12 [shape = 's32[1]{0}', space=sflag, size = 0x4, scoped, tag = 'scoped memory for tpu_custom_call.1']
    #allocation13 [shape = 'u8[4096]{0}', space=vmem, size = 0x1000, scoped, tag = 'output window, operand 0, single buffered']
    %15 = vsyncpa [#allocation6], 0
    %16 = vsyncpa [#allocation9], 0
    %17 = vsyncpa [#allocation12], 0
    %18 = vsyncpa [#allocation7], 0
    // Predicated region
    $region2: #{tpu_custom_call.1} parent=1 // pred_check
      _
    $region3: #{tpu_custom_call.1} parent=1 // pred_check_branch
      %20 = sbr.rel (0) target = $region5
    $region4: #{tpu_custom_call.1} parent=1 // pred_region
      _
    $region5: #{tpu_custom_call.1} parent=1 // pred_fallthru
      _
    // Predicated region
    $region6: #{tpu_custom_call.1} parent=1 // pred_check
      _
    $region7: #{tpu_custom_call.1} parent=1 // pred_check_branch
      %22 = sbr.rel (0) target = $region9
    $region8: #{tpu_custom_call.1} parent=1 // pred_region
      _
    $region9: #{tpu_custom_call.1} parent=1 // pred_fallthru
      _
    // Predicated region
    $region10: #{tpu_custom_call.1} parent=1 // pred_check
      _
    $region11: #{tpu_custom_call.1} parent=1 // pred_check_branch
      %24 = sbr.rel (0) target = $region13
    $region12: #{tpu_custom_call.1} parent=1 // pred_region
      _
    $region13: #{tpu_custom_call.1} parent=1 // pred_fallthru
      _
    // Predicated region
    $region14: #{tpu_custom_call.1} parent=1 // pred_check
      _
    $region15: #{tpu_custom_call.1} parent=1 // pred_check_branch
      %26 = sbr.rel (0) target = $region17
    $region16: #{tpu_custom_call.1} parent=1 // pred_region
      _
    $region17: #{tpu_custom_call.1} parent=1 // pred_fallthru
      _
    // Predicated region
    $region18: #{tpu_custom_call.1} parent=1 // pred_check
      _
    $region19: #{tpu_custom_call.1} parent=1 // pred_check_branch
      %28 = sbr.rel (0) target = $region21
    $region20: #{tpu_custom_call.1} parent=1 // pred_region
      _
    $region21: #{tpu_custom_call.1} parent=1 // pred_fallthru
      _
    // Predicated region
    $region22: #{tpu_custom_call.1} parent=1 // pred_check
      _
    $region23: #{tpu_custom_call.1} parent=1 // pred_check_branch
      %30 = sbr.rel (0) target = $region25
    $region24: #{tpu_custom_call.1} parent=1 // pred_region
      %s32 = ssub.s32 8192, 8192
      %33 = vsyncadd [#allocation6], %s32
      %s34 = sshll.u32 [#allocation5], 4
      %s35 = int_to_ptr.vmem [resolvable:$true] %s34
      %40 = dma.hbm_to_vmem [thread:$0]  %s5, 8192, %s35, [#allocation6], 512, 512, 32
    $region25: #{tpu_custom_call.1} parent=1 // pred_fallthru
      _
    // Predicated region
    $region26: #{tpu_custom_call.1} parent=1 // pred_check
      _
    $region27: #{tpu_custom_call.1} parent=1 // pred_check_branch
      %42 = sbr.rel (0) target = $region29
    $region28: #{tpu_custom_call.1} parent=1 // pred_region
      %s44 = ssub.s32 8192, 8192
      %45 = vsyncadd [#allocation9], %s44
      %s46 = sshll.u32 [#allocation8], 4
      %s47 = int_to_ptr.vmem [resolvable:$true] %s46
      %52 = dma.hbm_to_vmem [thread:$0]  %s6, 8192, %s47, [#allocation9], 512, 512, 32
    $region29: #{tpu_custom_call.1} parent=1 // pred_fallthru
      _
    // Predicated region
    $region30: #{tpu_custom_call.1} parent=1 // pred_check
      _
    $region31: #{tpu_custom_call.1} parent=1 // pred_check_branch
      %54 = sbr.rel (0) target = $region33
    $region32: #{tpu_custom_call.1} parent=1 // pred_region
      %s56 = ssub.s32 8192, 8192
      %57 = vsyncadd [#allocation9], %s56
      %s58 = sshll.u32 [#allocation10], 4
      %s59 = int_to_ptr.vmem [resolvable:$true] %s58
      %64 = dma.hbm_to_vmem [thread:$0]  %s7, 8192, %s59, [#allocation9], 512, 512, 32
    $region33: #{tpu_custom_call.1} parent=1 // pred_fallthru
      _
    // Predicated region
    $region34: #{tpu_custom_call.1} parent=1 // pred_check
      _
    $region35: #{tpu_custom_call.1} parent=1 // pred_check_branch
      %66 = sbr.rel (0) target = $region37
    $region36: #{tpu_custom_call.1} parent=1 // pred_region
      _
    $region37: #{tpu_custom_call.1} parent=1 // pred_fallthru
      _
    // Predicated region
    $region38: #{tpu_custom_call.1} parent=1 // pred_check
      _
    $region39: #{tpu_custom_call.1} parent=1 // pred_check_branch
      %68 = sbr.rel (0) target = $region41
    $region40: #{tpu_custom_call.1} parent=1 // pred_region
      %s70 = ssub.s32 8192, 8192
      %71 = vsyncadd [#allocation12], %s70
      %s72 = sshll.u32 [#allocation11], 4
      %s73 = int_to_ptr.vmem [resolvable:$true] %s72
      %78 = dma.hbm_to_vmem [thread:$0]  %s9, 8192, %s73, [#allocation12], 512, 512, 32
    $region41: #{tpu_custom_call.1} parent=1 // pred_fallthru
      _
    // Predicated region
    $region42: #{tpu_custom_call.1} parent=1 // pred_check
      _
    $region43: #{tpu_custom_call.1} parent=1 // pred_check_branch
      %80 = sbr.rel (0) target = $region45
    $region44: #{tpu_custom_call.1} parent=1 // pred_region
      %81 = dma.done [#allocation6], 8192
    $region45: #{tpu_custom_call.1} parent=1 // pred_fallthru
      _
    // Predicated region
    $region46: #{tpu_custom_call.1} parent=1 // pred_check
      _
    $region47: #{tpu_custom_call.1} parent=1 // pred_check_branch
      %83 = sbr.rel (0) target = $region49
    $region48: #{tpu_custom_call.1} parent=1 // pred_region
      %84 = dma.done [#allocation9], 8192
    $region49: #{tpu_custom_call.1} parent=1 // pred_fallthru
      _
    // Predicated region
    $region50: #{tpu_custom_call.1} parent=1 // pred_check
      _
    $region51: #{tpu_custom_call.1} parent=1 // pred_check_branch
      %86 = sbr.rel (0) target = $region53
    $region52: #{tpu_custom_call.1} parent=1 // pred_region
      %87 = dma.done [#allocation9], 8192
    $region53: #{tpu_custom_call.1} parent=1 // pred_fallthru
      _
    // Predicated region
    $region54: #{tpu_custom_call.1} parent=1 // pred_check
      _
    $region55: #{tpu_custom_call.1} parent=1 // pred_check_branch
      %89 = sbr.rel (0) target = $region57
    $region56: #{tpu_custom_call.1} parent=1 // pred_region
      %90 = dma.done [#allocation12], 8192
    $region57: #{tpu_custom_call.1} parent=1 // pred_fallthru
      _
    %v91 = vld [vmem:[%s0] sm:$0xff]
    %v92 = vld [vmem:[%s0 + $0x8] sm:$0xff]
    %v93 = vld [vmem:[%s0 + $0x10] sm:$0xff]
    %v94 = vld [vmem:[%s0 + $0x18] sm:$0xff]
    %v95 = vld [vmem:[%s0 + $0x20] sm:$0xff]
    %v96 = vld [vmem:[%s0 + $0x28] sm:$0xff]
    %v97 = vld [vmem:[%s0 + $0x30] sm:$0xff]
    %v98 = vld [vmem:[%s0 + $0x38] sm:$0xff]
    %v99 = vld [vmem:[%s2] sm:$0xf]
    %101 = vset.pattern.permute.xlu0 0
    %102 = vperm.xlu0 %101, %v91
    %v103 = vpop.permute.xlu0 %102
    %106 = vset.pattern.permute.xlu0 0
    %107 = vperm.xlu0 %106, %v92
    %v108 = vpop.permute.xlu0 %107
    %111 = vset.pattern.permute.xlu0 0
    %112 = vperm.xlu0 %111, %v93
    %v113 = vpop.permute.xlu0 %112
    %116 = vset.pattern.permute.xlu0 0
    %117 = vperm.xlu0 %116, %v94
    %v118 = vpop.permute.xlu0 %117
    %121 = vset.pattern.permute.xlu0 0
    %122 = vperm.xlu0 %121, %v95
    %v123 = vpop.permute.xlu0 %122
    %126 = vset.pattern.permute.xlu0 0
    %127 = vperm.xlu0 %126, %v96
    %v128 = vpop.permute.xlu0 %127
    %131 = vset.pattern.permute.xlu0 0
    %132 = vperm.xlu0 %131, %v97
    %v133 = vpop.permute.xlu0 %132
    %136 = vset.pattern.permute.xlu0 0
    %137 = vperm.xlu0 %136, %v98
    %v138 = vpop.permute.xlu0 %137
    %v141 = vlaneseq
    %v142 = vshrl.u32 %v141, 7
    %v143 = vsub.s32 0, %v142
    %v144 = vrot.slane %v99, %v143
    %v145 = vlaneseq
    %v146 = vshrl.u32 %v145, 7
    %v147 = vsub.s32 1, %v146
    %v148 = vrot.slane %v99, %v147
    %v149 = vlaneseq
    %v150 = vshrl.u32 %v149, 7
    %v151 = vsub.s32 2, %v150
    %v152 = vrot.slane %v99, %v151
    %v153 = vlaneseq
    %v154 = vshrl.u32 %v153, 7
    %v155 = vsub.s32 3, %v154
    %v156 = vrot.slane %v99, %v155
    %v161 = vmul.f32 %v103, %v144
    %v162 = vmul.f32 %v103, %v148
    %v163 = vmul.f32 %v103, %v152
    %v164 = vmul.f32 %v103, %v156
    %v165 = vmul.f32 %v108, %v144
    %v166 = vmul.f32 %v108, %v148
    %v167 = vmul.f32 %v108, %v152
    %v168 = vmul.f32 %v108, %v156
    %v169 = vmul.f32 %v113, %v144
    %v170 = vmul.f32 %v113, %v148
    %v171 = vmul.f32 %v113, %v152
    %v172 = vmul.f32 %v113, %v156
    %v173 = vmul.f32 %v118, %v144
    %v174 = vmul.f32 %v118, %v148
    %v175 = vmul.f32 %v118, %v152
    %v176 = vmul.f32 %v118, %v156
    %v177 = vmul.f32 %v123, %v144
    %v178 = vmul.f32 %v123, %v148
    %v179 = vmul.f32 %v123, %v152
    %v180 = vmul.f32 %v123, %v156
    %v181 = vmul.f32 %v128, %v144
    %v182 = vmul.f32 %v128, %v148
    %v183 = vmul.f32 %v128, %v152
    %v184 = vmul.f32 %v128, %v156
    %v185 = vmul.f32 %v133, %v144
    %v186 = vmul.f32 %v133, %v148
    %v187 = vmul.f32 %v133, %v152
    %v188 = vmul.f32 %v133, %v156
    %v189 = vmul.f32 %v138, %v144
    %v190 = vmul.f32 %v138, %v148
    %v191 = vmul.f32 %v138, %v152
    %v192 = vmul.f32 %v138, %v156
    %v193 = vld [vmem:[%s1] sm:$0xff]
    %v194 = vld [vmem:[%s1 + $0x8] sm:$0xff]
    %v195 = vld [vmem:[%s1 + $0x10] sm:$0xff]
    %v196 = vld [vmem:[%s1 + $0x18] sm:$0xff]
    %v197 = vld [vmem:[%s1 + $0x20] sm:$0xff]
    %v198 = vld [vmem:[%s1 + $0x28] sm:$0xff]
    %v199 = vld [vmem:[%s1 + $0x30] sm:$0xff]
    %v200 = vld [vmem:[%s1 + $0x38] sm:$0xff]
    %v201 = vld [vmem:[%s3] sm:$0xf]
    %203 = vset.pattern.permute.xlu0 0
    %204 = vperm.xlu0 %203, %v193
    %v205 = vpop.permute.xlu0 %204
    %208 = vset.pattern.permute.xlu0 0
    %209 = vperm.xlu0 %208, %v194
    %v210 = vpop.permute.xlu0 %209
    %213 = vset.pattern.permute.xlu0 0
    %214 = vperm.xlu0 %213, %v195
    %v215 = vpop.permute.xlu0 %214
    %218 = vset.pattern.permute.xlu0 0
    %219 = vperm.xlu0 %218, %v196
    %v220 = vpop.permute.xlu0 %219
    %223 = vset.pattern.permute.xlu0 0
    %224 = vperm.xlu0 %223, %v197
    %v225 = vpop.permute.xlu0 %224
    %228 = vset.pattern.permute.xlu0 0
    %229 = vperm.xlu0 %228, %v198
    %v230 = vpop.permute.xlu0 %229
    %233 = vset.pattern.permute.xlu0 0
    %234 = vperm.xlu0 %233, %v199
    %v235 = vpop.permute.xlu0 %234
    %238 = vset.pattern.permute.xlu0 0
    %239 = vperm.xlu0 %238, %v200
    %v240 = vpop.permute.xlu0 %239
    %v243 = vlaneseq
    %v244 = vshrl.u32 %v243, 7
    %v245 = vsub.s32 0, %v244
    %v246 = vrot.slane %v201, %v245
    %v247 = vlaneseq
    %v248 = vshrl.u32 %v247, 7
    %v249 = vsub.s32 1, %v248
    %v250 = vrot.slane %v201, %v249
    %v251 = vlaneseq
    %v252 = vshrl.u32 %v251, 7
    %v253 = vsub.s32 2, %v252
    %v254 = vrot.slane %v201, %v253
    %v255 = vlaneseq
    %v256 = vshrl.u32 %v255, 7
    %v257 = vsub.s32 3, %v256
    %v258 = vrot.slane %v201, %v257
    %v263 = vmul.f32 %v205, %v246
    %v264 = vmul.f32 %v205, %v250
    %v265 = vmul.f32 %v205, %v254
    %v266 = vmul.f32 %v205, %v258
    %v267 = vmul.f32 %v210, %v246
    %v268 = vmul.f32 %v210, %v250
    %v269 = vmul.f32 %v210, %v254
    %v270 = vmul.f32 %v210, %v258
    %v271 = vmul.f32 %v215, %v246
    %v272 = vmul.f32 %v215, %v250
    %v273 = vmul.f32 %v215, %v254
    %v274 = vmul.f32 %v215, %v258
    %v275 = vmul.f32 %v220, %v246
    %v276 = vmul.f32 %v220, %v250
    %v277 = vmul.f32 %v220, %v254
    %v278 = vmul.f32 %v220, %v258
    %v279 = vmul.f32 %v225, %v246
    %v280 = vmul.f32 %v225, %v250
    %v281 = vmul.f32 %v225, %v254
    %v282 = vmul.f32 %v225, %v258
    %v283 = vmul.f32 %v230, %v246
    %v284 = vmul.f32 %v230, %v250
    %v285 = vmul.f32 %v230, %v254
    %v286 = vmul.f32 %v230, %v258
    %v287 = vmul.f32 %v235, %v246
    %v288 = vmul.f32 %v235, %v250
    %v289 = vmul.f32 %v235, %v254
    %v290 = vmul.f32 %v235, %v258
    %v291 = vmul.f32 %v240, %v246
    %v292 = vmul.f32 %v240, %v250
    %v293 = vmul.f32 %v240, %v254
    %v294 = vmul.f32 %v240, %v258
    %v295 = vadd.f32 %v161, %v263
    %v296 = vadd.f32 %v162, %v264
    %v297 = vadd.f32 %v163, %v265
    %v298 = vadd.f32 %v164, %v266
    %v299 = vadd.f32 %v165, %v267
    %v300 = vadd.f32 %v166, %v268
    %v301 = vadd.f32 %v167, %v269
    %v302 = vadd.f32 %v168, %v270
    %v303 = vadd.f32 %v169, %v271
    %v304 = vadd.f32 %v170, %v272
    %v305 = vadd.f32 %v171, %v273
    %v306 = vadd.f32 %v172, %v274
    %v307 = vadd.f32 %v173, %v275
    %v308 = vadd.f32 %v174, %v276
    %v309 = vadd.f32 %v175, %v277
    %v310 = vadd.f32 %v176, %v278
    %v311 = vadd.f32 %v177, %v279
    %v312 = vadd.f32 %v178, %v280
    %v313 = vadd.f32 %v179, %v281
    %v314 = vadd.f32 %v180, %v282
    %v315 = vadd.f32 %v181, %v283
    %v316 = vadd.f32 %v182, %v284
    %v317 = vadd.f32 %v183, %v285
    %v318 = vadd.f32 %v184, %v286
    %v319 = vadd.f32 %v185, %v287
    %v320 = vadd.f32 %v186, %v288
    %v321 = vadd.f32 %v187, %v289
    %v322 = vadd.f32 %v188, %v290
    %v323 = vadd.f32 %v189, %v291
    %v324 = vadd.f32 %v190, %v292
    %v325 = vadd.f32 %v191, %v293
    %v326 = vadd.f32 %v192, %v294
    %v327 = vld [vmem:[%s4] sm:$0xf]
    %v329 = vlaneseq
    %v330 = vshrl.u32 %v329, 7
    %v331 = vsub.s32 0, %v330
    %v332 = vrot.slane %v327, %v331
    %v333 = vlaneseq
    %v334 = vshrl.u32 %v333, 7
    %v335 = vsub.s32 1, %v334
    %v336 = vrot.slane %v327, %v335
    %v337 = vlaneseq
    %v338 = vshrl.u32 %v337, 7
    %v339 = vsub.s32 2, %v338
    %v340 = vrot.slane %v327, %v339
    %v341 = vlaneseq
    %v342 = vshrl.u32 %v341, 7
    %v343 = vsub.s32 3, %v342
    %v344 = vrot.slane %v327, %v343
    %v349 = vadd.f32 %v295, %v332
    %v350 = vadd.f32 %v296, %v336
    %v351 = vadd.f32 %v297, %v340
    %v352 = vadd.f32 %v298, %v344
    %v353 = vadd.f32 %v299, %v332
    %v354 = vadd.f32 %v300, %v336
    %v355 = vadd.f32 %v301, %v340
    %v356 = vadd.f32 %v302, %v344
    %v357 = vadd.f32 %v303, %v332
    %v358 = vadd.f32 %v304, %v336
    %v359 = vadd.f32 %v305, %v340
    %v360 = vadd.f32 %v306, %v344
    %v361 = vadd.f32 %v307, %v332
    %v362 = vadd.f32 %v308, %v336
    %v363 = vadd.f32 %v309, %v340
    %v364 = vadd.f32 %v310, %v344
    %v365 = vadd.f32 %v311, %v332
    %v366 = vadd.f32 %v312, %v336
    %v367 = vadd.f32 %v313, %v340
    %v368 = vadd.f32 %v314, %v344
    %v369 = vadd.f32 %v315, %v332
    %v370 = vadd.f32 %v316, %v336
    %v371 = vadd.f32 %v317, %v340
    %v372 = vadd.f32 %v318, %v344
    %v373 = vadd.f32 %v319, %v332
    %v374 = vadd.f32 %v320, %v336
    %v375 = vadd.f32 %v321, %v340
    %v376 = vadd.f32 %v322, %v344
    %v377 = vadd.f32 %v323, %v332
    %v378 = vadd.f32 %v324, %v336
    %v379 = vadd.f32 %v325, %v340
    %v380 = vadd.f32 %v326, %v344
    %381 = vst [vmem:[#allocation2] sm:$0xff] %v349
    %382 = vst [vmem:[#allocation2 + $0x8] sm:$0xff] %v350
    %383 = vst [vmem:[#allocation2 + $0x10] sm:$0xff] %v351
    %384 = vst [vmem:[#allocation2 + $0x18] sm:$0xff] %v352
    %385 = vst [vmem:[#allocation2 + $0x20] sm:$0xff] %v353
    %386 = vst [vmem:[#allocation2 + $0x28] sm:$0xff] %v354
    %387 = vst [vmem:[#allocation2 + $0x30] sm:$0xff] %v355
    %388 = vst [vmem:[#allocation2 + $0x38] sm:$0xff] %v356
    %389 = vst [vmem:[#allocation2 + $0x40] sm:$0xff] %v357
    %390 = vst [vmem:[#allocation2 + $0x48] sm:$0xff] %v358
    %391 = vst [vmem:[#allocation2 + $0x50] sm:$0xff] %v359
    %392 = vst [vmem:[#allocation2 + $0x58] sm:$0xff] %v360
    %393 = vst [vmem:[#allocation2 + $0x60] sm:$0xff] %v361
    %394 = vst [vmem:[#allocation2 + $0x68] sm:$0xff] %v362
    %395 = vst [vmem:[#allocation2 + $0x70] sm:$0xff] %v363
    %396 = vst [vmem:[#allocation2 + $0x78] sm:$0xff] %v364
    %397 = vst [vmem:[#allocation2 + $0x80] sm:$0xff] %v365
    %398 = vst [vmem:[#allocation2 + $0x88] sm:$0xff] %v366
    %399 = vst [vmem:[#allocation2 + $0x90] sm:$0xff] %v367
    %400 = vst [vmem:[#allocation2 + $0x98] sm:$0xff] %v368
    %401 = vst [vmem:[#allocation2 + $0xa0] sm:$0xff] %v369
    %402 = vst [vmem:[#allocation2 + $0xa8] sm:$0xff] %v370
    %403 = vst [vmem:[#allocation2 + $0xb0] sm:$0xff] %v371
    %404 = vst [vmem:[#allocation2 + $0xb8] sm:$0xff] %v372
    %405 = vst [vmem:[#allocation2 + $0xc0] sm:$0xff] %v373
    %406 = vst [vmem:[#allocation2 + $0xc8] sm:$0xff] %v374
    %407 = vst [vmem:[#allocation2 + $0xd0] sm:$0xff] %v375
    %408 = vst [vmem:[#allocation2 + $0xd8] sm:$0xff] %v376
    %409 = vst [vmem:[#allocation2 + $0xe0] sm:$0xff] %v377
    %410 = vst [vmem:[#allocation2 + $0xe8] sm:$0xff] %v378
    %411 = vst [vmem:[#allocation2 + $0xf0] sm:$0xff] %v379
    %412 = vst [vmem:[#allocation2 + $0xf8] sm:$0xff] %v380
    %v413 = vld [vmem:[#allocation5] sm:$0xff]
    %v414 = vld [vmem:[#allocation5 + $0x8] sm:$0xff]
    %v415 = vld [vmem:[#allocation5 + $0x10] sm:$0xff]
    %v416 = vld [vmem:[#allocation5 + $0x18] sm:$0xff]
    %v417 = vld [vmem:[#allocation5 + $0x20] sm:$0xff]
    %v418 = vld [vmem:[#allocation5 + $0x28] sm:$0xff]
    %v419 = vld [vmem:[#allocation5 + $0x30] sm:$0xff]
    %v420 = vld [vmem:[#allocation5 + $0x38] sm:$0xff]
    %v421 = vld [vmem:[#allocation5 + $0x40] sm:$0xff]
    %v422 = vld [vmem:[#allocation5 + $0x48] sm:$0xff]
    %v423 = vld [vmem:[#allocation5 + $0x50] sm:$0xff]
    %v424 = vld [vmem:[#allocation5 + $0x58] sm:$0xff]
    %v425 = vld [vmem:[#allocation5 + $0x60] sm:$0xff]
    %v426 = vld [vmem:[#allocation5 + $0x68] sm:$0xff]
    %v427 = vld [vmem:[#allocation5 + $0x70] sm:$0xff]
    %v428 = vld [vmem:[#allocation5 + $0x78] sm:$0xff]
    %v429 = vld [vmem:[#allocation5 + $0x80] sm:$0xff]
    %v430 = vld [vmem:[#allocation5 + $0x88] sm:$0xff]
    %v431 = vld [vmem:[#allocation5 + $0x90] sm:$0xff]
    %v432 = vld [vmem:[#allocation5 + $0x98] sm:$0xff]
    %v433 = vld [vmem:[#allocation5 + $0xa0] sm:$0xff]
    %v434 = vld [vmem:[#allocation5 + $0xa8] sm:$0xff]
    %v435 = vld [vmem:[#allocation5 + $0xb0] sm:$0xff]
    %v436 = vld [vmem:[#allocation5 + $0xb8] sm:$0xff]
    %v437 = vld [vmem:[#allocation5 + $0xc0] sm:$0xff]
    %v438 = vld [vmem:[#allocation5 + $0xc8] sm:$0xff]
    %v439 = vld [vmem:[#allocation5 + $0xd0] sm:$0xff]
    %v440 = vld [vmem:[#allocation5 + $0xd8] sm:$0xff]
    %v441 = vld [vmem:[#allocation5 + $0xe0] sm:$0xff]
    %v442 = vld [vmem:[#allocation5 + $0xe8] sm:$0xff]
    %v443 = vld [vmem:[#allocation5 + $0xf0] sm:$0xff]
    %v444 = vld [vmem:[#allocation5 + $0xf8] sm:$0xff]
    %v445 = vld [vmem:[#allocation5 + $0x100] sm:$0xff]
    %v446 = vld [vmem:[#allocation5 + $0x108] sm:$0xff]
    %v447 = vld [vmem:[#allocation5 + $0x110] sm:$0xff]
    %v448 = vld [vmem:[#allocation5 + $0x118] sm:$0xff]
    %v449 = vld [vmem:[#allocation5 + $0x120] sm:$0xff]
    %v450 = vld [vmem:[#allocation5 + $0x128] sm:$0xff]
    %v451 = vld [vmem:[#allocation5 + $0x130] sm:$0xff]
    %v452 = vld [vmem:[#allocation5 + $0x138] sm:$0xff]
    %v453 = vld [vmem:[#allocation5 + $0x140] sm:$0xff]
    %v454 = vld [vmem:[#allocation5 + $0x148] sm:$0xff]
    %v455 = vld [vmem:[#allocation5 + $0x150] sm:$0xff]
    %v456 = vld [vmem:[#allocation5 + $0x158] sm:$0xff]
    %v457 = vld [vmem:[#allocation5 + $0x160] sm:$0xff]
    %v458 = vld [vmem:[#allocation5 + $0x168] sm:$0xff]
    %v459 = vld [vmem:[#allocation5 + $0x170] sm:$0xff]
    %v460 = vld [vmem:[#allocation5 + $0x178] sm:$0xff]
    %v461 = vld [vmem:[#allocation5 + $0x180] sm:$0xff]
    %v462 = vld [vmem:[#allocation5 + $0x188] sm:$0xff]
    %v463 = vld [vmem:[#allocation5 + $0x190] sm:$0xff]
    %v464 = vld [vmem:[#allocation5 + $0x198] sm:$0xff]
    %v465 = vld [vmem:[#allocation5 + $0x1a0] sm:$0xff]
    %v466 = vld [vmem:[#allocation5 + $0x1a8] sm:$0xff]
    %v467 = vld [vmem:[#allocation5 + $0x1b0] sm:$0xff]
    %v468 = vld [vmem:[#allocation5 + $0x1b8] sm:$0xff]
    %v469 = vld [vmem:[#allocation5 + $0x1c0] sm:$0xff]
    %v470 = vld [vmem:[#allocation5 + $0x1c8] sm:$0xff]
    %v471 = vld [vmem:[#allocation5 + $0x1d0] sm:$0xff]
    %v472 = vld [vmem:[#allocation5 + $0x1d8] sm:$0xff]
    %v473 = vld [vmem:[#allocation5 + $0x1e0] sm:$0xff]
    %v474 = vld [vmem:[#allocation5 + $0x1e8] sm:$0xff]
    %v475 = vld [vmem:[#allocation5 + $0x1f0] sm:$0xff]
    %v476 = vld [vmem:[#allocation5 + $0x1f8] sm:$0xff]
    %s477 = smul.u32 0, 4
    %s478 = smul.addr %s477, 8
    %s479 = scalar_lea.vmem [#allocation2], %s478
    %v480 = vld [vmem:[%s479] sm:$0xff]
    %v481 = vld [vmem:[%s479 + $0x8] sm:$0xff]
    %v482 = vld [vmem:[%s479 + $0x10] sm:$0xff]
    %v483 = vld [vmem:[%s479 + $0x18] sm:$0xff]
    %484 = vmatprep.subr.mxu0 %v474
    %485 = vmatpush1.msra.mxu0 %v473
    %486 = vmatprep.subr.mxu0 %v470
    %487 = vmatpush1.msra.mxu0 %v469
    %488 = vmatprep.subr.mxu0 %v466
    %489 = vmatpush1.msra.mxu0 %v465
    %490 = vmatprep.subr.mxu0 %v462
    %491 = vmatpush1.msra.mxu0 %v461
    %492 = vmatprep.subr.mxu0 %v458
    %493 = vmatpush1.msra.mxu0 %v457
    %494 = vmatprep.subr.mxu0 %v454
    %495 = vmatpush1.msra.mxu0 %v453
    %496 = vmatprep.subr.mxu0 %v450
    %497 = vmatpush1.msra.mxu0 %v449
    %498 = vmatprep.subr.mxu0 %v446
    %499 = vmatpush1.msra.mxu0 %v445
    %500 = vmatprep.subr.mxu0 %v442
    %501 = vmatpush1.msra.mxu0 %v441
    %502 = vmatprep.subr.mxu0 %v438
    %503 = vmatpush1.msra.mxu0 %v437
    %504 = vmatprep.subr.mxu0 %v434
    %505 = vmatpush1.msra.mxu0 %v433
    %506 = vmatprep.subr.mxu0 %v430
    %507 = vmatpush1.msra.mxu0 %v429
    %508 = vmatprep.subr.mxu0 %v426
    %509 = vmatpush1.msra.mxu0 %v425
    %510 = vmatprep.subr.mxu0 %v422
    %511 = vmatpush1.msra.mxu0 %v421
    %512 = vmatprep.subr.mxu0 %v418
    %513 = vmatpush1.msra.mxu0 %v417
    %514 = vmatprep.subr.mxu0 %v414
    %515 = vmatpush1.msra.mxu0 %v413
    %516 = vmatprep.subr.mxu0 0.0
    %517 = vmatpush2.msra.mxu0 0.0
    %518 = vmatprep.subr.mxu0 0.0
    %519 = vmatpush2.msra.mxu0 0.0
    %520 = vmatprep.subr.mxu0 0.0
    %521 = vmatpush2.msra.mxu0 0.0
    %522 = vmatprep.subr.mxu0 0.0
    %523 = vmatpush2.msra.mxu0 0.0
    %524 = vmatprep.subr.mxu0 0.0
    %525 = vmatpush2.msra.mxu0 0.0
    %526 = vmatprep.subr.mxu0 0.0
    %527 = vmatpush2.msra.mxu0 0.0
    %528 = vmatprep.subr.mxu0 0.0
    %529 = vmatpush2.msra.mxu0 0.0
    %530 = vmatprep.subr.mxu0 0.0
    %531 = vmatpush2.msra.mxu0 0.0
    %532 = vmatprep.subr.mxu0 0.0
    %533 = vmatpush2.msra.mxu0 0.0
    %534 = vmatprep.subr.mxu0 0.0
    %535 = vmatpush2.msra.mxu0 0.0
    %536 = vmatprep.subr.mxu0 0.0
    %537 = vmatpush2.msra.mxu0 0.0
    %538 = vmatprep.subr.mxu0 0.0
    %539 = vmatpush2.msra.mxu0 0.0
    %540 = vmatprep.subr.mxu0 0.0
    %541 = vmatpush2.msra.mxu0 0.0
    %542 = vmatprep.subr.mxu0 0.0
    %543 = vmatpush2.msra.mxu0 0.0
    %544 = vmatprep.subr.mxu0 0.0
    %545 = vmatpush2.msra.mxu0 0.0
    %546 = vmatprep.subr.mxu0 0.0
    %547 = vmatpush2.msra.mxu0 0.0
    %548 = vmatprep.mubr.f32.mxu0 0.0
    %549 = vmatmul.mubr.f32.gmra.mxu0 0.0
    %v550 = vpop.f32.mrf.mxu0
    %v551 = vadd.f32 0.0, %v550
    %v552 = vpop.f32.mrf.mxu0
    %v553 = vadd.f32 0.0, %v552
    %554 = vdwg.mxu0
    %555 = vmatprep.subr.mxu0 %v476
    %556 = vmatpush1.msra.mxu0 %v475
    %557 = vmatprep.subr.mxu0 %v472
    %558 = vmatpush1.msra.mxu0 %v471
    %559 = vmatprep.subr.mxu0 %v468
    %560 = vmatpush1.msra.mxu0 %v467
    %561 = vmatprep.subr.mxu0 %v464
    %562 = vmatpush1.msra.mxu0 %v463
    %563 = vmatprep.subr.mxu0 %v460
    %564 = vmatpush1.msra.mxu0 %v459
    %565 = vmatprep.subr.mxu0 %v456
    %566 = vmatpush1.msra.mxu0 %v455
    %567 = vmatprep.subr.mxu0 %v452
    %568 = vmatpush1.msra.mxu0 %v451
    %569 = vmatprep.subr.mxu0 %v448
    %570 = vmatpush1.msra.mxu0 %v447
    %571 = vmatprep.subr.mxu0 %v444
    %572 = vmatpush1.msra.mxu0 %v443
    %573 = vmatprep.subr.mxu0 %v440
    %574 = vmatpush1.msra.mxu0 %v439
    %575 = vmatprep.subr.mxu0 %v436
    %576 = vmatpush1.msra.mxu0 %v435
    %577 = vmatprep.subr.mxu0 %v432
    %578 = vmatpush1.msra.mxu0 %v431
    %579 = vmatprep.subr.mxu0 %v428
    %580 = vmatpush1.msra.mxu0 %v427
    %581 = vmatprep.subr.mxu0 %v424
    %582 = vmatpush1.msra.mxu0 %v423
    %583 = vmatprep.subr.mxu0 %v420
    %584 = vmatpush1.msra.mxu0 %v419
    %585 = vmatprep.subr.mxu0 %v416
    %586 = vmatpush1.msra.mxu0 %v415
    %587 = vmatprep.subr.mxu0 0.0
    %588 = vmatpush2.msra.mxu0 0.0
    %589 = vmatprep.subr.mxu0 0.0
    %590 = vmatpush2.msra.mxu0 0.0
    %591 = vmatprep.subr.mxu0 0.0
    %592 = vmatpush2.msra.mxu0 0.0
    %593 = vmatprep.subr.mxu0 0.0
    %594 = vmatpush2.msra.mxu0 0.0
    %595 = vmatprep.subr.mxu0 0.0
    %596 = vmatpush2.msra.mxu0 0.0
    %597 = vmatprep.subr.mxu0 0.0
    %598 = vmatpush2.msra.mxu0 0.0
    %599 = vmatprep.subr.mxu0 0.0
    %600 = vmatpush2.msra.mxu0 0.0
    %601 = vmatprep.subr.mxu0 0.0
    %602 = vmatpush2.msra.mxu0 0.0
    %603 = vmatprep.subr.mxu0 0.0
    %604 = vmatpush2.msra.mxu0 0.0
    %605 = vmatprep.subr.mxu0 0.0
    %606 = vmatpush2.msra.mxu0 0.0
    %607 = vmatprep.subr.mxu0 0.0
    %608 = vmatpush2.msra.mxu0 0.0
    %609 = vmatprep.subr.mxu0 0.0
    %610 = vmatpush2.msra.mxu0 0.0
    %611 = vmatprep.subr.mxu0 0.0
    %612 = vmatpush2.msra.mxu0 0.0
    %613 = vmatprep.subr.mxu0 0.0
    %614 = vmatpush2.msra.mxu0 0.0
    %615 = vmatprep.subr.mxu0 0.0
    %616 = vmatpush2.msra.mxu0 0.0
    %617 = vmatprep.subr.mxu0 0.0
    %618 = vmatpush2.msra.mxu0 0.0
    %619 = vmatprep.mubr.f32.mxu0 0.0
    %620 = vmatmul.mubr.f32.gmra.mxu0 0.0
    %v621 = vpop.f32.mrf.mxu0
    %v622 = vadd.f32 0.0, %v621
    %v623 = vpop.f32.mrf.mxu0
    %v624 = vadd.f32 0.0, %v623
    %625 = vdwg.mxu0
    %v626 = vadd.f32 %v480, %v551
    %v627 = vadd.f32 %v481, %v553
    %v628 = vadd.f32 %v482, %v622
    %v629 = vadd.f32 %v483, %v624
    %v630 = vtanh.pop %v626
    %v631 = vtanh.pop %v627
    %v632 = vtanh.pop %v628
    %v633 = vtanh.pop %v629
    %v634 = vmul.f32 %v630, 0.5
    %v635 = vadd.f32 %v634, 0.5
    %v636 = vmul.f32 %v631, 0.5
    %v637 = vadd.f32 %v636, 0.5
    %v638 = vmul.f32 %v633, 0.5
    %v639 = vadd.f32 %v638, 0.5
    %v640 = vmul.f32 %v637, 0.0
    %v641 = vmul.f32 %v635, %v632
    %v642 = vadd.f32 %v640, %v641
    %v643 = vtanh.pop %v642
    %v644 = vmul.f32 %v639, %v643
    %645 = vst [vmem:[#allocation3] sm:$0xff] %v644
    %s646 = scalar_lea.vmem [#allocation4], 56
    %647 = vst [vmem:[%s646] sm:$0xff] %v644
    %s648 = smul.u32 1, 4
    %s649 = smul.addr %s648, 8
    %s650 = scalar_lea.vmem [#allocation2], %s649
    %v651 = vld [vmem:[%s650] sm:$0xff]
    %v652 = vld [vmem:[%s650 + $0x8] sm:$0xff]
    %v653 = vld [vmem:[%s650 + $0x10] sm:$0xff]
    %v654 = vld [vmem:[%s650 + $0x18] sm:$0xff]
    %655 = vmatprep.subr.mxu0 %v474
    %656 = vmatpush1.msra.mxu0 %v473
    %657 = vmatprep.subr.mxu0 %v470
    %658 = vmatpush1.msra.mxu0 %v469
    %659 = vmatprep.subr.mxu0 %v466
    %660 = vmatpush1.msra.mxu0 %v465
    %661 = vmatprep.subr.mxu0 %v462
    %662 = vmatpush1.msra.mxu0 %v461
    %663 = vmatprep.subr.mxu0 %v458
    %664 = vmatpush1.msra.mxu0 %v457
    %665 = vmatprep.subr.mxu0 %v454
    %666 = vmatpush1.msra.mxu0 %v453
    %667 = vmatprep.subr.mxu0 %v450
    %668 = vmatpush1.msra.mxu0 %v449
    %669 = vmatprep.subr.mxu0 %v446
    %670 = vmatpush1.msra.mxu0 %v445
    %671 = vmatprep.subr.mxu0 %v442
    %672 = vmatpush1.msra.mxu0 %v441
    %673 = vmatprep.subr.mxu0 %v438
    %674 = vmatpush1.msra.mxu0 %v437
    %675 = vmatprep.subr.mxu0 %v434
    %676 = vmatpush1.msra.mxu0 %v433
    %677 = vmatprep.subr.mxu0 %v430
    %678 = vmatpush1.msra.mxu0 %v429
    %679 = vmatprep.subr.mxu0 %v426
    %680 = vmatpush1.msra.mxu0 %v425
    %681 = vmatprep.subr.mxu0 %v422
    %682 = vmatpush1.msra.mxu0 %v421
    %683 = vmatprep.subr.mxu0 %v418
    %684 = vmatpush1.msra.mxu0 %v417
    %685 = vmatprep.subr.mxu0 %v414
    %686 = vmatpush1.msra.mxu0 %v413
    %687 = vmatprep.subr.mxu0 0.0
    %688 = vmatpush2.msra.mxu0 0.0
    %689 = vmatprep.subr.mxu0 0.0
    %690 = vmatpush2.msra.mxu0 0.0
    %691 = vmatprep.subr.mxu0 0.0
    %692 = vmatpush2.msra.mxu0 0.0
    %693 = vmatprep.subr.mxu0 0.0
    %694 = vmatpush2.msra.mxu0 0.0
    %695 = vmatprep.subr.mxu0 0.0
    %696 = vmatpush2.msra.mxu0 0.0
    %697 = vmatprep.subr.mxu0 0.0
    %698 = vmatpush2.msra.mxu0 0.0
    %699 = vmatprep.subr.mxu0 0.0
    %700 = vmatpush2.msra.mxu0 0.0
    %701 = vmatprep.subr.mxu0 0.0
    %702 = vmatpush2.msra.mxu0 0.0
    %703 = vmatprep.subr.mxu0 0.0
    %704 = vmatpush2.msra.mxu0 0.0
    %705 = vmatprep.subr.mxu0 0.0
    %706 = vmatpush2.msra.mxu0 0.0
    %707 = vmatprep.subr.mxu0 0.0
    %708 = vmatpush2.msra.mxu0 0.0
    %709 = vmatprep.subr.mxu0 0.0
    %710 = vmatpush2.msra.mxu0 0.0
    %711 = vmatprep.subr.mxu0 0.0
    %712 = vmatpush2.msra.mxu0 0.0
    %713 = vmatprep.subr.mxu0 0.0
    %714 = vmatpush2.msra.mxu0 0.0
    %715 = vmatprep.subr.mxu0 0.0
    %716 = vmatpush2.msra.mxu0 0.0
    %717 = vmatprep.subr.mxu0 0.0
    %718 = vmatpush2.msra.mxu0 0.0
    %719 = vmatprep.mubr.f32.mxu0 0.0
    %720 = vmatmul.mubr.f32.gmra.mxu0 %v644
    %v721 = vpop.f32.mrf.mxu0
    %v722 = vadd.f32 0.0, %v721
    %v723 = vpop.f32.mrf.mxu0
    %v724 = vadd.f32 0.0, %v723
    %725 = vdwg.mxu0
    %726 = vmatprep.subr.mxu0 %v476
    %727 = vmatpush1.msra.mxu0 %v475
    %728 = vmatprep.subr.mxu0 %v472
    %729 = vmatpush1.msra.mxu0 %v471
    %730 = vmatprep.subr.mxu0 %v468
    %731 = vmatpush1.msra.mxu0 %v467
    %732 = vmatprep.subr.mxu0 %v464
    %733 = vmatpush1.msra.mxu0 %v463
    %734 = vmatprep.subr.mxu0 %v460
    %735 = vmatpush1.msra.mxu0 %v459
    %736 = vmatprep.subr.mxu0 %v456
    %737 = vmatpush1.msra.mxu0 %v455
    %738 = vmatprep.subr.mxu0 %v452
    %739 = vmatpush1.msra.mxu0 %v451
    %740 = vmatprep.subr.mxu0 %v448
    %741 = vmatpush1.msra.mxu0 %v447
    %742 = vmatprep.subr.mxu0 %v444
    %743 = vmatpush1.msra.mxu0 %v443
    %744 = vmatprep.subr.mxu0 %v440
    %745 = vmatpush1.msra.mxu0 %v439
    %746 = vmatprep.subr.mxu0 %v436
    %747 = vmatpush1.msra.mxu0 %v435
    %748 = vmatprep.subr.mxu0 %v432
    %749 = vmatpush1.msra.mxu0 %v431
    %750 = vmatprep.subr.mxu0 %v428
    %751 = vmatpush1.msra.mxu0 %v427
    %752 = vmatprep.subr.mxu0 %v424
    %753 = vmatpush1.msra.mxu0 %v423
    %754 = vmatprep.subr.mxu0 %v420
    %755 = vmatpush1.msra.mxu0 %v419
    %756 = vmatprep.subr.mxu0 %v416
    %757 = vmatpush1.msra.mxu0 %v415
    %758 = vmatprep.subr.mxu0 0.0
    %759 = vmatpush2.msra.mxu0 0.0
    %760 = vmatprep.subr.mxu0 0.0
    %761 = vmatpush2.msra.mxu0 0.0
    %762 = vmatprep.subr.mxu0 0.0
    %763 = vmatpush2.msra.mxu0 0.0
    %764 = vmatprep.subr.mxu0 0.0
    %765 = vmatpush2.msra.mxu0 0.0
    %766 = vmatprep.subr.mxu0 0.0
    %767 = vmatpush2.msra.mxu0 0.0
    %768 = vmatprep.subr.mxu0 0.0
    %769 = vmatpush2.msra.mxu0 0.0
    %770 = vmatprep.subr.mxu0 0.0
    %771 = vmatpush2.msra.mxu0 0.0
    %772 = vmatprep.subr.mxu0 0.0
    %773 = vmatpush2.msra.mxu0 0.0
    %774 = vmatprep.subr.mxu0 0.0
    %775 = vmatpush2.msra.mxu0 0.0
    %776 = vmatprep.subr.mxu0 0.0
    %777 = vmatpush2.msra.mxu0 0.0
    %778 = vmatprep.subr.mxu0 0.0
    %779 = vmatpush2.msra.mxu0 0.0
    %780 = vmatprep.subr.mxu0 0.0
    %781 = vmatpush2.msra.mxu0 0.0
    %782 = vmatprep.subr.mxu0 0.0
    %783 = vmatpush2.msra.mxu0 0.0
    %784 = vmatprep.subr.mxu0 0.0
    %785 = vmatpush2.msra.mxu0 0.0
    %786 = vmatprep.subr.mxu0 0.0
    %787 = vmatpush2.msra.mxu0 0.0
    %788 = vmatprep.subr.mxu0 0.0
    %789 = vmatpush2.msra.mxu0 0.0
    %790 = vmatprep.mubr.f32.mxu0 0.0
    %791 = vmatmul.mubr.f32.gmra.mxu0 %v644
    %v792 = vpop.f32.mrf.mxu0
    %v793 = vadd.f32 0.0, %v792
    %v794 = vpop.f32.mrf.mxu0
    %v795 = vadd.f32 0.0, %v794
    %796 = vdwg.mxu0
    %v797 = vadd.f32 %v651, %v722
    %v798 = vadd.f32 %v652, %v724
    %v799 = vadd.f32 %v653, %v793
    %v800 = vadd.f32 %v654, %v795
    %v801 = vtanh.pop %v797
    %v802 = vtanh.pop %v798
    %v803 = vtanh.pop %v799
    %v804 = vtanh.pop %v800
    %v805 = vmul.f32 %v801, 0.5
    %v806 = vadd.f32 %v805, 0.5
    %v807 = vmul.f32 %v802, 0.5
    %v808 = vadd.f32 %v807, 0.5
    %v809 = vmul.f32 %v804, 0.5
    %v810 = vadd.f32 %v809, 0.5
    %v811 = vmul.f32 %v808, %v642
    %v812 = vmul.f32 %v806, %v803
    %v813 = vadd.f32 %v811, %v812
    %v814 = vtanh.pop %v813
    %v815 = vmul.f32 %v810, %v814
    %s816 = scalar_lea.vmem [#allocation3], 8
    %817 = vst [vmem:[%s816] sm:$0xff] %v815
    %s818 = scalar_lea.vmem [#allocation4], 48
    %819 = vst [vmem:[%s818] sm:$0xff] %v815
    %s820 = smul.u32 2, 4
    %s821 = smul.addr %s820, 8
    %s822 = scalar_lea.vmem [#allocation2], %s821
    %v823 = vld [vmem:[%s822] sm:$0xff]
    %v824 = vld [vmem:[%s822 + $0x8] sm:$0xff]
    %v825 = vld [vmem:[%s822 + $0x10] sm:$0xff]
    %v826 = vld [vmem:[%s822 + $0x18] sm:$0xff]
    %827 = vmatprep.subr.mxu0 %v474
    %828 = vmatpush1.msra.mxu0 %v473
    %829 = vmatprep.subr.mxu0 %v470
    %830 = vmatpush1.msra.mxu0 %v469
    %831 = vmatprep.subr.mxu0 %v466
    %832 = vmatpush1.msra.mxu0 %v465
    %833 = vmatprep.subr.mxu0 %v462
    %834 = vmatpush1.msra.mxu0 %v461
    %835 = vmatprep.subr.mxu0 %v458
    %836 = vmatpush1.msra.mxu0 %v457
    %837 = vmatprep.subr.mxu0 %v454
    %838 = vmatpush1.msra.mxu0 %v453
    %839 = vmatprep.subr.mxu0 %v450
    %840 = vmatpush1.msra.mxu0 %v449
    %841 = vmatprep.subr.mxu0 %v446
    %842 = vmatpush1.msra.mxu0 %v445
    %843 = vmatprep.subr.mxu0 %v442
    %844 = vmatpush1.msra.mxu0 %v441
    %845 = vmatprep.subr.mxu0 %v438
    %846 = vmatpush1.msra.mxu0 %v437
    %847 = vmatprep.subr.mxu0 %v434
    %848 = vmatpush1.msra.mxu0 %v433
    %849 = vmatprep.subr.mxu0 %v430
    %850 = vmatpush1.msra.mxu0 %v429
    %851 = vmatprep.subr.mxu0 %v426
    %852 = vmatpush1.msra.mxu0 %v425
    %853 = vmatprep.subr.mxu0 %v422
    %854 = vmatpush1.msra.mxu0 %v421
    %855 = vmatprep.subr.mxu0 %v418
    %856 = vmatpush1.msra.mxu0 %v417
    %857 = vmatprep.subr.mxu0 %v414
    %858 = vmatpush1.msra.mxu0 %v413
    %859 = vmatprep.subr.mxu0 0.0
    %860 = vmatpush2.msra.mxu0 0.0
    %861 = vmatprep.subr.mxu0 0.0
    %862 = vmatpush2.msra.mxu0 0.0
    %863 = vmatprep.subr.mxu0 0.0
    %864 = vmatpush2.msra.mxu0 0.0
    %865 = vmatprep.subr.mxu0 0.0
    %866 = vmatpush2.msra.mxu0 0.0
    %867 = vmatprep.subr.mxu0 0.0
    %868 = vmatpush2.msra.mxu0 0.0
    %869 = vmatprep.subr.mxu0 0.0
    %870 = vmatpush2.msra.mxu0 0.0
    %871 = vmatprep.subr.mxu0 0.0
    %872 = vmatpush2.msra.mxu0 0.0
    %873 = vmatprep.subr.mxu0 0.0
    %874 = vmatpush2.msra.mxu0 0.0
    %875 = vmatprep.subr.mxu0 0.0
    %876 = vmatpush2.msra.mxu0 0.0
    %877 = vmatprep.subr.mxu0 0.0
    %878 = vmatpush2.msra.mxu0 0.0
    %879 = vmatprep.subr.mxu0 0.0
    %880 = vmatpush2.msra.mxu0 0.0
    %881 = vmatprep.subr.mxu0 0.0
    %882 = vmatpush2.msra.mxu0 0.0
    %883 = vmatprep.subr.mxu0 0.0
    %884 = vmatpush2.msra.mxu0 0.0
    %885 = vmatprep.subr.mxu0 0.0
    %886 = vmatpush2.msra.mxu0 0.0
    %887 = vmatprep.subr.mxu0 0.0
    %888 = vmatpush2.msra.mxu0 0.0
    %889 = vmatprep.subr.mxu0 0.0
    %890 = vmatpush2.msra.mxu0 0.0
    %891 = vmatprep.mubr.f32.mxu0 0.0
    %892 = vmatmul.mubr.f32.gmra.mxu0 %v815
    %v893 = vpop.f32.mrf.mxu0
    %v894 = vadd.f32 0.0, %v893
    %v895 = vpop.f32.mrf.mxu0
    %v896 = vadd.f32 0.0, %v895
    %897 = vdwg.mxu0
    %898 = vmatprep.subr.mxu0 %v476
    %899 = vmatpush1.msra.mxu0 %v475
    %900 = vmatprep.subr.mxu0 %v472
    %901 = vmatpush1.msra.mxu0 %v471
    %902 = vmatprep.subr.mxu0 %v468
    %903 = vmatpush1.msra.mxu0 %v467
    %904 = vmatprep.subr.mxu0 %v464
    %905 = vmatpush1.msra.mxu0 %v463
    %906 = vmatprep.subr.mxu0 %v460
    %907 = vmatpush1.msra.mxu0 %v459
    %908 = vmatprep.subr.mxu0 %v456
    %909 = vmatpush1.msra.mxu0 %v455
    %910 = vmatprep.subr.mxu0 %v452
    %911 = vmatpush1.msra.mxu0 %v451
    %912 = vmatprep.subr.mxu0 %v448
    %913 = vmatpush1.msra.mxu0 %v447
    %914 = vmatprep.subr.mxu0 %v444
    %915 = vmatpush1.msra.mxu0 %v443
    %916 = vmatprep.subr.mxu0 %v440
    %917 = vmatpush1.msra.mxu0 %v439
    %918 = vmatprep.subr.mxu0 %v436
    %919 = vmatpush1.msra.mxu0 %v435
    %920 = vmatprep.subr.mxu0 %v432
    %921 = vmatpush1.msra.mxu0 %v431
    %922 = vmatprep.subr.mxu0 %v428
    %923 = vmatpush1.msra.mxu0 %v427
    %924 = vmatprep.subr.mxu0 %v424
    %925 = vmatpush1.msra.mxu0 %v423
    %926 = vmatprep.subr.mxu0 %v420
    %927 = vmatpush1.msra.mxu0 %v419
    %928 = vmatprep.subr.mxu0 %v416
    %929 = vmatpush1.msra.mxu0 %v415
    %930 = vmatprep.subr.mxu0 0.0
    %931 = vmatpush2.msra.mxu0 0.0
    %932 = vmatprep.subr.mxu0 0.0
    %933 = vmatpush2.msra.mxu0 0.0
    %934 = vmatprep.subr.mxu0 0.0
    %935 = vmatpush2.msra.mxu0 0.0
    %936 = vmatprep.subr.mxu0 0.0
    %937 = vmatpush2.msra.mxu0 0.0
    %938 = vmatprep.subr.mxu0 0.0
    %939 = vmatpush2.msra.mxu0 0.0
    %940 = vmatprep.subr.mxu0 0.0
    %941 = vmatpush2.msra.mxu0 0.0
    %942 = vmatprep.subr.mxu0 0.0
    %943 = vmatpush2.msra.mxu0 0.0
    %944 = vmatprep.subr.mxu0 0.0
    %945 = vmatpush2.msra.mxu0 0.0
    %946 = vmatprep.subr.mxu0 0.0
    %947 = vmatpush2.msra.mxu0 0.0
    %948 = vmatprep.subr.mxu0 0.0
    %949 = vmatpush2.msra.mxu0 0.0
    %950 = vmatprep.subr.mxu0 0.0
    %951 = vmatpush2.msra.mxu0 0.0
    %952 = vmatprep.subr.mxu0 0.0
    %953 = vmatpush2.msra.mxu0 0.0
    %954 = vmatprep.subr.mxu0 0.0
    %955 = vmatpush2.msra.mxu0 0.0
    %956 = vmatprep.subr.mxu0 0.0
    %957 = vmatpush2.msra.mxu0 0.0
    %958 = vmatprep.subr.mxu0 0.0
    %959 = vmatpush2.msra.mxu0 0.0
    %960 = vmatprep.subr.mxu0 0.0
    %961 = vmatpush2.msra.mxu0 0.0
    %962 = vmatprep.mubr.f32.mxu0 0.0
    %963 = vmatmul.mubr.f32.gmra.mxu0 %v815
    %v964 = vpop.f32.mrf.mxu0
    %v965 = vadd.f32 0.0, %v964
    %v966 = vpop.f32.mrf.mxu0
    %v967 = vadd.f32 0.0, %v966
    %968 = vdwg.mxu0
    %v969 = vadd.f32 %v823, %v894
    %v970 = vadd.f32 %v824, %v896
    %v971 = vadd.f32 %v825, %v965
    %v972 = vadd.f32 %v826, %v967
    %v973 = vtanh.pop %v969
    %v974 = vtanh.pop %v970
    %v975 = vtanh.pop %v971
    %v976 = vtanh.pop %v972
    %v977 = vmul.f32 %v973, 0.5
    %v978 = vadd.f32 %v977, 0.5
    %v979 = vmul.f32 %v974, 0.5
    %v980 = vadd.f32 %v979, 0.5
    %v981 = vmul.f32 %v976, 0.5
    %v982 = vadd.f32 %v981, 0.5
    %v983 = vmul.f32 %v980, %v813
    %v984 = vmul.f32 %v978, %v975
    %v985 = vadd.f32 %v983, %v984
    %v986 = vtanh.pop %v985
    %v987 = vmul.f32 %v982, %v986
    %s988 = scalar_lea.vmem [#allocation3], 16
    %989 = vst [vmem:[%s988] sm:$0xff] %v987
    %s990 = scalar_lea.vmem [#allocation4], 40
    %991 = vst [vmem:[%s990] sm:$0xff] %v987
    %s992 = smul.u32 3, 4
    %s993 = smul.addr %s992, 8
    %s994 = scalar_lea.vmem [#allocation2], %s993
    %v995 = vld [vmem:[%s994] sm:$0xff]
    %v996 = vld [vmem:[%s994 + $0x8] sm:$0xff]
    %v997 = vld [vmem:[%s994 + $0x10] sm:$0xff]
    %v998 = vld [vmem:[%s994 + $0x18] sm:$0xff]
    %999 = vmatprep.subr.mxu0 %v474
    %1000 = vmatpush1.msra.mxu0 %v473
    %1001 = vmatprep.subr.mxu0 %v470
    %1002 = vmatpush1.msra.mxu0 %v469
    %1003 = vmatprep.subr.mxu0 %v466
    %1004 = vmatpush1.msra.mxu0 %v465
    %1005 = vmatprep.subr.mxu0 %v462
    %1006 = vmatpush1.msra.mxu0 %v461
    %1007 = vmatprep.subr.mxu0 %v458
    %1008 = vmatpush1.msra.mxu0 %v457
    %1009 = vmatprep.subr.mxu0 %v454
    %1010 = vmatpush1.msra.mxu0 %v453
    %1011 = vmatprep.subr.mxu0 %v450
    %1012 = vmatpush1.msra.mxu0 %v449
    %1013 = vmatprep.subr.mxu0 %v446
    %1014 = vmatpush1.msra.mxu0 %v445
    %1015 = vmatprep.subr.mxu0 %v442
    %1016 = vmatpush1.msra.mxu0 %v441
    %1017 = vmatprep.subr.mxu0 %v438
    %1018 = vmatpush1.msra.mxu0 %v437
    %1019 = vmatprep.subr.mxu0 %v434
    %1020 = vmatpush1.msra.mxu0 %v433
    %1021 = vmatprep.subr.mxu0 %v430
    %1022 = vmatpush1.msra.mxu0 %v429
    %1023 = vmatprep.subr.mxu0 %v426
    %1024 = vmatpush1.msra.mxu0 %v425
    %1025 = vmatprep.subr.mxu0 %v422
    %1026 = vmatpush1.msra.mxu0 %v421
    %1027 = vmatprep.subr.mxu0 %v418
    %1028 = vmatpush1.msra.mxu0 %v417
    %1029 = vmatprep.subr.mxu0 %v414
    %1030 = vmatpush1.msra.mxu0 %v413
    %1031 = vmatprep.subr.mxu0 0.0
    %1032 = vmatpush2.msra.mxu0 0.0
    %1033 = vmatprep.subr.mxu0 0.0
    %1034 = vmatpush2.msra.mxu0 0.0
    %1035 = vmatprep.subr.mxu0 0.0
    %1036 = vmatpush2.msra.mxu0 0.0
    %1037 = vmatprep.subr.mxu0 0.0
    %1038 = vmatpush2.msra.mxu0 0.0
    %1039 = vmatprep.subr.mxu0 0.0
    %1040 = vmatpush2.msra.mxu0 0.0
    %1041 = vmatprep.subr.mxu0 0.0
    %1042 = vmatpush2.msra.mxu0 0.0
    %1043 = vmatprep.subr.mxu0 0.0
    %1044 = vmatpush2.msra.mxu0 0.0
    %1045 = vmatprep.subr.mxu0 0.0
    %1046 = vmatpush2.msra.mxu0 0.0
    %1047 = vmatprep.subr.mxu0 0.0
    %1048 = vmatpush2.msra.mxu0 0.0
    %1049 = vmatprep.subr.mxu0 0.0
    %1050 = vmatpush2.msra.mxu0 0.0
    %1051 = vmatprep.subr.mxu0 0.0
    %1052 = vmatpush2.msra.mxu0 0.0
    %1053 = vmatprep.subr.mxu0 0.0
    %1054 = vmatpush2.msra.mxu0 0.0
    %1055 = vmatprep.subr.mxu0 0.0
    %1056 = vmatpush2.msra.mxu0 0.0
    %1057 = vmatprep.subr.mxu0 0.0
    %1058 = vmatpush2.msra.mxu0 0.0
    %1059 = vmatprep.subr.mxu0 0.0
    %1060 = vmatpush2.msra.mxu0 0.0
    %1061 = vmatprep.subr.mxu0 0.0
    %1062 = vmatpush2.msra.mxu0 0.0
    %1063 = vmatprep.mubr.f32.mxu0 0.0
    %1064 = vmatmul.mubr.f32.gmra.mxu0 %v987
    %v1065 = vpop.f32.mrf.mxu0
    %v1066 = vadd.f32 0.0, %v1065
    %v1067 = vpop.f32.mrf.mxu0
    %v1068 = vadd.f32 0.0, %v1067
    %1069 = vdwg.mxu0
    %1070 = vmatprep.subr.mxu0 %v476
    %1071 = vmatpush1.msra.mxu0 %v475
    %1072 = vmatprep.subr.mxu0 %v472
    %1073 = vmatpush1.msra.mxu0 %v471
    %1074 = vmatprep.subr.mxu0 %v468
    %1075 = vmatpush1.msra.mxu0 %v467
    %1076 = vmatprep.subr.mxu0 %v464
    %1077 = vmatpush1.msra.mxu0 %v463
    %1078 = vmatprep.subr.mxu0 %v460
    %1079 = vmatpush1.msra.mxu0 %v459
    %1080 = vmatprep.subr.mxu0 %v456
    %1081 = vmatpush1.msra.mxu0 %v455
    %1082 = vmatprep.subr.mxu0 %v452
    %1083 = vmatpush1.msra.mxu0 %v451
    %1084 = vmatprep.subr.mxu0 %v448
    %1085 = vmatpush1.msra.mxu0 %v447
    %1086 = vmatprep.subr.mxu0 %v444
    %1087 = vmatpush1.msra.mxu0 %v443
    %1088 = vmatprep.subr.mxu0 %v440
    %1089 = vmatpush1.msra.mxu0 %v439
    %1090 = vmatprep.subr.mxu0 %v436
    %1091 = vmatpush1.msra.mxu0 %v435
    %1092 = vmatprep.subr.mxu0 %v432
    %1093 = vmatpush1.msra.mxu0 %v431
    %1094 = vmatprep.subr.mxu0 %v428
    %1095 = vmatpush1.msra.mxu0 %v427
    %1096 = vmatprep.subr.mxu0 %v424
    %1097 = vmatpush1.msra.mxu0 %v423
    %1098 = vmatprep.subr.mxu0 %v420
    %1099 = vmatpush1.msra.mxu0 %v419
    %1100 = vmatprep.subr.mxu0 %v416
    %1101 = vmatpush1.msra.mxu0 %v415
    %1102 = vmatprep.subr.mxu0 0.0
    %1103 = vmatpush2.msra.mxu0 0.0
    %1104 = vmatprep.subr.mxu0 0.0
    %1105 = vmatpush2.msra.mxu0 0.0
    %1106 = vmatprep.subr.mxu0 0.0
    %1107 = vmatpush2.msra.mxu0 0.0
    %1108 = vmatprep.subr.mxu0 0.0
    %1109 = vmatpush2.msra.mxu0 0.0
    %1110 = vmatprep.subr.mxu0 0.0
    %1111 = vmatpush2.msra.mxu0 0.0
    %1112 = vmatprep.subr.mxu0 0.0
    %1113 = vmatpush2.msra.mxu0 0.0
    %1114 = vmatprep.subr.mxu0 0.0
    %1115 = vmatpush2.msra.mxu0 0.0
    %1116 = vmatprep.subr.mxu0 0.0
    %1117 = vmatpush2.msra.mxu0 0.0
    %1118 = vmatprep.subr.mxu0 0.0
    %1119 = vmatpush2.msra.mxu0 0.0
    %1120 = vmatprep.subr.mxu0 0.0
    %1121 = vmatpush2.msra.mxu0 0.0
    %1122 = vmatprep.subr.mxu0 0.0
    %1123 = vmatpush2.msra.mxu0 0.0
    %1124 = vmatprep.subr.mxu0 0.0
    %1125 = vmatpush2.msra.mxu0 0.0
    %1126 = vmatprep.subr.mxu0 0.0
    %1127 = vmatpush2.msra.mxu0 0.0
    %1128 = vmatprep.subr.mxu0 0.0
    %1129 = vmatpush2.msra.mxu0 0.0
    %1130 = vmatprep.subr.mxu0 0.0
    %1131 = vmatpush2.msra.mxu0 0.0
    %1132 = vmatprep.subr.mxu0 0.0
    %1133 = vmatpush2.msra.mxu0 0.0
    %1134 = vmatprep.mubr.f32.mxu0 0.0
    %1135 = vmatmul.mubr.f32.gmra.mxu0 %v987
    %v1136 = vpop.f32.mrf.mxu0
    %v1137 = vadd.f32 0.0, %v1136
    %v1138 = vpop.f32.mrf.mxu0
    %v1139 = vadd.f32 0.0, %v1138
    %1140 = vdwg.mxu0
    %v1141 = vadd.f32 %v995, %v1066
    %v1142 = vadd.f32 %v996, %v1068
    %v1143 = vadd.f32 %v997, %v1137
    %v1144 = vadd.f32 %v998, %v1139
    %v1145 = vtanh.pop %v1141
    %v1146 = vtanh.pop %v1142
    %v1147 = vtanh.pop %v1143
    %v1148 = vtanh.pop %v1144
    %v1149 = vmul.f32 %v1145, 0.5
    %v1150 = vadd.f32 %v1149, 0.5
    %v1151 = vmul.f32 %v1146, 0.5
    %v1152 = vadd.f32 %v1151, 0.5
    %v1153 = vmul.f32 %v1148, 0.5
    %v1154 = vadd.f32 %v1153, 0.5
    %v1155 = vmul.f32 %v1152, %v985
    %v1156 = vmul.f32 %v1150, %v1147
    %v1157 = vadd.f32 %v1155, %v1156
    %v1158 = vtanh.pop %v1157
    %v1159 = vmul.f32 %v1154, %v1158
    %s1160 = scalar_lea.vmem [#allocation3], 24
    %1161 = vst [vmem:[%s1160] sm:$0xff] %v1159
    %s1162 = scalar_lea.vmem [#allocation4], 32
    %1163 = vst [vmem:[%s1162] sm:$0xff] %v1159
    %s1164 = smul.u32 4, 4
    %s1165 = smul.addr %s1164, 8
    %s1166 = scalar_lea.vmem [#allocation2], %s1165
    %v1167 = vld [vmem:[%s1166] sm:$0xff]
    %v1168 = vld [vmem:[%s1166 + $0x8] sm:$0xff]
    %v1169 = vld [vmem:[%s1166 + $0x10] sm:$0xff]
    %v1170 = vld [vmem:[%s1166 + $0x18] sm:$0xff]
    %1171 = vmatprep.subr.mxu0 %v474
    %1172 = vmatpush1.msra.mxu0 %v473
    %1173 = vmatprep.subr.mxu0 %v470
    %1174 = vmatpush1.msra.mxu0 %v469
    %1175 = vmatprep.subr.mxu0 %v466
    %1176 = vmatpush1.msra.mxu0 %v465
    %1177 = vmatprep.subr.mxu0 %v462
    %1178 = vmatpush1.msra.mxu0 %v461
    %1179 = vmatprep.subr.mxu0 %v458
    %1180 = vmatpush1.msra.mxu0 %v457
    %1181 = vmatprep.subr.mxu0 %v454
    %1182 = vmatpush1.msra.mxu0 %v453
    %1183 = vmatprep.subr.mxu0 %v450
    %1184 = vmatpush1.msra.mxu0 %v449
    %1185 = vmatprep.subr.mxu0 %v446
    %1186 = vmatpush1.msra.mxu0 %v445
    %1187 = vmatprep.subr.mxu0 %v442
    %1188 = vmatpush1.msra.mxu0 %v441
    %1189 = vmatprep.subr.mxu0 %v438
    %1190 = vmatpush1.msra.mxu0 %v437
    %1191 = vmatprep.subr.mxu0 %v434
    %1192 = vmatpush1.msra.mxu0 %v433
    %1193 = vmatprep.subr.mxu0 %v430
    %1194 = vmatpush1.msra.mxu0 %v429
    %1195 = vmatprep.subr.mxu0 %v426
    %1196 = vmatpush1.msra.mxu0 %v425
    %1197 = vmatprep.subr.mxu0 %v422
    %1198 = vmatpush1.msra.mxu0 %v421
    %1199 = vmatprep.subr.mxu0 %v418
    %1200 = vmatpush1.msra.mxu0 %v417
    %1201 = vmatprep.subr.mxu0 %v414
    %1202 = vmatpush1.msra.mxu0 %v413
    %1203 = vmatprep.subr.mxu0 0.0
    %1204 = vmatpush2.msra.mxu0 0.0
    %1205 = vmatprep.subr.mxu0 0.0
    %1206 = vmatpush2.msra.mxu0 0.0
    %1207 = vmatprep.subr.mxu0 0.0
    %1208 = vmatpush2.msra.mxu0 0.0
    %1209 = vmatprep.subr.mxu0 0.0
    %1210 = vmatpush2.msra.mxu0 0.0
    %1211 = vmatprep.subr.mxu0 0.0
    %1212 = vmatpush2.msra.mxu0 0.0
    %1213 = vmatprep.subr.mxu0 0.0
    %1214 = vmatpush2.msra.mxu0 0.0
    %1215 = vmatprep.subr.mxu0 0.0
    %1216 = vmatpush2.msra.mxu0 0.0
    %1217 = vmatprep.subr.mxu0 0.0
    %1218 = vmatpush2.msra.mxu0 0.0
    %1219 = vmatprep.subr.mxu0 0.0
    %1220 = vmatpush2.msra.mxu0 0.0
    %1221 = vmatprep.subr.mxu0 0.0
    %1222 = vmatpush2.msra.mxu0 0.0
    %1223 = vmatprep.subr.mxu0 0.0
    %1224 = vmatpush2.msra.mxu0 0.0
    %1225 = vmatprep.subr.mxu0 0.0
    %1226 = vmatpush2.msra.mxu0 0.0
    %1227 = vmatprep.subr.mxu0 0.0
    %1228 = vmatpush2.msra.mxu0 0.0
    %1229 = vmatprep.subr.mxu0 0.0
    %1230 = vmatpush2.msra.mxu0 0.0
    %1231 = vmatprep.subr.mxu0 0.0
    %1232 = vmatpush2.msra.mxu0 0.0
    %1233 = vmatprep.subr.mxu0 0.0
    %1234 = vmatpush2.msra.mxu0 0.0
    %1235 = vmatprep.mubr.f32.mxu0 0.0
    %1236 = vmatmul.mubr.f32.gmra.mxu0 %v1159
    %v1237 = vpop.f32.mrf.mxu0
    %v1238 = vadd.f32 0.0, %v1237
    %v1239 = vpop.f32.mrf.mxu0
    %v1240 = vadd.f32 0.0, %v1239
    %1241 = vdwg.mxu0
    %1242 = vmatprep.subr.mxu0 %v476
    %1243 = vmatpush1.msra.mxu0 %v475
    %1244 = vmatprep.subr.mxu0 %v472
    %1245 = vmatpush1.msra.mxu0 %v471
    %1246 = vmatprep.subr.mxu0 %v468
    %1247 = vmatpush1.msra.mxu0 %v467
    %1248 = vmatprep.subr.mxu0 %v464
    %1249 = vmatpush1.msra.mxu0 %v463
    %1250 = vmatprep.subr.mxu0 %v460
    %1251 = vmatpush1.msra.mxu0 %v459
    %1252 = vmatprep.subr.mxu0 %v456
    %1253 = vmatpush1.msra.mxu0 %v455
    %1254 = vmatprep.subr.mxu0 %v452
    %1255 = vmatpush1.msra.mxu0 %v451
    %1256 = vmatprep.subr.mxu0 %v448
    %1257 = vmatpush1.msra.mxu0 %v447
    %1258 = vmatprep.subr.mxu0 %v444
    %1259 = vmatpush1.msra.mxu0 %v443
    %1260 = vmatprep.subr.mxu0 %v440
    %1261 = vmatpush1.msra.mxu0 %v439
    %1262 = vmatprep.subr.mxu0 %v436
    %1263 = vmatpush1.msra.mxu0 %v435
    %1264 = vmatprep.subr.mxu0 %v432
    %1265 = vmatpush1.msra.mxu0 %v431
    %1266 = vmatprep.subr.mxu0 %v428
    %1267 = vmatpush1.msra.mxu0 %v427
    %1268 = vmatprep.subr.mxu0 %v424
    %1269 = vmatpush1.msra.mxu0 %v423
    %1270 = vmatprep.subr.mxu0 %v420
    %1271 = vmatpush1.msra.mxu0 %v419
    %1272 = vmatprep.subr.mxu0 %v416
    %1273 = vmatpush1.msra.mxu0 %v415
    %1274 = vmatprep.subr.mxu0 0.0
    %1275 = vmatpush2.msra.mxu0 0.0
    %1276 = vmatprep.subr.mxu0 0.0
    %1277 = vmatpush2.msra.mxu0 0.0
    %1278 = vmatprep.subr.mxu0 0.0
    %1279 = vmatpush2.msra.mxu0 0.0
    %1280 = vmatprep.subr.mxu0 0.0
    %1281 = vmatpush2.msra.mxu0 0.0
    %1282 = vmatprep.subr.mxu0 0.0
    %1283 = vmatpush2.msra.mxu0 0.0
    %1284 = vmatprep.subr.mxu0 0.0
    %1285 = vmatpush2.msra.mxu0 0.0
    %1286 = vmatprep.subr.mxu0 0.0
    %1287 = vmatpush2.msra.mxu0 0.0
    %1288 = vmatprep.subr.mxu0 0.0
    %1289 = vmatpush2.msra.mxu0 0.0
    %1290 = vmatprep.subr.mxu0 0.0
    %1291 = vmatpush2.msra.mxu0 0.0
    %1292 = vmatprep.subr.mxu0 0.0
    %1293 = vmatpush2.msra.mxu0 0.0
    %1294 = vmatprep.subr.mxu0 0.0
    %1295 = vmatpush2.msra.mxu0 0.0
    %1296 = vmatprep.subr.mxu0 0.0
    %1297 = vmatpush2.msra.mxu0 0.0
    %1298 = vmatprep.subr.mxu0 0.0
    %1299 = vmatpush2.msra.mxu0 0.0
    %1300 = vmatprep.subr.mxu0 0.0
    %1301 = vmatpush2.msra.mxu0 0.0
    %1302 = vmatprep.subr.mxu0 0.0
    %1303 = vmatpush2.msra.mxu0 0.0
    %1304 = vmatprep.subr.mxu0 0.0
    %1305 = vmatpush2.msra.mxu0 0.0
    %1306 = vmatprep.mubr.f32.mxu0 0.0
    %1307 = vmatmul.mubr.f32.gmra.mxu0 %v1159
    %v1308 = vpop.f32.mrf.mxu0
    %v1309 = vadd.f32 0.0, %v1308
    %v1310 = vpop.f32.mrf.mxu0
    %v1311 = vadd.f32 0.0, %v1310
    %1312 = vdwg.mxu0
    %v1313 = vadd.f32 %v1167, %v1238
    %v1314 = vadd.f32 %v1168, %v1240
    %v1315 = vadd.f32 %v1169, %v1309
    %v1316 = vadd.f32 %v1170, %v1311
    %v1317 = vtanh.pop %v1313
    %v1318 = vtanh.pop %v1314
    %v1319 = vtanh.pop %v1315
    %v1320 = vtanh.pop %v1316
    %v1321 = vmul.f32 %v1317, 0.5
    %v1322 = vadd.f32 %v1321, 0.5
    %v1323 = vmul.f32 %v1318, 0.5
    %v1324 = vadd.f32 %v1323, 0.5
    %v1325 = vmul.f32 %v1320, 0.5
    %v1326 = vadd.f32 %v1325, 0.5
    %v1327 = vmul.f32 %v1324, %v1157
    %v1328 = vmul.f32 %v1322, %v1319
    %v1329 = vadd.f32 %v1327, %v1328
    %v1330 = vtanh.pop %v1329
    %v1331 = vmul.f32 %v1326, %v1330
    %s1332 = scalar_lea.vmem [#allocation3], 32
    %1333 = vst [vmem:[%s1332] sm:$0xff] %v1331
    %s1334 = scalar_lea.vmem [#allocation4], 24
    %1335 = vst [vmem:[%s1334] sm:$0xff] %v1331
    %s1336 = smul.u32 5, 4
    %s1337 = smul.addr %s1336, 8
    %s1338 = scalar_lea.vmem [#allocation2], %s1337
    %v1339 = vld [vmem:[%s1338] sm:$0xff]
    %v1340 = vld [vmem:[%s1338 + $0x8] sm:$0xff]
    %v1341 = vld [vmem:[%s1338 + $0x10] sm:$0xff]
    %v1342 = vld [vmem:[%s1338 + $0x18] sm:$0xff]
    %1343 = vmatprep.subr.mxu0 %v474
    %1344 = vmatpush1.msra.mxu0 %v473
    %1345 = vmatprep.subr.mxu0 %v470
    %1346 = vmatpush1.msra.mxu0 %v469
    %1347 = vmatprep.subr.mxu0 %v466
    %1348 = vmatpush1.msra.mxu0 %v465
    %1349 = vmatprep.subr.mxu0 %v462
    %1350 = vmatpush1.msra.mxu0 %v461
    %1351 = vmatprep.subr.mxu0 %v458
    %1352 = vmatpush1.msra.mxu0 %v457
    %1353 = vmatprep.subr.mxu0 %v454
    %1354 = vmatpush1.msra.mxu0 %v453
    %1355 = vmatprep.subr.mxu0 %v450
    %1356 = vmatpush1.msra.mxu0 %v449
    %1357 = vmatprep.subr.mxu0 %v446
    %1358 = vmatpush1.msra.mxu0 %v445
    %1359 = vmatprep.subr.mxu0 %v442
    %1360 = vmatpush1.msra.mxu0 %v441
    %1361 = vmatprep.subr.mxu0 %v438
    %1362 = vmatpush1.msra.mxu0 %v437
    %1363 = vmatprep.subr.mxu0 %v434
    %1364 = vmatpush1.msra.mxu0 %v433
    %1365 = vmatprep.subr.mxu0 %v430
    %1366 = vmatpush1.msra.mxu0 %v429
    %1367 = vmatprep.subr.mxu0 %v426
    %1368 = vmatpush1.msra.mxu0 %v425
    %1369 = vmatprep.subr.mxu0 %v422
    %1370 = vmatpush1.msra.mxu0 %v421
    %1371 = vmatprep.subr.mxu0 %v418
    %1372 = vmatpush1.msra.mxu0 %v417
    %1373 = vmatprep.subr.mxu0 %v414
    %1374 = vmatpush1.msra.mxu0 %v413
    %1375 = vmatprep.subr.mxu0 0.0
    %1376 = vmatpush2.msra.mxu0 0.0
    %1377 = vmatprep.subr.mxu0 0.0
    %1378 = vmatpush2.msra.mxu0 0.0
    %1379 = vmatprep.subr.mxu0 0.0
    %1380 = vmatpush2.msra.mxu0 0.0
    %1381 = vmatprep.subr.mxu0 0.0
    %1382 = vmatpush2.msra.mxu0 0.0
    %1383 = vmatprep.subr.mxu0 0.0
    %1384 = vmatpush2.msra.mxu0 0.0
    %1385 = vmatprep.subr.mxu0 0.0
    %1386 = vmatpush2.msra.mxu0 0.0
    %1387 = vmatprep.subr.mxu0 0.0
    %1388 = vmatpush2.msra.mxu0 0.0
    %1389 = vmatprep.subr.mxu0 0.0
    %1390 = vmatpush2.msra.mxu0 0.0
    %1391 = vmatprep.subr.mxu0 0.0
    %1392 = vmatpush2.msra.mxu0 0.0
    %1393 = vmatprep.subr.mxu0 0.0
    %1394 = vmatpush2.msra.mxu0 0.0
    %1395 = vmatprep.subr.mxu0 0.0
    %1396 = vmatpush2.msra.mxu0 0.0
    %1397 = vmatprep.subr.mxu0 0.0
    %1398 = vmatpush2.msra.mxu0 0.0
    %1399 = vmatprep.subr.mxu0 0.0
    %1400 = vmatpush2.msra.mxu0 0.0
    %1401 = vmatprep.subr.mxu0 0.0
    %1402 = vmatpush2.msra.mxu0 0.0
    %1403 = vmatprep.subr.mxu0 0.0
    %1404 = vmatpush2.msra.mxu0 0.0
    %1405 = vmatprep.subr.mxu0 0.0
    %1406 = vmatpush2.msra.mxu0 0.0
    %1407 = vmatprep.mubr.f32.mxu0 0.0
    %1408 = vmatmul.mubr.f32.gmra.mxu0 %v1331
    %v1409 = vpop.f32.mrf.mxu0
    %v1410 = vadd.f32 0.0, %v1409
    %v1411 = vpop.f32.mrf.mxu0
    %v1412 = vadd.f32 0.0, %v1411
    %1413 = vdwg.mxu0
    %1414 = vmatprep.subr.mxu0 %v476
    %1415 = vmatpush1.msra.mxu0 %v475
    %1416 = vmatprep.subr.mxu0 %v472
    %1417 = vmatpush1.msra.mxu0 %v471
    %1418 = vmatprep.subr.mxu0 %v468
    %1419 = vmatpush1.msra.mxu0 %v467
    %1420 = vmatprep.subr.mxu0 %v464
    %1421 = vmatpush1.msra.mxu0 %v463
    %1422 = vmatprep.subr.mxu0 %v460
    %1423 = vmatpush1.msra.mxu0 %v459
    %1424 = vmatprep.subr.mxu0 %v456
    %1425 = vmatpush1.msra.mxu0 %v455
    %1426 = vmatprep.subr.mxu0 %v452
    %1427 = vmatpush1.msra.mxu0 %v451
    %1428 = vmatprep.subr.mxu0 %v448
    %1429 = vmatpush1.msra.mxu0 %v447
    %1430 = vmatprep.subr.mxu0 %v444
    %1431 = vmatpush1.msra.mxu0 %v443
    %1432 = vmatprep.subr.mxu0 %v440
    %1433 = vmatpush1.msra.mxu0 %v439
    %1434 = vmatprep.subr.mxu0 %v436
    %1435 = vmatpush1.msra.mxu0 %v435
    %1436 = vmatprep.subr.mxu0 %v432
    %1437 = vmatpush1.msra.mxu0 %v431
    %1438 = vmatprep.subr.mxu0 %v428
    %1439 = vmatpush1.msra.mxu0 %v427
    %1440 = vmatprep.subr.mxu0 %v424
    %1441 = vmatpush1.msra.mxu0 %v423
    %1442 = vmatprep.subr.mxu0 %v420
    %1443 = vmatpush1.msra.mxu0 %v419
    %1444 = vmatprep.subr.mxu0 %v416
    %1445 = vmatpush1.msra.mxu0 %v415
    %1446 = vmatprep.subr.mxu0 0.0
    %1447 = vmatpush2.msra.mxu0 0.0
    %1448 = vmatprep.subr.mxu0 0.0
    %1449 = vmatpush2.msra.mxu0 0.0
    %1450 = vmatprep.subr.mxu0 0.0
    %1451 = vmatpush2.msra.mxu0 0.0
    %1452 = vmatprep.subr.mxu0 0.0
    %1453 = vmatpush2.msra.mxu0 0.0
    %1454 = vmatprep.subr.mxu0 0.0
    %1455 = vmatpush2.msra.mxu0 0.0
    %1456 = vmatprep.subr.mxu0 0.0
    %1457 = vmatpush2.msra.mxu0 0.0
    %1458 = vmatprep.subr.mxu0 0.0
    %1459 = vmatpush2.msra.mxu0 0.0
    %1460 = vmatprep.subr.mxu0 0.0
    %1461 = vmatpush2.msra.mxu0 0.0
    %1462 = vmatprep.subr.mxu0 0.0
    %1463 = vmatpush2.msra.mxu0 0.0
    %1464 = vmatprep.subr.mxu0 0.0
    %1465 = vmatpush2.msra.mxu0 0.0
    %1466 = vmatprep.subr.mxu0 0.0
    %1467 = vmatpush2.msra.mxu0 0.0
    %1468 = vmatprep.subr.mxu0 0.0
    %1469 = vmatpush2.msra.mxu0 0.0
    %1470 = vmatprep.subr.mxu0 0.0
    %1471 = vmatpush2.msra.mxu0 0.0
    %1472 = vmatprep.subr.mxu0 0.0
    %1473 = vmatpush2.msra.mxu0 0.0
    %1474 = vmatprep.subr.mxu0 0.0
    %1475 = vmatpush2.msra.mxu0 0.0
    %1476 = vmatprep.subr.mxu0 0.0
    %1477 = vmatpush2.msra.mxu0 0.0
    %1478 = vmatprep.mubr.f32.mxu0 0.0
    %1479 = vmatmul.mubr.f32.gmra.mxu0 %v1331
    %v1480 = vpop.f32.mrf.mxu0
    %v1481 = vadd.f32 0.0, %v1480
    %v1482 = vpop.f32.mrf.mxu0
    %v1483 = vadd.f32 0.0, %v1482
    %1484 = vdwg.mxu0
    %v1485 = vadd.f32 %v1339, %v1410
    %v1486 = vadd.f32 %v1340, %v1412
    %v1487 = vadd.f32 %v1341, %v1481
    %v1488 = vadd.f32 %v1342, %v1483
    %v1489 = vtanh.pop %v1485
    %v1490 = vtanh.pop %v1486
    %v1491 = vtanh.pop %v1487
    %v1492 = vtanh.pop %v1488
    %v1493 = vmul.f32 %v1489, 0.5
    %v1494 = vadd.f32 %v1493, 0.5
    %v1495 = vmul.f32 %v1490, 0.5
    %v1496 = vadd.f32 %v1495, 0.5
    %v1497 = vmul.f32 %v1492, 0.5
    %v1498 = vadd.f32 %v1497, 0.5
    %v1499 = vmul.f32 %v1496, %v1329
    %v1500 = vmul.f32 %v1494, %v1491
    %v1501 = vadd.f32 %v1499, %v1500
    %v1502 = vtanh.pop %v1501
    %v1503 = vmul.f32 %v1498, %v1502
    %s1504 = scalar_lea.vmem [#allocation3], 40
    %1505 = vst [vmem:[%s1504] sm:$0xff] %v1503
    %s1506 = scalar_lea.vmem [#allocation4], 16
    %1507 = vst [vmem:[%s1506] sm:$0xff] %v1503
    %s1508 = smul.u32 6, 4
    %s1509 = smul.addr %s1508, 8
    %s1510 = scalar_lea.vmem [#allocation2], %s1509
    %v1511 = vld [vmem:[%s1510] sm:$0xff]
    %v1512 = vld [vmem:[%s1510 + $0x8] sm:$0xff]
    %v1513 = vld [vmem:[%s1510 + $0x10] sm:$0xff]
    %v1514 = vld [vmem:[%s1510 + $0x18] sm:$0xff]
    %1515 = vmatprep.subr.mxu0 %v474
    %1516 = vmatpush1.msra.mxu0 %v473
    %1517 = vmatprep.subr.mxu0 %v470
    %1518 = vmatpush1.msra.mxu0 %v469
    %1519 = vmatprep.subr.mxu0 %v466
    %1520 = vmatpush1.msra.mxu0 %v465
    %1521 = vmatprep.subr.mxu0 %v462
    %1522 = vmatpush1.msra.mxu0 %v461
    %1523 = vmatprep.subr.mxu0 %v458
    %1524 = vmatpush1.msra.mxu0 %v457
    %1525 = vmatprep.subr.mxu0 %v454
    %1526 = vmatpush1.msra.mxu0 %v453
    %1527 = vmatprep.subr.mxu0 %v450
    %1528 = vmatpush1.msra.mxu0 %v449
    %1529 = vmatprep.subr.mxu0 %v446
    %1530 = vmatpush1.msra.mxu0 %v445
    %1531 = vmatprep.subr.mxu0 %v442
    %1532 = vmatpush1.msra.mxu0 %v441
    %1533 = vmatprep.subr.mxu0 %v438
    %1534 = vmatpush1.msra.mxu0 %v437
    %1535 = vmatprep.subr.mxu0 %v434
    %1536 = vmatpush1.msra.mxu0 %v433
    %1537 = vmatprep.subr.mxu0 %v430
    %1538 = vmatpush1.msra.mxu0 %v429
    %1539 = vmatprep.subr.mxu0 %v426
    %1540 = vmatpush1.msra.mxu0 %v425
    %1541 = vmatprep.subr.mxu0 %v422
    %1542 = vmatpush1.msra.mxu0 %v421
    %1543 = vmatprep.subr.mxu0 %v418
    %1544 = vmatpush1.msra.mxu0 %v417
    %1545 = vmatprep.subr.mxu0 %v414
    %1546 = vmatpush1.msra.mxu0 %v413
    %1547 = vmatprep.subr.mxu0 0.0
    %1548 = vmatpush2.msra.mxu0 0.0
    %1549 = vmatprep.subr.mxu0 0.0
    %1550 = vmatpush2.msra.mxu0 0.0
    %1551 = vmatprep.subr.mxu0 0.0
    %1552 = vmatpush2.msra.mxu0 0.0
    %1553 = vmatprep.subr.mxu0 0.0
    %1554 = vmatpush2.msra.mxu0 0.0
    %1555 = vmatprep.subr.mxu0 0.0
    %1556 = vmatpush2.msra.mxu0 0.0
    %1557 = vmatprep.subr.mxu0 0.0
    %1558 = vmatpush2.msra.mxu0 0.0
    %1559 = vmatprep.subr.mxu0 0.0
    %1560 = vmatpush2.msra.mxu0 0.0
    %1561 = vmatprep.subr.mxu0 0.0
    %1562 = vmatpush2.msra.mxu0 0.0
    %1563 = vmatprep.subr.mxu0 0.0
    %1564 = vmatpush2.msra.mxu0 0.0
    %1565 = vmatprep.subr.mxu0 0.0
    %1566 = vmatpush2.msra.mxu0 0.0
    %1567 = vmatprep.subr.mxu0 0.0
    %1568 = vmatpush2.msra.mxu0 0.0
    %1569 = vmatprep.subr.mxu0 0.0
    %1570 = vmatpush2.msra.mxu0 0.0
    %1571 = vmatprep.subr.mxu0 0.0
    %1572 = vmatpush2.msra.mxu0 0.0
    %1573 = vmatprep.subr.mxu0 0.0
    %1574 = vmatpush2.msra.mxu0 0.0
    %1575 = vmatprep.subr.mxu0 0.0
    %1576 = vmatpush2.msra.mxu0 0.0
    %1577 = vmatprep.subr.mxu0 0.0
    %1578 = vmatpush2.msra.mxu0 0.0
    %1579 = vmatprep.mubr.f32.mxu0 0.0
    %1580 = vmatmul.mubr.f32.gmra.mxu0 %v1503
    %v1581 = vpop.f32.mrf.mxu0
    %v1582 = vadd.f32 0.0, %v1581
    %v1583 = vpop.f32.mrf.mxu0
    %v1584 = vadd.f32 0.0, %v1583
    %1585 = vdwg.mxu0
    %1586 = vmatprep.subr.mxu0 %v476
    %1587 = vmatpush1.msra.mxu0 %v475
    %1588 = vmatprep.subr.mxu0 %v472
    %1589 = vmatpush1.msra.mxu0 %v471
    %1590 = vmatprep.subr.mxu0 %v468
    %1591 = vmatpush1.msra.mxu0 %v467
    %1592 = vmatprep.subr.mxu0 %v464
    %1593 = vmatpush1.msra.mxu0 %v463
    %1594 = vmatprep.subr.mxu0 %v460
    %1595 = vmatpush1.msra.mxu0 %v459
    %1596 = vmatprep.subr.mxu0 %v456
    %1597 = vmatpush1.msra.mxu0 %v455
    %1598 = vmatprep.subr.mxu0 %v452
    %1599 = vmatpush1.msra.mxu0 %v451
    %1600 = vmatprep.subr.mxu0 %v448
    %1601 = vmatpush1.msra.mxu0 %v447
    %1602 = vmatprep.subr.mxu0 %v444
    %1603 = vmatpush1.msra.mxu0 %v443
    %1604 = vmatprep.subr.mxu0 %v440
    %1605 = vmatpush1.msra.mxu0 %v439
    %1606 = vmatprep.subr.mxu0 %v436
    %1607 = vmatpush1.msra.mxu0 %v435
    %1608 = vmatprep.subr.mxu0 %v432
    %1609 = vmatpush1.msra.mxu0 %v431
    %1610 = vmatprep.subr.mxu0 %v428
    %1611 = vmatpush1.msra.mxu0 %v427
    %1612 = vmatprep.subr.mxu0 %v424
    %1613 = vmatpush1.msra.mxu0 %v423
    %1614 = vmatprep.subr.mxu0 %v420
    %1615 = vmatpush1.msra.mxu0 %v419
    %1616 = vmatprep.subr.mxu0 %v416
    %1617 = vmatpush1.msra.mxu0 %v415
    %1618 = vmatprep.subr.mxu0 0.0
    %1619 = vmatpush2.msra.mxu0 0.0
    %1620 = vmatprep.subr.mxu0 0.0
    %1621 = vmatpush2.msra.mxu0 0.0
    %1622 = vmatprep.subr.mxu0 0.0
    %1623 = vmatpush2.msra.mxu0 0.0
    %1624 = vmatprep.subr.mxu0 0.0
    %1625 = vmatpush2.msra.mxu0 0.0
    %1626 = vmatprep.subr.mxu0 0.0
    %1627 = vmatpush2.msra.mxu0 0.0
    %1628 = vmatprep.subr.mxu0 0.0
    %1629 = vmatpush2.msra.mxu0 0.0
    %1630 = vmatprep.subr.mxu0 0.0
    %1631 = vmatpush2.msra.mxu0 0.0
    %1632 = vmatprep.subr.mxu0 0.0
    %1633 = vmatpush2.msra.mxu0 0.0
    %1634 = vmatprep.subr.mxu0 0.0
    %1635 = vmatpush2.msra.mxu0 0.0
    %1636 = vmatprep.subr.mxu0 0.0
    %1637 = vmatpush2.msra.mxu0 0.0
    %1638 = vmatprep.subr.mxu0 0.0
    %1639 = vmatpush2.msra.mxu0 0.0
    %1640 = vmatprep.subr.mxu0 0.0
    %1641 = vmatpush2.msra.mxu0 0.0
    %1642 = vmatprep.subr.mxu0 0.0
    %1643 = vmatpush2.msra.mxu0 0.0
    %1644 = vmatprep.subr.mxu0 0.0
    %1645 = vmatpush2.msra.mxu0 0.0
    %1646 = vmatprep.subr.mxu0 0.0
    %1647 = vmatpush2.msra.mxu0 0.0
    %1648 = vmatprep.subr.mxu0 0.0
    %1649 = vmatpush2.msra.mxu0 0.0
    %1650 = vmatprep.mubr.f32.mxu0 0.0
    %1651 = vmatmul.mubr.f32.gmra.mxu0 %v1503
    %v1652 = vpop.f32.mrf.mxu0
    %v1653 = vadd.f32 0.0, %v1652
    %v1654 = vpop.f32.mrf.mxu0
    %v1655 = vadd.f32 0.0, %v1654
    %1656 = vdwg.mxu0
    %v1657 = vadd.f32 %v1511, %v1582
    %v1658 = vadd.f32 %v1512, %v1584
    %v1659 = vadd.f32 %v1513, %v1653
    %v1660 = vadd.f32 %v1514, %v1655
    %v1661 = vtanh.pop %v1657
    %v1662 = vtanh.pop %v1658
    %v1663 = vtanh.pop %v1659
    %v1664 = vtanh.pop %v1660
    %v1665 = vmul.f32 %v1661, 0.5
    %v1666 = vadd.f32 %v1665, 0.5
    %v1667 = vmul.f32 %v1662, 0.5
    %v1668 = vadd.f32 %v1667, 0.5
    %v1669 = vmul.f32 %v1664, 0.5
    %v1670 = vadd.f32 %v1669, 0.5
    %v1671 = vmul.f32 %v1668, %v1501
    %v1672 = vmul.f32 %v1666, %v1663
    %v1673 = vadd.f32 %v1671, %v1672
    %v1674 = vtanh.pop %v1673
    %v1675 = vmul.f32 %v1670, %v1674
    %s1676 = scalar_lea.vmem [#allocation3], 48
    %1677 = vst [vmem:[%s1676] sm:$0xff] %v1675
    %s1678 = scalar_lea.vmem [#allocation4], 8
    %1679 = vst [vmem:[%s1678] sm:$0xff] %v1675
    %s1680 = smul.u32 7, 4
    %s1681 = smul.addr %s1680, 8
    %s1682 = scalar_lea.vmem [#allocation2], %s1681
    %v1683 = vld [vmem:[%s1682] sm:$0xff]
    %v1684 = vld [vmem:[%s1682 + $0x8] sm:$0xff]
    %v1685 = vld [vmem:[%s1682 + $0x10] sm:$0xff]
    %v1686 = vld [vmem:[%s1682 + $0x18] sm:$0xff]
    %1687 = vmatprep.subr.mxu0 %v474
    %1688 = vmatpush1.msra.mxu0 %v473
    %1689 = vmatprep.subr.mxu0 %v470
    %1690 = vmatpush1.msra.mxu0 %v469
    %1691 = vmatprep.subr.mxu0 %v466
    %1692 = vmatpush1.msra.mxu0 %v465
    %1693 = vmatprep.subr.mxu0 %v462
    %1694 = vmatpush1.msra.mxu0 %v461
    %1695 = vmatprep.subr.mxu0 %v458
    %1696 = vmatpush1.msra.mxu0 %v457
    %1697 = vmatprep.subr.mxu0 %v454
    %1698 = vmatpush1.msra.mxu0 %v453
    %1699 = vmatprep.subr.mxu0 %v450
    %1700 = vmatpush1.msra.mxu0 %v449
    %1701 = vmatprep.subr.mxu0 %v446
    %1702 = vmatpush1.msra.mxu0 %v445
    %1703 = vmatprep.subr.mxu0 %v442
    %1704 = vmatpush1.msra.mxu0 %v441
    %1705 = vmatprep.subr.mxu0 %v438
    %1706 = vmatpush1.msra.mxu0 %v437
    %1707 = vmatprep.subr.mxu0 %v434
    %1708 = vmatpush1.msra.mxu0 %v433
    %1709 = vmatprep.subr.mxu0 %v430
    %1710 = vmatpush1.msra.mxu0 %v429
    %1711 = vmatprep.subr.mxu0 %v426
    %1712 = vmatpush1.msra.mxu0 %v425
    %1713 = vmatprep.subr.mxu0 %v422
    %1714 = vmatpush1.msra.mxu0 %v421
    %1715 = vmatprep.subr.mxu0 %v418
    %1716 = vmatpush1.msra.mxu0 %v417
    %1717 = vmatprep.subr.mxu0 %v414
    %1718 = vmatpush1.msra.mxu0 %v413
    %1719 = vmatprep.subr.mxu0 0.0
    %1720 = vmatpush2.msra.mxu0 0.0
    %1721 = vmatprep.subr.mxu0 0.0
    %1722 = vmatpush2.msra.mxu0 0.0
    %1723 = vmatprep.subr.mxu0 0.0
    %1724 = vmatpush2.msra.mxu0 0.0
    %1725 = vmatprep.subr.mxu0 0.0
    %1726 = vmatpush2.msra.mxu0 0.0
    %1727 = vmatprep.subr.mxu0 0.0
    %1728 = vmatpush2.msra.mxu0 0.0
    %1729 = vmatprep.subr.mxu0 0.0
    %1730 = vmatpush2.msra.mxu0 0.0
    %1731 = vmatprep.subr.mxu0 0.0
    %1732 = vmatpush2.msra.mxu0 0.0
    %1733 = vmatprep.subr.mxu0 0.0
    %1734 = vmatpush2.msra.mxu0 0.0
    %1735 = vmatprep.subr.mxu0 0.0
    %1736 = vmatpush2.msra.mxu0 0.0
    %1737 = vmatprep.subr.mxu0 0.0
    %1738 = vmatpush2.msra.mxu0 0.0
    %1739 = vmatprep.subr.mxu0 0.0
    %1740 = vmatpush2.msra.mxu0 0.0
    %1741 = vmatprep.subr.mxu0 0.0
    %1742 = vmatpush2.msra.mxu0 0.0
    %1743 = vmatprep.subr.mxu0 0.0
    %1744 = vmatpush2.msra.mxu0 0.0
    %1745 = vmatprep.subr.mxu0 0.0
    %1746 = vmatpush2.msra.mxu0 0.0
    %1747 = vmatprep.subr.mxu0 0.0
    %1748 = vmatpush2.msra.mxu0 0.0
    %1749 = vmatprep.subr.mxu0 0.0
    %1750 = vmatpush2.msra.mxu0 0.0
    %1751 = vmatprep.mubr.f32.mxu0 0.0
    %1752 = vmatmul.mubr.f32.gmra.mxu0 %v1675
    %v1753 = vpop.f32.mrf.mxu0
    %v1754 = vadd.f32 0.0, %v1753
    %v1755 = vpop.f32.mrf.mxu0
    %v1756 = vadd.f32 0.0, %v1755
    %1757 = vdwg.mxu0
    %1758 = vmatprep.subr.mxu0 %v476
    %1759 = vmatpush1.msra.mxu0 %v475
    %1760 = vmatprep.subr.mxu0 %v472
    %1761 = vmatpush1.msra.mxu0 %v471
    %1762 = vmatprep.subr.mxu0 %v468
    %1763 = vmatpush1.msra.mxu0 %v467
    %1764 = vmatprep.subr.mxu0 %v464
    %1765 = vmatpush1.msra.mxu0 %v463
    %1766 = vmatprep.subr.mxu0 %v460
    %1767 = vmatpush1.msra.mxu0 %v459
    %1768 = vmatprep.subr.mxu0 %v456
    %1769 = vmatpush1.msra.mxu0 %v455
    %1770 = vmatprep.subr.mxu0 %v452
    %1771 = vmatpush1.msra.mxu0 %v451
    %1772 = vmatprep.subr.mxu0 %v448
    %1773 = vmatpush1.msra.mxu0 %v447
    %1774 = vmatprep.subr.mxu0 %v444
    %1775 = vmatpush1.msra.mxu0 %v443
    %1776 = vmatprep.subr.mxu0 %v440
    %1777 = vmatpush1.msra.mxu0 %v439
    %1778 = vmatprep.subr.mxu0 %v436
    %1779 = vmatpush1.msra.mxu0 %v435
    %1780 = vmatprep.subr.mxu0 %v432
    %1781 = vmatpush1.msra.mxu0 %v431
    %1782 = vmatprep.subr.mxu0 %v428
    %1783 = vmatpush1.msra.mxu0 %v427
    %1784 = vmatprep.subr.mxu0 %v424
    %1785 = vmatpush1.msra.mxu0 %v423
    %1786 = vmatprep.subr.mxu0 %v420
    %1787 = vmatpush1.msra.mxu0 %v419
    %1788 = vmatprep.subr.mxu0 %v416
    %1789 = vmatpush1.msra.mxu0 %v415
    %1790 = vmatprep.subr.mxu0 0.0
    %1791 = vmatpush2.msra.mxu0 0.0
    %1792 = vmatprep.subr.mxu0 0.0
    %1793 = vmatpush2.msra.mxu0 0.0
    %1794 = vmatprep.subr.mxu0 0.0
    %1795 = vmatpush2.msra.mxu0 0.0
    %1796 = vmatprep.subr.mxu0 0.0
    %1797 = vmatpush2.msra.mxu0 0.0
    %1798 = vmatprep.subr.mxu0 0.0
    %1799 = vmatpush2.msra.mxu0 0.0
    %1800 = vmatprep.subr.mxu0 0.0
    %1801 = vmatpush2.msra.mxu0 0.0
    %1802 = vmatprep.subr.mxu0 0.0
    %1803 = vmatpush2.msra.mxu0 0.0
    %1804 = vmatprep.subr.mxu0 0.0
    %1805 = vmatpush2.msra.mxu0 0.0
    %1806 = vmatprep.subr.mxu0 0.0
    %1807 = vmatpush2.msra.mxu0 0.0
    %1808 = vmatprep.subr.mxu0 0.0
    %1809 = vmatpush2.msra.mxu0 0.0
    %1810 = vmatprep.subr.mxu0 0.0
    %1811 = vmatpush2.msra.mxu0 0.0
    %1812 = vmatprep.subr.mxu0 0.0
    %1813 = vmatpush2.msra.mxu0 0.0
    %1814 = vmatprep.subr.mxu0 0.0
    %1815 = vmatpush2.msra.mxu0 0.0
    %1816 = vmatprep.subr.mxu0 0.0
    %1817 = vmatpush2.msra.mxu0 0.0
    %1818 = vmatprep.subr.mxu0 0.0
    %1819 = vmatpush2.msra.mxu0 0.0
    %1820 = vmatprep.subr.mxu0 0.0
    %1821 = vmatpush2.msra.mxu0 0.0
    %1822 = vmatprep.mubr.f32.mxu0 0.0
    %1823 = vmatmul.mubr.f32.gmra.mxu0 %v1675
    %v1824 = vpop.f32.mrf.mxu0
    %v1825 = vadd.f32 0.0, %v1824
    %v1826 = vpop.f32.mrf.mxu0
    %v1827 = vadd.f32 0.0, %v1826
    %1828 = vdwg.mxu0
    %v1829 = vadd.f32 %v1683, %v1754
    %v1830 = vadd.f32 %v1684, %v1756
    %v1831 = vadd.f32 %v1685, %v1825
    %v1832 = vadd.f32 %v1686, %v1827
    %v1833 = vtanh.pop %v1829
    %v1834 = vtanh.pop %v1830
    %v1835 = vtanh.pop %v1831
    %v1836 = vtanh.pop %v1832
    %v1837 = vmul.f32 %v1833, 0.5
    %v1838 = vadd.f32 %v1837, 0.5
    %v1839 = vmul.f32 %v1834, 0.5
    %v1840 = vadd.f32 %v1839, 0.5
    %v1841 = vmul.f32 %v1836, 0.5
    %v1842 = vadd.f32 %v1841, 0.5
    %v1843 = vmul.f32 %v1840, %v1673
    %v1844 = vmul.f32 %v1838, %v1835
    %v1845 = vadd.f32 %v1843, %v1844
    %v1846 = vtanh.pop %v1845
    %v1847 = vmul.f32 %v1842, %v1846
    %s1848 = scalar_lea.vmem [#allocation3], 56
    %1849 = vst [vmem:[%s1848] sm:$0xff] %v1847
    %1850 = vst [vmem:[#allocation4] sm:$0xff] %v1847
    %v1851 = vld [vmem:[#allocation3] sm:$0xff]
    %v1852 = vld [vmem:[#allocation3 + $0x8] sm:$0xff]
    %v1853 = vld [vmem:[#allocation3 + $0x10] sm:$0xff]
    %v1854 = vld [vmem:[#allocation3 + $0x18] sm:$0xff]
    %v1855 = vld [vmem:[#allocation3 + $0x20] sm:$0xff]
    %v1856 = vld [vmem:[#allocation3 + $0x28] sm:$0xff]
    %v1857 = vld [vmem:[#allocation3 + $0x30] sm:$0xff]
    %v1858 = vld [vmem:[#allocation3 + $0x38] sm:$0xff]
    %v1859 = vld [vmem:[#allocation8] sm:$0xff]
    %v1860 = vld [vmem:[#allocation8 + $0x8] sm:$0xff]
    %v1861 = vld [vmem:[#allocation8 + $0x10] sm:$0xff]
    %v1862 = vld [vmem:[#allocation8 + $0x18] sm:$0xff]
    %v1863 = vld [vmem:[#allocation8 + $0x20] sm:$0xff]
    %v1864 = vld [vmem:[#allocation8 + $0x28] sm:$0xff]
    %v1865 = vld [vmem:[#allocation8 + $0x30] sm:$0xff]
    %v1866 = vld [vmem:[#allocation8 + $0x38] sm:$0xff]
    %v1867 = vld [vmem:[#allocation8 + $0x40] sm:$0xff]
    %v1868 = vld [vmem:[#allocation8 + $0x48] sm:$0xff]
    %v1869 = vld [vmem:[#allocation8 + $0x50] sm:$0xff]
    %v1870 = vld [vmem:[#allocation8 + $0x58] sm:$0xff]
    %v1871 = vld [vmem:[#allocation8 + $0x60] sm:$0xff]
    %v1872 = vld [vmem:[#allocation8 + $0x68] sm:$0xff]
    %v1873 = vld [vmem:[#allocation8 + $0x70] sm:$0xff]
    %v1874 = vld [vmem:[#allocation8 + $0x78] sm:$0xff]
    %v1875 = vld [vmem:[#allocation8 + $0x80] sm:$0xff]
    %v1876 = vld [vmem:[#allocation8 + $0x88] sm:$0xff]
    %v1877 = vld [vmem:[#allocation8 + $0x90] sm:$0xff]
    %v1878 = vld [vmem:[#allocation8 + $0x98] sm:$0xff]
    %v1879 = vld [vmem:[#allocation8 + $0xa0] sm:$0xff]
    %v1880 = vld [vmem:[#allocation8 + $0xa8] sm:$0xff]
    %v1881 = vld [vmem:[#allocation8 + $0xb0] sm:$0xff]
    %v1882 = vld [vmem:[#allocation8 + $0xb8] sm:$0xff]
    %v1883 = vld [vmem:[#allocation8 + $0xc0] sm:$0xff]
    %v1884 = vld [vmem:[#allocation8 + $0xc8] sm:$0xff]
    %v1885 = vld [vmem:[#allocation8 + $0xd0] sm:$0xff]
    %v1886 = vld [vmem:[#allocation8 + $0xd8] sm:$0xff]
    %v1887 = vld [vmem:[#allocation8 + $0xe0] sm:$0xff]
    %v1888 = vld [vmem:[#allocation8 + $0xe8] sm:$0xff]
    %v1889 = vld [vmem:[#allocation8 + $0xf0] sm:$0xff]
    %v1890 = vld [vmem:[#allocation8 + $0xf8] sm:$0xff]
    %v1891 = vld [vmem:[#allocation8 + $0x100] sm:$0xff]
    %v1892 = vld [vmem:[#allocation8 + $0x108] sm:$0xff]
    %v1893 = vld [vmem:[#allocation8 + $0x110] sm:$0xff]
    %v1894 = vld [vmem:[#allocation8 + $0x118] sm:$0xff]
    %v1895 = vld [vmem:[#allocation8 + $0x120] sm:$0xff]
    %v1896 = vld [vmem:[#allocation8 + $0x128] sm:$0xff]
    %v1897 = vld [vmem:[#allocation8 + $0x130] sm:$0xff]
    %v1898 = vld [vmem:[#allocation8 + $0x138] sm:$0xff]
    %v1899 = vld [vmem:[#allocation8 + $0x140] sm:$0xff]
    %v1900 = vld [vmem:[#allocation8 + $0x148] sm:$0xff]
    %v1901 = vld [vmem:[#allocation8 + $0x150] sm:$0xff]
    %v1902 = vld [vmem:[#allocation8 + $0x158] sm:$0xff]
    %v1903 = vld [vmem:[#allocation8 + $0x160] sm:$0xff]
    %v1904 = vld [vmem:[#allocation8 + $0x168] sm:$0xff]
    %v1905 = vld [vmem:[#allocation8 + $0x170] sm:$0xff]
    %v1906 = vld [vmem:[#allocation8 + $0x178] sm:$0xff]
    %v1907 = vld [vmem:[#allocation8 + $0x180] sm:$0xff]
    %v1908 = vld [vmem:[#allocation8 + $0x188] sm:$0xff]
    %v1909 = vld [vmem:[#allocation8 + $0x190] sm:$0xff]
    %v1910 = vld [vmem:[#allocation8 + $0x198] sm:$0xff]
    %v1911 = vld [vmem:[#allocation8 + $0x1a0] sm:$0xff]
    %v1912 = vld [vmem:[#allocation8 + $0x1a8] sm:$0xff]
    %v1913 = vld [vmem:[#allocation8 + $0x1b0] sm:$0xff]
    %v1914 = vld [vmem:[#allocation8 + $0x1b8] sm:$0xff]
    %v1915 = vld [vmem:[#allocation8 + $0x1c0] sm:$0xff]
    %v1916 = vld [vmem:[#allocation8 + $0x1c8] sm:$0xff]
    %v1917 = vld [vmem:[#allocation8 + $0x1d0] sm:$0xff]
    %v1918 = vld [vmem:[#allocation8 + $0x1d8] sm:$0xff]
    %v1919 = vld [vmem:[#allocation8 + $0x1e0] sm:$0xff]
    %v1920 = vld [vmem:[#allocation8 + $0x1e8] sm:$0xff]
    %v1921 = vld [vmem:[#allocation8 + $0x1f0] sm:$0xff]
    %v1922 = vld [vmem:[#allocation8 + $0x1f8] sm:$0xff]
    %v1923 = vld [vmem:[#allocation4] sm:$0xff]
    %v1924 = vld [vmem:[#allocation4 + $0x8] sm:$0xff]
    %v1925 = vld [vmem:[#allocation4 + $0x10] sm:$0xff]
    %v1926 = vld [vmem:[#allocation4 + $0x18] sm:$0xff]
    %v1927 = vld [vmem:[#allocation4 + $0x20] sm:$0xff]
    %v1928 = vld [vmem:[#allocation4 + $0x28] sm:$0xff]
    %v1929 = vld [vmem:[#allocation4 + $0x30] sm:$0xff]
    %v1930 = vld [vmem:[#allocation4 + $0x38] sm:$0xff]
    %v1931 = vld [vmem:[#allocation10] sm:$0xff]
    %v1932 = vld [vmem:[#allocation10 + $0x8] sm:$0xff]
    %v1933 = vld [vmem:[#allocation10 + $0x10] sm:$0xff]
    %v1934 = vld [vmem:[#allocation10 + $0x18] sm:$0xff]
    %v1935 = vld [vmem:[#allocation10 + $0x20] sm:$0xff]
    %v1936 = vld [vmem:[#allocation10 + $0x28] sm:$0xff]
    %v1937 = vld [vmem:[#allocation10 + $0x30] sm:$0xff]
    %v1938 = vld [vmem:[#allocation10 + $0x38] sm:$0xff]
    %v1939 = vld [vmem:[#allocation10 + $0x40] sm:$0xff]
    %v1940 = vld [vmem:[#allocation10 + $0x48] sm:$0xff]
    %v1941 = vld [vmem:[#allocation10 + $0x50] sm:$0xff]
    %v1942 = vld [vmem:[#allocation10 + $0x58] sm:$0xff]
    %v1943 = vld [vmem:[#allocation10 + $0x60] sm:$0xff]
    %v1944 = vld [vmem:[#allocation10 + $0x68] sm:$0xff]
    %v1945 = vld [vmem:[#allocation10 + $0x70] sm:$0xff]
    %v1946 = vld [vmem:[#allocation10 + $0x78] sm:$0xff]
    %v1947 = vld [vmem:[#allocation10 + $0x80] sm:$0xff]
    %v1948 = vld [vmem:[#allocation10 + $0x88] sm:$0xff]
    %v1949 = vld [vmem:[#allocation10 + $0x90] sm:$0xff]
    %v1950 = vld [vmem:[#allocation10 + $0x98] sm:$0xff]
    %v1951 = vld [vmem:[#allocation10 + $0xa0] sm:$0xff]
    %v1952 = vld [vmem:[#allocation10 + $0xa8] sm:$0xff]
    %v1953 = vld [vmem:[#allocation10 + $0xb0] sm:$0xff]
    %v1954 = vld [vmem:[#allocation10 + $0xb8] sm:$0xff]
    %v1955 = vld [vmem:[#allocation10 + $0xc0] sm:$0xff]
    %v1956 = vld [vmem:[#allocation10 + $0xc8] sm:$0xff]
    %v1957 = vld [vmem:[#allocation10 + $0xd0] sm:$0xff]
    %v1958 = vld [vmem:[#allocation10 + $0xd8] sm:$0xff]
    %v1959 = vld [vmem:[#allocation10 + $0xe0] sm:$0xff]
    %v1960 = vld [vmem:[#allocation10 + $0xe8] sm:$0xff]
    %v1961 = vld [vmem:[#allocation10 + $0xf0] sm:$0xff]
    %v1962 = vld [vmem:[#allocation10 + $0xf8] sm:$0xff]
    %v1963 = vld [vmem:[#allocation10 + $0x100] sm:$0xff]
    %v1964 = vld [vmem:[#allocation10 + $0x108] sm:$0xff]
    %v1965 = vld [vmem:[#allocation10 + $0x110] sm:$0xff]
    %v1966 = vld [vmem:[#allocation10 + $0x118] sm:$0xff]
    %v1967 = vld [vmem:[#allocation10 + $0x120] sm:$0xff]
    %v1968 = vld [vmem:[#allocation10 + $0x128] sm:$0xff]
    %v1969 = vld [vmem:[#allocation10 + $0x130] sm:$0xff]
    %v1970 = vld [vmem:[#allocation10 + $0x138] sm:$0xff]
    %v1971 = vld [vmem:[#allocation10 + $0x140] sm:$0xff]
    %v1972 = vld [vmem:[#allocation10 + $0x148] sm:$0xff]
    %v1973 = vld [vmem:[#allocation10 + $0x150] sm:$0xff]
    %v1974 = vld [vmem:[#allocation10 + $0x158] sm:$0xff]
    %v1975 = vld [vmem:[#allocation10 + $0x160] sm:$0xff]
    %v1976 = vld [vmem:[#allocation10 + $0x168] sm:$0xff]
    %v1977 = vld [vmem:[#allocation10 + $0x170] sm:$0xff]
    %v1978 = vld [vmem:[#allocation10 + $0x178] sm:$0xff]
    %v1979 = vld [vmem:[#allocation10 + $0x180] sm:$0xff]
    %v1980 = vld [vmem:[#allocation10 + $0x188] sm:$0xff]
    %v1981 = vld [vmem:[#allocation10 + $0x190] sm:$0xff]
    %v1982 = vld [vmem:[#allocation10 + $0x198] sm:$0xff]
    %v1983 = vld [vmem:[#allocation10 + $0x1a0] sm:$0xff]
    %v1984 = vld [vmem:[#allocation10 + $0x1a8] sm:$0xff]
    %v1985 = vld [vmem:[#allocation10 + $0x1b0] sm:$0xff]
    %v1986 = vld [vmem:[#allocation10 + $0x1b8] sm:$0xff]
    %v1987 = vld [vmem:[#allocation10 + $0x1c0] sm:$0xff]
    %v1988 = vld [vmem:[#allocation10 + $0x1c8] sm:$0xff]
    %v1989 = vld [vmem:[#allocation10 + $0x1d0] sm:$0xff]
    %v1990 = vld [vmem:[#allocation10 + $0x1d8] sm:$0xff]
    %v1991 = vld [vmem:[#allocation10 + $0x1e0] sm:$0xff]
    %v1992 = vld [vmem:[#allocation10 + $0x1e8] sm:$0xff]
    %v1993 = vld [vmem:[#allocation10 + $0x1f0] sm:$0xff]
    %v1994 = vld [vmem:[#allocation10 + $0x1f8] sm:$0xff]
    %1995 = vmatprep.subr.mxu0 %v1992
    %1996 = vmatpush1.msra.mxu0 %v1991
    %1997 = vmatprep.subr.mxu0 %v1988
    %1998 = vmatpush1.msra.mxu0 %v1987
    %1999 = vmatprep.subr.mxu0 %v1984
    %2000 = vmatpush1.msra.mxu0 %v1983
    %2001 = vmatprep.subr.mxu0 %v1980
    %2002 = vmatpush1.msra.mxu0 %v1979
    %2003 = vmatprep.subr.mxu0 %v1976
    %2004 = vmatpush1.msra.mxu0 %v1975
    %2005 = vmatprep.subr.mxu0 %v1972
    %2006 = vmatpush1.msra.mxu0 %v1971
    %2007 = vmatprep.subr.mxu0 %v1968
    %2008 = vmatpush1.msra.mxu0 %v1967
    %2009 = vmatprep.subr.mxu0 %v1964
    %2010 = vmatpush1.msra.mxu0 %v1963
    %2011 = vmatprep.subr.mxu0 %v1960
    %2012 = vmatpush1.msra.mxu0 %v1959
    %2013 = vmatprep.subr.mxu0 %v1956
    %2014 = vmatpush1.msra.mxu0 %v1955
    %2015 = vmatprep.subr.mxu0 %v1952
    %2016 = vmatpush1.msra.mxu0 %v1951
    %2017 = vmatprep.subr.mxu0 %v1948
    %2018 = vmatpush1.msra.mxu0 %v1947
    %2019 = vmatprep.subr.mxu0 %v1944
    %2020 = vmatpush1.msra.mxu0 %v1943
    %2021 = vmatprep.subr.mxu0 %v1940
    %2022 = vmatpush1.msra.mxu0 %v1939
    %2023 = vmatprep.subr.mxu0 %v1936
    %2024 = vmatpush1.msra.mxu0 %v1935
    %2025 = vmatprep.subr.mxu0 %v1932
    %2026 = vmatpush1.msra.mxu0 %v1931
    %2027 = vmatprep.subr.mxu0 0.0
    %2028 = vmatpush2.msra.mxu0 0.0
    %2029 = vmatprep.subr.mxu0 0.0
    %2030 = vmatpush2.msra.mxu0 0.0
    %2031 = vmatprep.subr.mxu0 0.0
    %2032 = vmatpush2.msra.mxu0 0.0
    %2033 = vmatprep.subr.mxu0 0.0
    %2034 = vmatpush2.msra.mxu0 0.0
    %2035 = vmatprep.subr.mxu0 0.0
    %2036 = vmatpush2.msra.mxu0 0.0
    %2037 = vmatprep.subr.mxu0 0.0
    %2038 = vmatpush2.msra.mxu0 0.0
    %2039 = vmatprep.subr.mxu0 0.0
    %2040 = vmatpush2.msra.mxu0 0.0
    %2041 = vmatprep.subr.mxu0 0.0
    %2042 = vmatpush2.msra.mxu0 0.0
    %2043 = vmatprep.subr.mxu0 0.0
    %2044 = vmatpush2.msra.mxu0 0.0
    %2045 = vmatprep.subr.mxu0 0.0
    %2046 = vmatpush2.msra.mxu0 0.0
    %2047 = vmatprep.subr.mxu0 0.0
    %2048 = vmatpush2.msra.mxu0 0.0
    %2049 = vmatprep.subr.mxu0 0.0
    %2050 = vmatpush2.msra.mxu0 0.0
    %2051 = vmatprep.subr.mxu0 0.0
    %2052 = vmatpush2.msra.mxu0 0.0
    %2053 = vmatprep.subr.mxu0 0.0
    %2054 = vmatpush2.msra.mxu0 0.0
    %2055 = vmatprep.subr.mxu0 0.0
    %2056 = vmatpush2.msra.mxu0 0.0
    %2057 = vmatprep.subr.mxu0 0.0
    %2058 = vmatpush2.msra.mxu0 0.0
    %2059 = vmatprep.mubr.f32.mxu0 0.0
    %2060 = vmatmul.mubr.f32.gmra.mxu0 %v1923
    %v2061 = vpop.f32.mrf.mxu0
    %v2062 = vadd.f32 0.0, %v2061
    %v2063 = vpop.f32.mrf.mxu0
    %v2064 = vadd.f32 0.0, %v2063
    %2065 = vmatprep.mubr.f32.mxu0 0.0
    %2066 = vmatmul.mubr.f32.gmra.mxu0 %v1924
    %v2067 = vpop.f32.mrf.mxu0
    %v2068 = vadd.f32 0.0, %v2067
    %v2069 = vpop.f32.mrf.mxu0
    %v2070 = vadd.f32 0.0, %v2069
    %2071 = vmatprep.mubr.f32.mxu0 0.0
    %2072 = vmatmul.mubr.f32.gmra.mxu0 %v1925
    %v2073 = vpop.f32.mrf.mxu0
    %v2074 = vadd.f32 0.0, %v2073
    %v2075 = vpop.f32.mrf.mxu0
    %v2076 = vadd.f32 0.0, %v2075
    %2077 = vmatprep.mubr.f32.mxu0 0.0
    %2078 = vmatmul.mubr.f32.gmra.mxu0 %v1926
    %v2079 = vpop.f32.mrf.mxu0
    %v2080 = vadd.f32 0.0, %v2079
    %v2081 = vpop.f32.mrf.mxu0
    %v2082 = vadd.f32 0.0, %v2081
    %2083 = vmatprep.mubr.f32.mxu0 0.0
    %2084 = vmatmul.mubr.f32.gmra.mxu0 %v1927
    %v2085 = vpop.f32.mrf.mxu0
    %v2086 = vadd.f32 0.0, %v2085
    %v2087 = vpop.f32.mrf.mxu0
    %v2088 = vadd.f32 0.0, %v2087
    %2089 = vmatprep.mubr.f32.mxu0 0.0
    %2090 = vmatmul.mubr.f32.gmra.mxu0 %v1928
    %v2091 = vpop.f32.mrf.mxu0
    %v2092 = vadd.f32 0.0, %v2091
    %v2093 = vpop.f32.mrf.mxu0
    %v2094 = vadd.f32 0.0, %v2093
    %2095 = vmatprep.mubr.f32.mxu0 0.0
    %2096 = vmatmul.mubr.f32.gmra.mxu0 %v1929
    %v2097 = vpop.f32.mrf.mxu0
    %v2098 = vadd.f32 0.0, %v2097
    %v2099 = vpop.f32.mrf.mxu0
    %v2100 = vadd.f32 0.0, %v2099
    %2101 = vmatprep.mubr.f32.mxu0 0.0
    %2102 = vmatmul.mubr.f32.gmra.mxu0 %v1930
    %v2103 = vpop.f32.mrf.mxu0
    %v2104 = vadd.f32 0.0, %v2103
    %v2105 = vpop.f32.mrf.mxu0
    %v2106 = vadd.f32 0.0, %v2105
    %2107 = vdwg.mxu0
    %2108 = vmatprep.subr.mxu0 %v1994
    %2109 = vmatpush1.msra.mxu0 %v1993
    %2110 = vmatprep.subr.mxu0 %v1990
    %2111 = vmatpush1.msra.mxu0 %v1989
    %2112 = vmatprep.subr.mxu0 %v1986
    %2113 = vmatpush1.msra.mxu0 %v1985
    %2114 = vmatprep.subr.mxu0 %v1982
    %2115 = vmatpush1.msra.mxu0 %v1981
    %2116 = vmatprep.subr.mxu0 %v1978
    %2117 = vmatpush1.msra.mxu0 %v1977
    %2118 = vmatprep.subr.mxu0 %v1974
    %2119 = vmatpush1.msra.mxu0 %v1973
    %2120 = vmatprep.subr.mxu0 %v1970
    %2121 = vmatpush1.msra.mxu0 %v1969
    %2122 = vmatprep.subr.mxu0 %v1966
    %2123 = vmatpush1.msra.mxu0 %v1965
    %2124 = vmatprep.subr.mxu0 %v1962
    %2125 = vmatpush1.msra.mxu0 %v1961
    %2126 = vmatprep.subr.mxu0 %v1958
    %2127 = vmatpush1.msra.mxu0 %v1957
    %2128 = vmatprep.subr.mxu0 %v1954
    %2129 = vmatpush1.msra.mxu0 %v1953
    %2130 = vmatprep.subr.mxu0 %v1950
    %2131 = vmatpush1.msra.mxu0 %v1949
    %2132 = vmatprep.subr.mxu0 %v1946
    %2133 = vmatpush1.msra.mxu0 %v1945
    %2134 = vmatprep.subr.mxu0 %v1942
    %2135 = vmatpush1.msra.mxu0 %v1941
    %2136 = vmatprep.subr.mxu0 %v1938
    %2137 = vmatpush1.msra.mxu0 %v1937
    %2138 = vmatprep.subr.mxu0 %v1934
    %2139 = vmatpush1.msra.mxu0 %v1933
    %2140 = vmatprep.subr.mxu0 0.0
    %2141 = vmatpush2.msra.mxu0 0.0
    %2142 = vmatprep.subr.mxu0 0.0
    %2143 = vmatpush2.msra.mxu0 0.0
    %2144 = vmatprep.subr.mxu0 0.0
    %2145 = vmatpush2.msra.mxu0 0.0
    %2146 = vmatprep.subr.mxu0 0.0
    %2147 = vmatpush2.msra.mxu0 0.0
    %2148 = vmatprep.subr.mxu0 0.0
    %2149 = vmatpush2.msra.mxu0 0.0
    %2150 = vmatprep.subr.mxu0 0.0
    %2151 = vmatpush2.msra.mxu0 0.0
    %2152 = vmatprep.subr.mxu0 0.0
    %2153 = vmatpush2.msra.mxu0 0.0
    %2154 = vmatprep.subr.mxu0 0.0
    %2155 = vmatpush2.msra.mxu0 0.0
    %2156 = vmatprep.subr.mxu0 0.0
    %2157 = vmatpush2.msra.mxu0 0.0
    %2158 = vmatprep.subr.mxu0 0.0
    %2159 = vmatpush2.msra.mxu0 0.0
    %2160 = vmatprep.subr.mxu0 0.0
    %2161 = vmatpush2.msra.mxu0 0.0
    %2162 = vmatprep.subr.mxu0 0.0
    %2163 = vmatpush2.msra.mxu0 0.0
    %2164 = vmatprep.subr.mxu0 0.0
    %2165 = vmatpush2.msra.mxu0 0.0
    %2166 = vmatprep.subr.mxu0 0.0
    %2167 = vmatpush2.msra.mxu0 0.0
    %2168 = vmatprep.subr.mxu0 0.0
    %2169 = vmatpush2.msra.mxu0 0.0
    %2170 = vmatprep.subr.mxu0 0.0
    %2171 = vmatpush2.msra.mxu0 0.0
    %2172 = vmatprep.mubr.f32.mxu0 0.0
    %2173 = vmatmul.mubr.f32.gmra.mxu0 %v1923
    %v2174 = vpop.f32.mrf.mxu0
    %v2175 = vadd.f32 0.0, %v2174
    %v2176 = vpop.f32.mrf.mxu0
    %v2177 = vadd.f32 0.0, %v2176
    %2178 = vmatprep.mubr.f32.mxu0 0.0
    %2179 = vmatmul.mubr.f32.gmra.mxu0 %v1924
    %v2180 = vpop.f32.mrf.mxu0
    %v2181 = vadd.f32 0.0, %v2180
    %v2182 = vpop.f32.mrf.mxu0
    %v2183 = vadd.f32 0.0, %v2182
    %2184 = vmatprep.mubr.f32.mxu0 0.0
    %2185 = vmatmul.mubr.f32.gmra.mxu0 %v1925
    %v2186 = vpop.f32.mrf.mxu0
    %v2187 = vadd.f32 0.0, %v2186
    %v2188 = vpop.f32.mrf.mxu0
    %v2189 = vadd.f32 0.0, %v2188
    %2190 = vmatprep.mubr.f32.mxu0 0.0
    %2191 = vmatmul.mubr.f32.gmra.mxu0 %v1926
    %v2192 = vpop.f32.mrf.mxu0
    %v2193 = vadd.f32 0.0, %v2192
    %v2194 = vpop.f32.mrf.mxu0
    %v2195 = vadd.f32 0.0, %v2194
    %2196 = vmatprep.mubr.f32.mxu0 0.0
    %2197 = vmatmul.mubr.f32.gmra.mxu0 %v1927
    %v2198 = vpop.f32.mrf.mxu0
    %v2199 = vadd.f32 0.0, %v2198
    %v2200 = vpop.f32.mrf.mxu0
    %v2201 = vadd.f32 0.0, %v2200
    %2202 = vmatprep.mubr.f32.mxu0 0.0
    %2203 = vmatmul.mubr.f32.gmra.mxu0 %v1928
    %v2204 = vpop.f32.mrf.mxu0
    %v2205 = vadd.f32 0.0, %v2204
    %v2206 = vpop.f32.mrf.mxu0
    %v2207 = vadd.f32 0.0, %v2206
    %2208 = vmatprep.mubr.f32.mxu0 0.0
    %2209 = vmatmul.mubr.f32.gmra.mxu0 %v1929
    %v2210 = vpop.f32.mrf.mxu0
    %v2211 = vadd.f32 0.0, %v2210
    %v2212 = vpop.f32.mrf.mxu0
    %v2213 = vadd.f32 0.0, %v2212
    %2214 = vmatprep.mubr.f32.mxu0 0.0
    %2215 = vmatmul.mubr.f32.gmra.mxu0 %v1930
    %v2216 = vpop.f32.mrf.mxu0
    %v2217 = vadd.f32 0.0, %v2216
    %v2218 = vpop.f32.mrf.mxu0
    %v2219 = vadd.f32 0.0, %v2218
    %2220 = vdwg.mxu0
    %2221 = vmatprep.subr.mxu0 %v1920
    %2222 = vmatpush1.msra.mxu0 %v1919
    %2223 = vmatprep.subr.mxu0 %v1916
    %2224 = vmatpush1.msra.mxu0 %v1915
    %2225 = vmatprep.subr.mxu0 %v1912
    %2226 = vmatpush1.msra.mxu0 %v1911
    %2227 = vmatprep.subr.mxu0 %v1908
    %2228 = vmatpush1.msra.mxu0 %v1907
    %2229 = vmatprep.subr.mxu0 %v1904
    %2230 = vmatpush1.msra.mxu0 %v1903
    %2231 = vmatprep.subr.mxu0 %v1900
    %2232 = vmatpush1.msra.mxu0 %v1899
    %2233 = vmatprep.subr.mxu0 %v1896
    %2234 = vmatpush1.msra.mxu0 %v1895
    %2235 = vmatprep.subr.mxu0 %v1892
    %2236 = vmatpush1.msra.mxu0 %v1891
    %2237 = vmatprep.subr.mxu0 %v1888
    %2238 = vmatpush1.msra.mxu0 %v1887
    %2239 = vmatprep.subr.mxu0 %v1884
    %2240 = vmatpush1.msra.mxu0 %v1883
    %2241 = vmatprep.subr.mxu0 %v1880
    %2242 = vmatpush1.msra.mxu0 %v1879
    %2243 = vmatprep.subr.mxu0 %v1876
    %2244 = vmatpush1.msra.mxu0 %v1875
    %2245 = vmatprep.subr.mxu0 %v1872
    %2246 = vmatpush1.msra.mxu0 %v1871
    %2247 = vmatprep.subr.mxu0 %v1868
    %2248 = vmatpush1.msra.mxu0 %v1867
    %2249 = vmatprep.subr.mxu0 %v1864
    %2250 = vmatpush1.msra.mxu0 %v1863
    %2251 = vmatprep.subr.mxu0 %v1860
    %2252 = vmatpush1.msra.mxu0 %v1859
    %2253 = vmatprep.subr.mxu0 0.0
    %2254 = vmatpush2.msra.mxu0 0.0
    %2255 = vmatprep.subr.mxu0 0.0
    %2256 = vmatpush2.msra.mxu0 0.0
    %2257 = vmatprep.subr.mxu0 0.0
    %2258 = vmatpush2.msra.mxu0 0.0
    %2259 = vmatprep.subr.mxu0 0.0
    %2260 = vmatpush2.msra.mxu0 0.0
    %2261 = vmatprep.subr.mxu0 0.0
    %2262 = vmatpush2.msra.mxu0 0.0
    %2263 = vmatprep.subr.mxu0 0.0
    %2264 = vmatpush2.msra.mxu0 0.0
    %2265 = vmatprep.subr.mxu0 0.0
    %2266 = vmatpush2.msra.mxu0 0.0
    %2267 = vmatprep.subr.mxu0 0.0
    %2268 = vmatpush2.msra.mxu0 0.0
    %2269 = vmatprep.subr.mxu0 0.0
    %2270 = vmatpush2.msra.mxu0 0.0
    %2271 = vmatprep.subr.mxu0 0.0
    %2272 = vmatpush2.msra.mxu0 0.0
    %2273 = vmatprep.subr.mxu0 0.0
    %2274 = vmatpush2.msra.mxu0 0.0
    %2275 = vmatprep.subr.mxu0 0.0
    %2276 = vmatpush2.msra.mxu0 0.0
    %2277 = vmatprep.subr.mxu0 0.0
    %2278 = vmatpush2.msra.mxu0 0.0
    %2279 = vmatprep.subr.mxu0 0.0
    %2280 = vmatpush2.msra.mxu0 0.0
    %2281 = vmatprep.subr.mxu0 0.0
    %2282 = vmatpush2.msra.mxu0 0.0
    %2283 = vmatprep.subr.mxu0 0.0
    %2284 = vmatpush2.msra.mxu0 0.0
    %2285 = vmatprep.mubr.f32.mxu0 0.0
    %2286 = vmatmul.mubr.f32.gmra.mxu0 %v1851
    %v2287 = vpop.f32.mrf.mxu0
    %v2288 = vadd.f32 %v2062, %v2287
    %v2289 = vpop.f32.mrf.mxu0
    %v2290 = vadd.f32 %v2064, %v2289
    %2291 = vmatprep.mubr.f32.mxu0 0.0
    %2292 = vmatmul.mubr.f32.gmra.mxu0 %v1852
    %v2293 = vpop.f32.mrf.mxu0
    %v2294 = vadd.f32 %v2068, %v2293
    %v2295 = vpop.f32.mrf.mxu0
    %v2296 = vadd.f32 %v2070, %v2295
    %2297 = vmatprep.mubr.f32.mxu0 0.0
    %2298 = vmatmul.mubr.f32.gmra.mxu0 %v1853
    %v2299 = vpop.f32.mrf.mxu0
    %v2300 = vadd.f32 %v2074, %v2299
    %v2301 = vpop.f32.mrf.mxu0
    %v2302 = vadd.f32 %v2076, %v2301
    %2303 = vmatprep.mubr.f32.mxu0 0.0
    %2304 = vmatmul.mubr.f32.gmra.mxu0 %v1854
    %v2305 = vpop.f32.mrf.mxu0
    %v2306 = vadd.f32 %v2080, %v2305
    %v2307 = vpop.f32.mrf.mxu0
    %v2308 = vadd.f32 %v2082, %v2307
    %2309 = vmatprep.mubr.f32.mxu0 0.0
    %2310 = vmatmul.mubr.f32.gmra.mxu0 %v1855
    %v2311 = vpop.f32.mrf.mxu0
    %v2312 = vadd.f32 %v2086, %v2311
    %v2313 = vpop.f32.mrf.mxu0
    %v2314 = vadd.f32 %v2088, %v2313
    %2315 = vmatprep.mubr.f32.mxu0 0.0
    %2316 = vmatmul.mubr.f32.gmra.mxu0 %v1856
    %v2317 = vpop.f32.mrf.mxu0
    %v2318 = vadd.f32 %v2092, %v2317
    %v2319 = vpop.f32.mrf.mxu0
    %v2320 = vadd.f32 %v2094, %v2319
    %2321 = vmatprep.mubr.f32.mxu0 0.0
    %2322 = vmatmul.mubr.f32.gmra.mxu0 %v1857
    %v2323 = vpop.f32.mrf.mxu0
    %v2324 = vadd.f32 %v2098, %v2323
    %v2325 = vpop.f32.mrf.mxu0
    %v2326 = vadd.f32 %v2100, %v2325
    %2327 = vmatprep.mubr.f32.mxu0 0.0
    %2328 = vmatmul.mubr.f32.gmra.mxu0 %v1858
    %v2329 = vpop.f32.mrf.mxu0
    %v2330 = vadd.f32 %v2104, %v2329
    %v2331 = vpop.f32.mrf.mxu0
    %v2332 = vadd.f32 %v2106, %v2331
    %2333 = vdwg.mxu0
    %2334 = vmatprep.subr.mxu0 %v1922
    %2335 = vmatpush1.msra.mxu0 %v1921
    %2336 = vmatprep.subr.mxu0 %v1918
    %2337 = vmatpush1.msra.mxu0 %v1917
    %2338 = vmatprep.subr.mxu0 %v1914
    %2339 = vmatpush1.msra.mxu0 %v1913
    %2340 = vmatprep.subr.mxu0 %v1910
    %2341 = vmatpush1.msra.mxu0 %v1909
    %2342 = vmatprep.subr.mxu0 %v1906
    %2343 = vmatpush1.msra.mxu0 %v1905
    %2344 = vmatprep.subr.mxu0 %v1902
    %2345 = vmatpush1.msra.mxu0 %v1901
    %2346 = vmatprep.subr.mxu0 %v1898
    %2347 = vmatpush1.msra.mxu0 %v1897
    %2348 = vmatprep.subr.mxu0 %v1894
    %2349 = vmatpush1.msra.mxu0 %v1893
    %2350 = vmatprep.subr.mxu0 %v1890
    %2351 = vmatpush1.msra.mxu0 %v1889
    %2352 = vmatprep.subr.mxu0 %v1886
    %2353 = vmatpush1.msra.mxu0 %v1885
    %2354 = vmatprep.subr.mxu0 %v1882
    %2355 = vmatpush1.msra.mxu0 %v1881
    %2356 = vmatprep.subr.mxu0 %v1878
    %2357 = vmatpush1.msra.mxu0 %v1877
    %2358 = vmatprep.subr.mxu0 %v1874
    %2359 = vmatpush1.msra.mxu0 %v1873
    %2360 = vmatprep.subr.mxu0 %v1870
    %2361 = vmatpush1.msra.mxu0 %v1869
    %2362 = vmatprep.subr.mxu0 %v1866
    %2363 = vmatpush1.msra.mxu0 %v1865
    %2364 = vmatprep.subr.mxu0 %v1862
    %2365 = vmatpush1.msra.mxu0 %v1861
    %2366 = vmatprep.subr.mxu0 0.0
    %2367 = vmatpush2.msra.mxu0 0.0
    %2368 = vmatprep.subr.mxu0 0.0
    %2369 = vmatpush2.msra.mxu0 0.0
    %2370 = vmatprep.subr.mxu0 0.0
    %2371 = vmatpush2.msra.mxu0 0.0
    %2372 = vmatprep.subr.mxu0 0.0
    %2373 = vmatpush2.msra.mxu0 0.0
    %2374 = vmatprep.subr.mxu0 0.0
    %2375 = vmatpush2.msra.mxu0 0.0
    %2376 = vmatprep.subr.mxu0 0.0
    %2377 = vmatpush2.msra.mxu0 0.0
    %2378 = vmatprep.subr.mxu0 0.0
    %2379 = vmatpush2.msra.mxu0 0.0
    %2380 = vmatprep.subr.mxu0 0.0
    %2381 = vmatpush2.msra.mxu0 0.0
    %2382 = vmatprep.subr.mxu0 0.0
    %2383 = vmatpush2.msra.mxu0 0.0
    %2384 = vmatprep.subr.mxu0 0.0
    %2385 = vmatpush2.msra.mxu0 0.0
    %2386 = vmatprep.subr.mxu0 0.0
    %2387 = vmatpush2.msra.mxu0 0.0
    %2388 = vmatprep.subr.mxu0 0.0
    %2389 = vmatpush2.msra.mxu0 0.0
    %2390 = vmatprep.subr.mxu0 0.0
    %2391 = vmatpush2.msra.mxu0 0.0
    %2392 = vmatprep.subr.mxu0 0.0
    %2393 = vmatpush2.msra.mxu0 0.0
    %2394 = vmatprep.subr.mxu0 0.0
    %2395 = vmatpush2.msra.mxu0 0.0
    %2396 = vmatprep.subr.mxu0 0.0
    %2397 = vmatpush2.msra.mxu0 0.0
    %2398 = vmatprep.mubr.f32.mxu0 0.0
    %2399 = vmatmul.mubr.f32.gmra.mxu0 %v1851
    %v2400 = vpop.f32.mrf.mxu0
    %v2401 = vadd.f32 %v2175, %v2400
    %v2402 = vpop.f32.mrf.mxu0
    %v2403 = vadd.f32 %v2177, %v2402
    %2404 = vmatprep.mubr.f32.mxu0 0.0
    %2405 = vmatmul.mubr.f32.gmra.mxu0 %v1852
    %v2406 = vpop.f32.mrf.mxu0
    %v2407 = vadd.f32 %v2181, %v2406
    %v2408 = vpop.f32.mrf.mxu0
    %v2409 = vadd.f32 %v2183, %v2408
    %2410 = vmatprep.mubr.f32.mxu0 0.0
    %2411 = vmatmul.mubr.f32.gmra.mxu0 %v1853
    %v2412 = vpop.f32.mrf.mxu0
    %v2413 = vadd.f32 %v2187, %v2412
    %v2414 = vpop.f32.mrf.mxu0
    %v2415 = vadd.f32 %v2189, %v2414
    %2416 = vmatprep.mubr.f32.mxu0 0.0
    %2417 = vmatmul.mubr.f32.gmra.mxu0 %v1854
    %v2418 = vpop.f32.mrf.mxu0
    %v2419 = vadd.f32 %v2193, %v2418
    %v2420 = vpop.f32.mrf.mxu0
    %v2421 = vadd.f32 %v2195, %v2420
    %2422 = vmatprep.mubr.f32.mxu0 0.0
    %2423 = vmatmul.mubr.f32.gmra.mxu0 %v1855
    %v2424 = vpop.f32.mrf.mxu0
    %v2425 = vadd.f32 %v2199, %v2424
    %v2426 = vpop.f32.mrf.mxu0
    %v2427 = vadd.f32 %v2201, %v2426
    %2428 = vmatprep.mubr.f32.mxu0 0.0
    %2429 = vmatmul.mubr.f32.gmra.mxu0 %v1856
    %v2430 = vpop.f32.mrf.mxu0
    %v2431 = vadd.f32 %v2205, %v2430
    %v2432 = vpop.f32.mrf.mxu0
    %v2433 = vadd.f32 %v2207, %v2432
    %2434 = vmatprep.mubr.f32.mxu0 0.0
    %2435 = vmatmul.mubr.f32.gmra.mxu0 %v1857
    %v2436 = vpop.f32.mrf.mxu0
    %v2437 = vadd.f32 %v2211, %v2436
    %v2438 = vpop.f32.mrf.mxu0
    %v2439 = vadd.f32 %v2213, %v2438
    %2440 = vmatprep.mubr.f32.mxu0 0.0
    %2441 = vmatmul.mubr.f32.gmra.mxu0 %v1858
    %v2442 = vpop.f32.mrf.mxu0
    %v2443 = vadd.f32 %v2217, %v2442
    %v2444 = vpop.f32.mrf.mxu0
    %v2445 = vadd.f32 %v2219, %v2444
    %2446 = vdwg.mxu0
    %v2447 = vld [vmem:[%s8] sm:$0xf]
    %v2449 = vlaneseq
    %v2450 = vshrl.u32 %v2449, 7
    %v2451 = vsub.s32 0, %v2450
    %v2452 = vrot.slane %v2447, %v2451
    %v2453 = vlaneseq
    %v2454 = vshrl.u32 %v2453, 7
    %v2455 = vsub.s32 1, %v2454
    %v2456 = vrot.slane %v2447, %v2455
    %v2457 = vlaneseq
    %v2458 = vshrl.u32 %v2457, 7
    %v2459 = vsub.s32 2, %v2458
    %v2460 = vrot.slane %v2447, %v2459
    %v2461 = vlaneseq
    %v2462 = vshrl.u32 %v2461, 7
    %v2463 = vsub.s32 3, %v2462
    %v2464 = vrot.slane %v2447, %v2463
    %v2469 = vadd.f32 %v2288, %v2452
    %v2470 = vadd.f32 %v2290, %v2456
    %v2471 = vadd.f32 %v2401, %v2460
    %v2472 = vadd.f32 %v2403, %v2464
    %v2473 = vadd.f32 %v2294, %v2452
    %v2474 = vadd.f32 %v2296, %v2456
    %v2475 = vadd.f32 %v2407, %v2460
    %v2476 = vadd.f32 %v2409, %v2464
    %v2477 = vadd.f32 %v2300, %v2452
    %v2478 = vadd.f32 %v2302, %v2456
    %v2479 = vadd.f32 %v2413, %v2460
    %v2480 = vadd.f32 %v2415, %v2464
    %v2481 = vadd.f32 %v2306, %v2452
    %v2482 = vadd.f32 %v2308, %v2456
    %v2483 = vadd.f32 %v2419, %v2460
    %v2484 = vadd.f32 %v2421, %v2464
    %v2485 = vadd.f32 %v2312, %v2452
    %v2486 = vadd.f32 %v2314, %v2456
    %v2487 = vadd.f32 %v2425, %v2460
    %v2488 = vadd.f32 %v2427, %v2464
    %v2489 = vadd.f32 %v2318, %v2452
    %v2490 = vadd.f32 %v2320, %v2456
    %v2491 = vadd.f32 %v2431, %v2460
    %v2492 = vadd.f32 %v2433, %v2464
    %v2493 = vadd.f32 %v2324, %v2452
    %v2494 = vadd.f32 %v2326, %v2456
    %v2495 = vadd.f32 %v2437, %v2460
    %v2496 = vadd.f32 %v2439, %v2464
    %v2497 = vadd.f32 %v2330, %v2452
    %v2498 = vadd.f32 %v2332, %v2456
    %v2499 = vadd.f32 %v2443, %v2460
    %v2500 = vadd.f32 %v2445, %v2464
    %2501 = vst [vmem:[#allocation2] sm:$0xff] %v2469
    %2502 = vst [vmem:[#allocation2 + $0x8] sm:$0xff] %v2470
    %2503 = vst [vmem:[#allocation2 + $0x10] sm:$0xff] %v2471
    %2504 = vst [vmem:[#allocation2 + $0x18] sm:$0xff] %v2472
    %2505 = vst [vmem:[#allocation2 + $0x20] sm:$0xff] %v2473
    %2506 = vst [vmem:[#allocation2 + $0x28] sm:$0xff] %v2474
    %2507 = vst [vmem:[#allocation2 + $0x30] sm:$0xff] %v2475
    %2508 = vst [vmem:[#allocation2 + $0x38] sm:$0xff] %v2476
    %2509 = vst [vmem:[#allocation2 + $0x40] sm:$0xff] %v2477
    %2510 = vst [vmem:[#allocation2 + $0x48] sm:$0xff] %v2478
    %2511 = vst [vmem:[#allocation2 + $0x50] sm:$0xff] %v2479
    %2512 = vst [vmem:[#allocation2 + $0x58] sm:$0xff] %v2480
    %2513 = vst [vmem:[#allocation2 + $0x60] sm:$0xff] %v2481
    %2514 = vst [vmem:[#allocation2 + $0x68] sm:$0xff] %v2482
    %2515 = vst [vmem:[#allocation2 + $0x70] sm:$0xff] %v2483
    %2516 = vst [vmem:[#allocation2 + $0x78] sm:$0xff] %v2484
    %2517 = vst [vmem:[#allocation2 + $0x80] sm:$0xff] %v2485
    %2518 = vst [vmem:[#allocation2 + $0x88] sm:$0xff] %v2486
    %2519 = vst [vmem:[#allocation2 + $0x90] sm:$0xff] %v2487
    %2520 = vst [vmem:[#allocation2 + $0x98] sm:$0xff] %v2488
    %2521 = vst [vmem:[#allocation2 + $0xa0] sm:$0xff] %v2489
    %2522 = vst [vmem:[#allocation2 + $0xa8] sm:$0xff] %v2490
    %2523 = vst [vmem:[#allocation2 + $0xb0] sm:$0xff] %v2491
    %2524 = vst [vmem:[#allocation2 + $0xb8] sm:$0xff] %v2492
    %2525 = vst [vmem:[#allocation2 + $0xc0] sm:$0xff] %v2493
    %2526 = vst [vmem:[#allocation2 + $0xc8] sm:$0xff] %v2494
    %2527 = vst [vmem:[#allocation2 + $0xd0] sm:$0xff] %v2495
    %2528 = vst [vmem:[#allocation2 + $0xd8] sm:$0xff] %v2496
    %2529 = vst [vmem:[#allocation2 + $0xe0] sm:$0xff] %v2497
    %2530 = vst [vmem:[#allocation2 + $0xe8] sm:$0xff] %v2498
    %2531 = vst [vmem:[#allocation2 + $0xf0] sm:$0xff] %v2499
    %2532 = vst [vmem:[#allocation2 + $0xf8] sm:$0xff] %v2500
    %v2533 = vld [vmem:[#allocation11] sm:$0xff]
    %v2534 = vld [vmem:[#allocation11 + $0x8] sm:$0xff]
    %v2535 = vld [vmem:[#allocation11 + $0x10] sm:$0xff]
    %v2536 = vld [vmem:[#allocation11 + $0x18] sm:$0xff]
    %v2537 = vld [vmem:[#allocation11 + $0x20] sm:$0xff]
    %v2538 = vld [vmem:[#allocation11 + $0x28] sm:$0xff]
    %v2539 = vld [vmem:[#allocation11 + $0x30] sm:$0xff]
    %v2540 = vld [vmem:[#allocation11 + $0x38] sm:$0xff]
    %v2541 = vld [vmem:[#allocation11 + $0x40] sm:$0xff]
    %v2542 = vld [vmem:[#allocation11 + $0x48] sm:$0xff]
    %v2543 = vld [vmem:[#allocation11 + $0x50] sm:$0xff]
    %v2544 = vld [vmem:[#allocation11 + $0x58] sm:$0xff]
    %v2545 = vld [vmem:[#allocation11 + $0x60] sm:$0xff]
    %v2546 = vld [vmem:[#allocation11 + $0x68] sm:$0xff]
    %v2547 = vld [vmem:[#allocation11 + $0x70] sm:$0xff]
    %v2548 = vld [vmem:[#allocation11 + $0x78] sm:$0xff]
    %v2549 = vld [vmem:[#allocation11 + $0x80] sm:$0xff]
    %v2550 = vld [vmem:[#allocation11 + $0x88] sm:$0xff]
    %v2551 = vld [vmem:[#allocation11 + $0x90] sm:$0xff]
    %v2552 = vld [vmem:[#allocation11 + $0x98] sm:$0xff]
    %v2553 = vld [vmem:[#allocation11 + $0xa0] sm:$0xff]
    %v2554 = vld [vmem:[#allocation11 + $0xa8] sm:$0xff]
    %v2555 = vld [vmem:[#allocation11 + $0xb0] sm:$0xff]
    %v2556 = vld [vmem:[#allocation11 + $0xb8] sm:$0xff]
    %v2557 = vld [vmem:[#allocation11 + $0xc0] sm:$0xff]
    %v2558 = vld [vmem:[#allocation11 + $0xc8] sm:$0xff]
    %v2559 = vld [vmem:[#allocation11 + $0xd0] sm:$0xff]
    %v2560 = vld [vmem:[#allocation11 + $0xd8] sm:$0xff]
    %v2561 = vld [vmem:[#allocation11 + $0xe0] sm:$0xff]
    %v2562 = vld [vmem:[#allocation11 + $0xe8] sm:$0xff]
    %v2563 = vld [vmem:[#allocation11 + $0xf0] sm:$0xff]
    %v2564 = vld [vmem:[#allocation11 + $0xf8] sm:$0xff]
    %v2565 = vld [vmem:[#allocation11 + $0x100] sm:$0xff]
    %v2566 = vld [vmem:[#allocation11 + $0x108] sm:$0xff]
    %v2567 = vld [vmem:[#allocation11 + $0x110] sm:$0xff]
    %v2568 = vld [vmem:[#allocation11 + $0x118] sm:$0xff]
    %v2569 = vld [vmem:[#allocation11 + $0x120] sm:$0xff]
    %v2570 = vld [vmem:[#allocation11 + $0x128] sm:$0xff]
    %v2571 = vld [vmem:[#allocation11 + $0x130] sm:$0xff]
    %v2572 = vld [vmem:[#allocation11 + $0x138] sm:$0xff]
    %v2573 = vld [vmem:[#allocation11 + $0x140] sm:$0xff]
    %v2574 = vld [vmem:[#allocation11 + $0x148] sm:$0xff]
    %v2575 = vld [vmem:[#allocation11 + $0x150] sm:$0xff]
    %v2576 = vld [vmem:[#allocation11 + $0x158] sm:$0xff]
    %v2577 = vld [vmem:[#allocation11 + $0x160] sm:$0xff]
    %v2578 = vld [vmem:[#allocation11 + $0x168] sm:$0xff]
    %v2579 = vld [vmem:[#allocation11 + $0x170] sm:$0xff]
    %v2580 = vld [vmem:[#allocation11 + $0x178] sm:$0xff]
    %v2581 = vld [vmem:[#allocation11 + $0x180] sm:$0xff]
    %v2582 = vld [vmem:[#allocation11 + $0x188] sm:$0xff]
    %v2583 = vld [vmem:[#allocation11 + $0x190] sm:$0xff]
    %v2584 = vld [vmem:[#allocation11 + $0x198] sm:$0xff]
    %v2585 = vld [vmem:[#allocation11 + $0x1a0] sm:$0xff]
    %v2586 = vld [vmem:[#allocation11 + $0x1a8] sm:$0xff]
    %v2587 = vld [vmem:[#allocation11 + $0x1b0] sm:$0xff]
    %v2588 = vld [vmem:[#allocation11 + $0x1b8] sm:$0xff]
    %v2589 = vld [vmem:[#allocation11 + $0x1c0] sm:$0xff]
    %v2590 = vld [vmem:[#allocation11 + $0x1c8] sm:$0xff]
    %v2591 = vld [vmem:[#allocation11 + $0x1d0] sm:$0xff]
    %v2592 = vld [vmem:[#allocation11 + $0x1d8] sm:$0xff]
    %v2593 = vld [vmem:[#allocation11 + $0x1e0] sm:$0xff]
    %v2594 = vld [vmem:[#allocation11 + $0x1e8] sm:$0xff]
    %v2595 = vld [vmem:[#allocation11 + $0x1f0] sm:$0xff]
    %v2596 = vld [vmem:[#allocation11 + $0x1f8] sm:$0xff]
    %v2597 = vld [vmem:[%s479] sm:$0xff]
    %v2598 = vld [vmem:[%s479 + $0x8] sm:$0xff]
    %v2599 = vld [vmem:[%s479 + $0x10] sm:$0xff]
    %v2600 = vld [vmem:[%s479 + $0x18] sm:$0xff]
    %2601 = vmatprep.subr.mxu0 %v2594
    %2602 = vmatpush1.msra.mxu0 %v2593
    %2603 = vmatprep.subr.mxu0 %v2590
    %2604 = vmatpush1.msra.mxu0 %v2589
    %2605 = vmatprep.subr.mxu0 %v2586
    %2606 = vmatpush1.msra.mxu0 %v2585
    %2607 = vmatprep.subr.mxu0 %v2582
    %2608 = vmatpush1.msra.mxu0 %v2581
    %2609 = vmatprep.subr.mxu0 %v2578
    %2610 = vmatpush1.msra.mxu0 %v2577
    %2611 = vmatprep.subr.mxu0 %v2574
    %2612 = vmatpush1.msra.mxu0 %v2573
    %2613 = vmatprep.subr.mxu0 %v2570
    %2614 = vmatpush1.msra.mxu0 %v2569
    %2615 = vmatprep.subr.mxu0 %v2566
    %2616 = vmatpush1.msra.mxu0 %v2565
    %2617 = vmatprep.subr.mxu0 %v2562
    %2618 = vmatpush1.msra.mxu0 %v2561
    %2619 = vmatprep.subr.mxu0 %v2558
    %2620 = vmatpush1.msra.mxu0 %v2557
    %2621 = vmatprep.subr.mxu0 %v2554
    %2622 = vmatpush1.msra.mxu0 %v2553
    %2623 = vmatprep.subr.mxu0 %v2550
    %2624 = vmatpush1.msra.mxu0 %v2549
    %2625 = vmatprep.subr.mxu0 %v2546
    %2626 = vmatpush1.msra.mxu0 %v2545
    %2627 = vmatprep.subr.mxu0 %v2542
    %2628 = vmatpush1.msra.mxu0 %v2541
    %2629 = vmatprep.subr.mxu0 %v2538
    %2630 = vmatpush1.msra.mxu0 %v2537
    %2631 = vmatprep.subr.mxu0 %v2534
    %2632 = vmatpush1.msra.mxu0 %v2533
    %2633 = vmatprep.subr.mxu0 0.0
    %2634 = vmatpush2.msra.mxu0 0.0
    %2635 = vmatprep.subr.mxu0 0.0
    %2636 = vmatpush2.msra.mxu0 0.0
    %2637 = vmatprep.subr.mxu0 0.0
    %2638 = vmatpush2.msra.mxu0 0.0
    %2639 = vmatprep.subr.mxu0 0.0
    %2640 = vmatpush2.msra.mxu0 0.0
    %2641 = vmatprep.subr.mxu0 0.0
    %2642 = vmatpush2.msra.mxu0 0.0
    %2643 = vmatprep.subr.mxu0 0.0
    %2644 = vmatpush2.msra.mxu0 0.0
    %2645 = vmatprep.subr.mxu0 0.0
    %2646 = vmatpush2.msra.mxu0 0.0
    %2647 = vmatprep.subr.mxu0 0.0
    %2648 = vmatpush2.msra.mxu0 0.0
    %2649 = vmatprep.subr.mxu0 0.0
    %2650 = vmatpush2.msra.mxu0 0.0
    %2651 = vmatprep.subr.mxu0 0.0
    %2652 = vmatpush2.msra.mxu0 0.0
    %2653 = vmatprep.subr.mxu0 0.0
    %2654 = vmatpush2.msra.mxu0 0.0
    %2655 = vmatprep.subr.mxu0 0.0
    %2656 = vmatpush2.msra.mxu0 0.0
    %2657 = vmatprep.subr.mxu0 0.0
    %2658 = vmatpush2.msra.mxu0 0.0
    %2659 = vmatprep.subr.mxu0 0.0
    %2660 = vmatpush2.msra.mxu0 0.0
    %2661 = vmatprep.subr.mxu0 0.0
    %2662 = vmatpush2.msra.mxu0 0.0
    %2663 = vmatprep.subr.mxu0 0.0
    %2664 = vmatpush2.msra.mxu0 0.0
    %2665 = vmatprep.mubr.f32.mxu0 0.0
    %2666 = vmatmul.mubr.f32.gmra.mxu0 0.0
    %v2667 = vpop.f32.mrf.mxu0
    %v2668 = vadd.f32 0.0, %v2667
    %v2669 = vpop.f32.mrf.mxu0
    %v2670 = vadd.f32 0.0, %v2669
    %2671 = vdwg.mxu0
    %2672 = vmatprep.subr.mxu0 %v2596
    %2673 = vmatpush1.msra.mxu0 %v2595
    %2674 = vmatprep.subr.mxu0 %v2592
    %2675 = vmatpush1.msra.mxu0 %v2591
    %2676 = vmatprep.subr.mxu0 %v2588
    %2677 = vmatpush1.msra.mxu0 %v2587
    %2678 = vmatprep.subr.mxu0 %v2584
    %2679 = vmatpush1.msra.mxu0 %v2583
    %2680 = vmatprep.subr.mxu0 %v2580
    %2681 = vmatpush1.msra.mxu0 %v2579
    %2682 = vmatprep.subr.mxu0 %v2576
    %2683 = vmatpush1.msra.mxu0 %v2575
    %2684 = vmatprep.subr.mxu0 %v2572
    %2685 = vmatpush1.msra.mxu0 %v2571
    %2686 = vmatprep.subr.mxu0 %v2568
    %2687 = vmatpush1.msra.mxu0 %v2567
    %2688 = vmatprep.subr.mxu0 %v2564
    %2689 = vmatpush1.msra.mxu0 %v2563
    %2690 = vmatprep.subr.mxu0 %v2560
    %2691 = vmatpush1.msra.mxu0 %v2559
    %2692 = vmatprep.subr.mxu0 %v2556
    %2693 = vmatpush1.msra.mxu0 %v2555
    %2694 = vmatprep.subr.mxu0 %v2552
    %2695 = vmatpush1.msra.mxu0 %v2551
    %2696 = vmatprep.subr.mxu0 %v2548
    %2697 = vmatpush1.msra.mxu0 %v2547
    %2698 = vmatprep.subr.mxu0 %v2544
    %2699 = vmatpush1.msra.mxu0 %v2543
    %2700 = vmatprep.subr.mxu0 %v2540
    %2701 = vmatpush1.msra.mxu0 %v2539
    %2702 = vmatprep.subr.mxu0 %v2536
    %2703 = vmatpush1.msra.mxu0 %v2535
    %2704 = vmatprep.subr.mxu0 0.0
    %2705 = vmatpush2.msra.mxu0 0.0
    %2706 = vmatprep.subr.mxu0 0.0
    %2707 = vmatpush2.msra.mxu0 0.0
    %2708 = vmatprep.subr.mxu0 0.0
    %2709 = vmatpush2.msra.mxu0 0.0
    %2710 = vmatprep.subr.mxu0 0.0
    %2711 = vmatpush2.msra.mxu0 0.0
    %2712 = vmatprep.subr.mxu0 0.0
    %2713 = vmatpush2.msra.mxu0 0.0
    %2714 = vmatprep.subr.mxu0 0.0
    %2715 = vmatpush2.msra.mxu0 0.0
    %2716 = vmatprep.subr.mxu0 0.0
    %2717 = vmatpush2.msra.mxu0 0.0
    %2718 = vmatprep.subr.mxu0 0.0
    %2719 = vmatpush2.msra.mxu0 0.0
    %2720 = vmatprep.subr.mxu0 0.0
    %2721 = vmatpush2.msra.mxu0 0.0
    %2722 = vmatprep.subr.mxu0 0.0
    %2723 = vmatpush2.msra.mxu0 0.0
    %2724 = vmatprep.subr.mxu0 0.0
    %2725 = vmatpush2.msra.mxu0 0.0
    %2726 = vmatprep.subr.mxu0 0.0
    %2727 = vmatpush2.msra.mxu0 0.0
    %2728 = vmatprep.subr.mxu0 0.0
    %2729 = vmatpush2.msra.mxu0 0.0
    %2730 = vmatprep.subr.mxu0 0.0
    %2731 = vmatpush2.msra.mxu0 0.0
    %2732 = vmatprep.subr.mxu0 0.0
    %2733 = vmatpush2.msra.mxu0 0.0
    %2734 = vmatprep.subr.mxu0 0.0
    %2735 = vmatpush2.msra.mxu0 0.0
    %2736 = vmatprep.mubr.f32.mxu0 0.0
    %2737 = vmatmul.mubr.f32.gmra.mxu0 0.0
    %v2738 = vpop.f32.mrf.mxu0
    %v2739 = vadd.f32 0.0, %v2738
    %v2740 = vpop.f32.mrf.mxu0
    %v2741 = vadd.f32 0.0, %v2740
    %2742 = vdwg.mxu0
    %v2743 = vadd.f32 %v2597, %v2668
    %v2744 = vadd.f32 %v2598, %v2670
    %v2745 = vadd.f32 %v2599, %v2739
    %v2746 = vadd.f32 %v2600, %v2741
    %v2747 = vtanh.pop %v2743
    %v2748 = vtanh.pop %v2744
    %v2749 = vtanh.pop %v2745
    %v2750 = vtanh.pop %v2746
    %v2751 = vmul.f32 %v2747, 0.5
    %v2752 = vadd.f32 %v2751, 0.5
    %v2753 = vmul.f32 %v2748, 0.5
    %v2754 = vadd.f32 %v2753, 0.5
    %v2755 = vmul.f32 %v2750, 0.5
    %v2756 = vadd.f32 %v2755, 0.5
    %v2757 = vmul.f32 %v2754, 0.0
    %v2758 = vmul.f32 %v2752, %v2749
    %v2759 = vadd.f32 %v2757, %v2758
    %v2760 = vtanh.pop %v2759
    %v2761 = vmul.f32 %v2756, %v2760
    %v2762 = vld [vmem:[%s650] sm:$0xff]
    %v2763 = vld [vmem:[%s650 + $0x8] sm:$0xff]
    %v2764 = vld [vmem:[%s650 + $0x10] sm:$0xff]
    %v2765 = vld [vmem:[%s650 + $0x18] sm:$0xff]
    %2766 = vmatprep.subr.mxu0 %v2594
    %2767 = vmatpush1.msra.mxu0 %v2593
    %2768 = vmatprep.subr.mxu0 %v2590
    %2769 = vmatpush1.msra.mxu0 %v2589
    %2770 = vmatprep.subr.mxu0 %v2586
    %2771 = vmatpush1.msra.mxu0 %v2585
    %2772 = vmatprep.subr.mxu0 %v2582
    %2773 = vmatpush1.msra.mxu0 %v2581
    %2774 = vmatprep.subr.mxu0 %v2578
    %2775 = vmatpush1.msra.mxu0 %v2577
    %2776 = vmatprep.subr.mxu0 %v2574
    %2777 = vmatpush1.msra.mxu0 %v2573
    %2778 = vmatprep.subr.mxu0 %v2570
    %2779 = vmatpush1.msra.mxu0 %v2569
    %2780 = vmatprep.subr.mxu0 %v2566
    %2781 = vmatpush1.msra.mxu0 %v2565
    %2782 = vmatprep.subr.mxu0 %v2562
    %2783 = vmatpush1.msra.mxu0 %v2561
    %2784 = vmatprep.subr.mxu0 %v2558
    %2785 = vmatpush1.msra.mxu0 %v2557
    %2786 = vmatprep.subr.mxu0 %v2554
    %2787 = vmatpush1.msra.mxu0 %v2553
    %2788 = vmatprep.subr.mxu0 %v2550
    %2789 = vmatpush1.msra.mxu0 %v2549
    %2790 = vmatprep.subr.mxu0 %v2546
    %2791 = vmatpush1.msra.mxu0 %v2545
    %2792 = vmatprep.subr.mxu0 %v2542
    %2793 = vmatpush1.msra.mxu0 %v2541
    %2794 = vmatprep.subr.mxu0 %v2538
    %2795 = vmatpush1.msra.mxu0 %v2537
    %2796 = vmatprep.subr.mxu0 %v2534
    %2797 = vmatpush1.msra.mxu0 %v2533
    %2798 = vmatprep.subr.mxu0 0.0
    %2799 = vmatpush2.msra.mxu0 0.0
    %2800 = vmatprep.subr.mxu0 0.0
    %2801 = vmatpush2.msra.mxu0 0.0
    %2802 = vmatprep.subr.mxu0 0.0
    %2803 = vmatpush2.msra.mxu0 0.0
    %2804 = vmatprep.subr.mxu0 0.0
    %2805 = vmatpush2.msra.mxu0 0.0
    %2806 = vmatprep.subr.mxu0 0.0
    %2807 = vmatpush2.msra.mxu0 0.0
    %2808 = vmatprep.subr.mxu0 0.0
    %2809 = vmatpush2.msra.mxu0 0.0
    %2810 = vmatprep.subr.mxu0 0.0
    %2811 = vmatpush2.msra.mxu0 0.0
    %2812 = vmatprep.subr.mxu0 0.0
    %2813 = vmatpush2.msra.mxu0 0.0
    %2814 = vmatprep.subr.mxu0 0.0
    %2815 = vmatpush2.msra.mxu0 0.0
    %2816 = vmatprep.subr.mxu0 0.0
    %2817 = vmatpush2.msra.mxu0 0.0
    %2818 = vmatprep.subr.mxu0 0.0
    %2819 = vmatpush2.msra.mxu0 0.0
    %2820 = vmatprep.subr.mxu0 0.0
    %2821 = vmatpush2.msra.mxu0 0.0
    %2822 = vmatprep.subr.mxu0 0.0
    %2823 = vmatpush2.msra.mxu0 0.0
    %2824 = vmatprep.subr.mxu0 0.0
    %2825 = vmatpush2.msra.mxu0 0.0
    %2826 = vmatprep.subr.mxu0 0.0
    %2827 = vmatpush2.msra.mxu0 0.0
    %2828 = vmatprep.subr.mxu0 0.0
    %2829 = vmatpush2.msra.mxu0 0.0
    %2830 = vmatprep.mubr.f32.mxu0 0.0
    %2831 = vmatmul.mubr.f32.gmra.mxu0 %v2761
    %v2832 = vpop.f32.mrf.mxu0
    %v2833 = vadd.f32 0.0, %v2832
    %v2834 = vpop.f32.mrf.mxu0
    %v2835 = vadd.f32 0.0, %v2834
    %2836 = vdwg.mxu0
    %2837 = vmatprep.subr.mxu0 %v2596
    %2838 = vmatpush1.msra.mxu0 %v2595
    %2839 = vmatprep.subr.mxu0 %v2592
    %2840 = vmatpush1.msra.mxu0 %v2591
    %2841 = vmatprep.subr.mxu0 %v2588
    %2842 = vmatpush1.msra.mxu0 %v2587
    %2843 = vmatprep.subr.mxu0 %v2584
    %2844 = vmatpush1.msra.mxu0 %v2583
    %2845 = vmatprep.subr.mxu0 %v2580
    %2846 = vmatpush1.msra.mxu0 %v2579
    %2847 = vmatprep.subr.mxu0 %v2576
    %2848 = vmatpush1.msra.mxu0 %v2575
    %2849 = vmatprep.subr.mxu0 %v2572
    %2850 = vmatpush1.msra.mxu0 %v2571
    %2851 = vmatprep.subr.mxu0 %v2568
    %2852 = vmatpush1.msra.mxu0 %v2567
    %2853 = vmatprep.subr.mxu0 %v2564
    %2854 = vmatpush1.msra.mxu0 %v2563
    %2855 = vmatprep.subr.mxu0 %v2560
    %2856 = vmatpush1.msra.mxu0 %v2559
    %2857 = vmatprep.subr.mxu0 %v2556
    %2858 = vmatpush1.msra.mxu0 %v2555
    %2859 = vmatprep.subr.mxu0 %v2552
    %2860 = vmatpush1.msra.mxu0 %v2551
    %2861 = vmatprep.subr.mxu0 %v2548
    %2862 = vmatpush1.msra.mxu0 %v2547
    %2863 = vmatprep.subr.mxu0 %v2544
    %2864 = vmatpush1.msra.mxu0 %v2543
    %2865 = vmatprep.subr.mxu0 %v2540
    %2866 = vmatpush1.msra.mxu0 %v2539
    %2867 = vmatprep.subr.mxu0 %v2536
    %2868 = vmatpush1.msra.mxu0 %v2535
    %2869 = vmatprep.subr.mxu0 0.0
    %2870 = vmatpush2.msra.mxu0 0.0
    %2871 = vmatprep.subr.mxu0 0.0
    %2872 = vmatpush2.msra.mxu0 0.0
    %2873 = vmatprep.subr.mxu0 0.0
    %2874 = vmatpush2.msra.mxu0 0.0
    %2875 = vmatprep.subr.mxu0 0.0
    %2876 = vmatpush2.msra.mxu0 0.0
    %2877 = vmatprep.subr.mxu0 0.0
    %2878 = vmatpush2.msra.mxu0 0.0
    %2879 = vmatprep.subr.mxu0 0.0
    %2880 = vmatpush2.msra.mxu0 0.0
    %2881 = vmatprep.subr.mxu0 0.0
    %2882 = vmatpush2.msra.mxu0 0.0
    %2883 = vmatprep.subr.mxu0 0.0
    %2884 = vmatpush2.msra.mxu0 0.0
    %2885 = vmatprep.subr.mxu0 0.0
    %2886 = vmatpush2.msra.mxu0 0.0
    %2887 = vmatprep.subr.mxu0 0.0
    %2888 = vmatpush2.msra.mxu0 0.0
    %2889 = vmatprep.subr.mxu0 0.0
    %2890 = vmatpush2.msra.mxu0 0.0
    %2891 = vmatprep.subr.mxu0 0.0
    %2892 = vmatpush2.msra.mxu0 0.0
    %2893 = vmatprep.subr.mxu0 0.0
    %2894 = vmatpush2.msra.mxu0 0.0
    %2895 = vmatprep.subr.mxu0 0.0
    %2896 = vmatpush2.msra.mxu0 0.0
    %2897 = vmatprep.subr.mxu0 0.0
    %2898 = vmatpush2.msra.mxu0 0.0
    %2899 = vmatprep.subr.mxu0 0.0
    %2900 = vmatpush2.msra.mxu0 0.0
    %2901 = vmatprep.mubr.f32.mxu0 0.0
    %2902 = vmatmul.mubr.f32.gmra.mxu0 %v2761
    %v2903 = vpop.f32.mrf.mxu0
    %v2904 = vadd.f32 0.0, %v2903
    %v2905 = vpop.f32.mrf.mxu0
    %v2906 = vadd.f32 0.0, %v2905
    %2907 = vdwg.mxu0
    %v2908 = vadd.f32 %v2762, %v2833
    %v2909 = vadd.f32 %v2763, %v2835
    %v2910 = vadd.f32 %v2764, %v2904
    %v2911 = vadd.f32 %v2765, %v2906
    %v2912 = vtanh.pop %v2908
    %v2913 = vtanh.pop %v2909
    %v2914 = vtanh.pop %v2910
    %v2915 = vtanh.pop %v2911
    %v2916 = vmul.f32 %v2912, 0.5
    %v2917 = vadd.f32 %v2916, 0.5
    %v2918 = vmul.f32 %v2913, 0.5
    %v2919 = vadd.f32 %v2918, 0.5
    %v2920 = vmul.f32 %v2915, 0.5
    %v2921 = vadd.f32 %v2920, 0.5
    %v2922 = vmul.f32 %v2919, %v2759
    %v2923 = vmul.f32 %v2917, %v2914
    %v2924 = vadd.f32 %v2922, %v2923
    %v2925 = vtanh.pop %v2924
    %v2926 = vmul.f32 %v2921, %v2925
    %v2927 = vld [vmem:[%s822] sm:$0xff]
    %v2928 = vld [vmem:[%s822 + $0x8] sm:$0xff]
    %v2929 = vld [vmem:[%s822 + $0x10] sm:$0xff]
    %v2930 = vld [vmem:[%s822 + $0x18] sm:$0xff]
    %2931 = vmatprep.subr.mxu0 %v2594
    %2932 = vmatpush1.msra.mxu0 %v2593
    %2933 = vmatprep.subr.mxu0 %v2590
    %2934 = vmatpush1.msra.mxu0 %v2589
    %2935 = vmatprep.subr.mxu0 %v2586
    %2936 = vmatpush1.msra.mxu0 %v2585
    %2937 = vmatprep.subr.mxu0 %v2582
    %2938 = vmatpush1.msra.mxu0 %v2581
    %2939 = vmatprep.subr.mxu0 %v2578
    %2940 = vmatpush1.msra.mxu0 %v2577
    %2941 = vmatprep.subr.mxu0 %v2574
    %2942 = vmatpush1.msra.mxu0 %v2573
    %2943 = vmatprep.subr.mxu0 %v2570
    %2944 = vmatpush1.msra.mxu0 %v2569
    %2945 = vmatprep.subr.mxu0 %v2566
    %2946 = vmatpush1.msra.mxu0 %v2565
    %2947 = vmatprep.subr.mxu0 %v2562
    %2948 = vmatpush1.msra.mxu0 %v2561
    %2949 = vmatprep.subr.mxu0 %v2558
    %2950 = vmatpush1.msra.mxu0 %v2557
    %2951 = vmatprep.subr.mxu0 %v2554
    %2952 = vmatpush1.msra.mxu0 %v2553
    %2953 = vmatprep.subr.mxu0 %v2550
    %2954 = vmatpush1.msra.mxu0 %v2549
    %2955 = vmatprep.subr.mxu0 %v2546
    %2956 = vmatpush1.msra.mxu0 %v2545
    %2957 = vmatprep.subr.mxu0 %v2542
    %2958 = vmatpush1.msra.mxu0 %v2541
    %2959 = vmatprep.subr.mxu0 %v2538
    %2960 = vmatpush1.msra.mxu0 %v2537
    %2961 = vmatprep.subr.mxu0 %v2534
    %2962 = vmatpush1.msra.mxu0 %v2533
    %2963 = vmatprep.subr.mxu0 0.0
    %2964 = vmatpush2.msra.mxu0 0.0
    %2965 = vmatprep.subr.mxu0 0.0
    %2966 = vmatpush2.msra.mxu0 0.0
    %2967 = vmatprep.subr.mxu0 0.0
    %2968 = vmatpush2.msra.mxu0 0.0
    %2969 = vmatprep.subr.mxu0 0.0
    %2970 = vmatpush2.msra.mxu0 0.0
    %2971 = vmatprep.subr.mxu0 0.0
    %2972 = vmatpush2.msra.mxu0 0.0
    %2973 = vmatprep.subr.mxu0 0.0
    %2974 = vmatpush2.msra.mxu0 0.0
    %2975 = vmatprep.subr.mxu0 0.0
    %2976 = vmatpush2.msra.mxu0 0.0
    %2977 = vmatprep.subr.mxu0 0.0
    %2978 = vmatpush2.msra.mxu0 0.0
    %2979 = vmatprep.subr.mxu0 0.0
    %2980 = vmatpush2.msra.mxu0 0.0
    %2981 = vmatprep.subr.mxu0 0.0
    %2982 = vmatpush2.msra.mxu0 0.0
    %2983 = vmatprep.subr.mxu0 0.0
    %2984 = vmatpush2.msra.mxu0 0.0
    %2985 = vmatprep.subr.mxu0 0.0
    %2986 = vmatpush2.msra.mxu0 0.0
    %2987 = vmatprep.subr.mxu0 0.0
    %2988 = vmatpush2.msra.mxu0 0.0
    %2989 = vmatprep.subr.mxu0 0.0
    %2990 = vmatpush2.msra.mxu0 0.0
    %2991 = vmatprep.subr.mxu0 0.0
    %2992 = vmatpush2.msra.mxu0 0.0
    %2993 = vmatprep.subr.mxu0 0.0
    %2994 = vmatpush2.msra.mxu0 0.0
    %2995 = vmatprep.mubr.f32.mxu0 0.0
    %2996 = vmatmul.mubr.f32.gmra.mxu0 %v2926
    %v2997 = vpop.f32.mrf.mxu0
    %v2998 = vadd.f32 0.0, %v2997
    %v2999 = vpop.f32.mrf.mxu0
    %v3000 = vadd.f32 0.0, %v2999
    %3001 = vdwg.mxu0
    %3002 = vmatprep.subr.mxu0 %v2596
    %3003 = vmatpush1.msra.mxu0 %v2595
    %3004 = vmatprep.subr.mxu0 %v2592
    %3005 = vmatpush1.msra.mxu0 %v2591
    %3006 = vmatprep.subr.mxu0 %v2588
    %3007 = vmatpush1.msra.mxu0 %v2587
    %3008 = vmatprep.subr.mxu0 %v2584
    %3009 = vmatpush1.msra.mxu0 %v2583
    %3010 = vmatprep.subr.mxu0 %v2580
    %3011 = vmatpush1.msra.mxu0 %v2579
    %3012 = vmatprep.subr.mxu0 %v2576
    %3013 = vmatpush1.msra.mxu0 %v2575
    %3014 = vmatprep.subr.mxu0 %v2572
    %3015 = vmatpush1.msra.mxu0 %v2571
    %3016 = vmatprep.subr.mxu0 %v2568
    %3017 = vmatpush1.msra.mxu0 %v2567
    %3018 = vmatprep.subr.mxu0 %v2564
    %3019 = vmatpush1.msra.mxu0 %v2563
    %3020 = vmatprep.subr.mxu0 %v2560
    %3021 = vmatpush1.msra.mxu0 %v2559
    %3022 = vmatprep.subr.mxu0 %v2556
    %3023 = vmatpush1.msra.mxu0 %v2555
    %3024 = vmatprep.subr.mxu0 %v2552
    %3025 = vmatpush1.msra.mxu0 %v2551
    %3026 = vmatprep.subr.mxu0 %v2548
    %3027 = vmatpush1.msra.mxu0 %v2547
    %3028 = vmatprep.subr.mxu0 %v2544
    %3029 = vmatpush1.msra.mxu0 %v2543
    %3030 = vmatprep.subr.mxu0 %v2540
    %3031 = vmatpush1.msra.mxu0 %v2539
    %3032 = vmatprep.subr.mxu0 %v2536
    %3033 = vmatpush1.msra.mxu0 %v2535
    %3034 = vmatprep.subr.mxu0 0.0
    %3035 = vmatpush2.msra.mxu0 0.0
    %3036 = vmatprep.subr.mxu0 0.0
    %3037 = vmatpush2.msra.mxu0 0.0
    %3038 = vmatprep.subr.mxu0 0.0
    %3039 = vmatpush2.msra.mxu0 0.0
    %3040 = vmatprep.subr.mxu0 0.0
    %3041 = vmatpush2.msra.mxu0 0.0
    %3042 = vmatprep.subr.mxu0 0.0
    %3043 = vmatpush2.msra.mxu0 0.0
    %3044 = vmatprep.subr.mxu0 0.0
    %3045 = vmatpush2.msra.mxu0 0.0
    %3046 = vmatprep.subr.mxu0 0.0
    %3047 = vmatpush2.msra.mxu0 0.0
    %3048 = vmatprep.subr.mxu0 0.0
    %3049 = vmatpush2.msra.mxu0 0.0
    %3050 = vmatprep.subr.mxu0 0.0
    %3051 = vmatpush2.msra.mxu0 0.0
    %3052 = vmatprep.subr.mxu0 0.0
    %3053 = vmatpush2.msra.mxu0 0.0
    %3054 = vmatprep.subr.mxu0 0.0
    %3055 = vmatpush2.msra.mxu0 0.0
    %3056 = vmatprep.subr.mxu0 0.0
    %3057 = vmatpush2.msra.mxu0 0.0
    %3058 = vmatprep.subr.mxu0 0.0
    %3059 = vmatpush2.msra.mxu0 0.0
    %3060 = vmatprep.subr.mxu0 0.0
    %3061 = vmatpush2.msra.mxu0 0.0
    %3062 = vmatprep.subr.mxu0 0.0
    %3063 = vmatpush2.msra.mxu0 0.0
    %3064 = vmatprep.subr.mxu0 0.0
    %3065 = vmatpush2.msra.mxu0 0.0
    %3066 = vmatprep.mubr.f32.mxu0 0.0
    %3067 = vmatmul.mubr.f32.gmra.mxu0 %v2926
    %v3068 = vpop.f32.mrf.mxu0
    %v3069 = vadd.f32 0.0, %v3068
    %v3070 = vpop.f32.mrf.mxu0
    %v3071 = vadd.f32 0.0, %v3070
    %3072 = vdwg.mxu0
    %v3073 = vadd.f32 %v2927, %v2998
    %v3074 = vadd.f32 %v2928, %v3000
    %v3075 = vadd.f32 %v2929, %v3069
    %v3076 = vadd.f32 %v2930, %v3071
    %v3077 = vtanh.pop %v3073
    %v3078 = vtanh.pop %v3074
    %v3079 = vtanh.pop %v3075
    %v3080 = vtanh.pop %v3076
    %v3081 = vmul.f32 %v3077, 0.5
    %v3082 = vadd.f32 %v3081, 0.5
    %v3083 = vmul.f32 %v3078, 0.5
    %v3084 = vadd.f32 %v3083, 0.5
    %v3085 = vmul.f32 %v3080, 0.5
    %v3086 = vadd.f32 %v3085, 0.5
    %v3087 = vmul.f32 %v3084, %v2924
    %v3088 = vmul.f32 %v3082, %v3079
    %v3089 = vadd.f32 %v3087, %v3088
    %v3090 = vtanh.pop %v3089
    %v3091 = vmul.f32 %v3086, %v3090
    %v3092 = vld [vmem:[%s994] sm:$0xff]
    %v3093 = vld [vmem:[%s994 + $0x8] sm:$0xff]
    %v3094 = vld [vmem:[%s994 + $0x10] sm:$0xff]
    %v3095 = vld [vmem:[%s994 + $0x18] sm:$0xff]
    %3096 = vmatprep.subr.mxu0 %v2594
    %3097 = vmatpush1.msra.mxu0 %v2593
    %3098 = vmatprep.subr.mxu0 %v2590
    %3099 = vmatpush1.msra.mxu0 %v2589
    %3100 = vmatprep.subr.mxu0 %v2586
    %3101 = vmatpush1.msra.mxu0 %v2585
    %3102 = vmatprep.subr.mxu0 %v2582
    %3103 = vmatpush1.msra.mxu0 %v2581
    %3104 = vmatprep.subr.mxu0 %v2578
    %3105 = vmatpush1.msra.mxu0 %v2577
    %3106 = vmatprep.subr.mxu0 %v2574
    %3107 = vmatpush1.msra.mxu0 %v2573
    %3108 = vmatprep.subr.mxu0 %v2570
    %3109 = vmatpush1.msra.mxu0 %v2569
    %3110 = vmatprep.subr.mxu0 %v2566
    %3111 = vmatpush1.msra.mxu0 %v2565
    %3112 = vmatprep.subr.mxu0 %v2562
    %3113 = vmatpush1.msra.mxu0 %v2561
    %3114 = vmatprep.subr.mxu0 %v2558
    %3115 = vmatpush1.msra.mxu0 %v2557
    %3116 = vmatprep.subr.mxu0 %v2554
    %3117 = vmatpush1.msra.mxu0 %v2553
    %3118 = vmatprep.subr.mxu0 %v2550
    %3119 = vmatpush1.msra.mxu0 %v2549
    %3120 = vmatprep.subr.mxu0 %v2546
    %3121 = vmatpush1.msra.mxu0 %v2545
    %3122 = vmatprep.subr.mxu0 %v2542
    %3123 = vmatpush1.msra.mxu0 %v2541
    %3124 = vmatprep.subr.mxu0 %v2538
    %3125 = vmatpush1.msra.mxu0 %v2537
    %3126 = vmatprep.subr.mxu0 %v2534
    %3127 = vmatpush1.msra.mxu0 %v2533
    %3128 = vmatprep.subr.mxu0 0.0
    %3129 = vmatpush2.msra.mxu0 0.0
    %3130 = vmatprep.subr.mxu0 0.0
    %3131 = vmatpush2.msra.mxu0 0.0
    %3132 = vmatprep.subr.mxu0 0.0
    %3133 = vmatpush2.msra.mxu0 0.0
    %3134 = vmatprep.subr.mxu0 0.0
    %3135 = vmatpush2.msra.mxu0 0.0
    %3136 = vmatprep.subr.mxu0 0.0
    %3137 = vmatpush2.msra.mxu0 0.0
    %3138 = vmatprep.subr.mxu0 0.0
    %3139 = vmatpush2.msra.mxu0 0.0
    %3140 = vmatprep.subr.mxu0 0.0
    %3141 = vmatpush2.msra.mxu0 0.0
    %3142 = vmatprep.subr.mxu0 0.0
    %3143 = vmatpush2.msra.mxu0 0.0
    %3144 = vmatprep.subr.mxu0 0.0
    %3145 = vmatpush2.msra.mxu0 0.0
    %3146 = vmatprep.subr.mxu0 0.0
    %3147 = vmatpush2.msra.mxu0 0.0
    %3148 = vmatprep.subr.mxu0 0.0
    %3149 = vmatpush2.msra.mxu0 0.0
    %3150 = vmatprep.subr.mxu0 0.0
    %3151 = vmatpush2.msra.mxu0 0.0
    %3152 = vmatprep.subr.mxu0 0.0
    %3153 = vmatpush2.msra.mxu0 0.0
    %3154 = vmatprep.subr.mxu0 0.0
    %3155 = vmatpush2.msra.mxu0 0.0
    %3156 = vmatprep.subr.mxu0 0.0
    %3157 = vmatpush2.msra.mxu0 0.0
    %3158 = vmatprep.subr.mxu0 0.0
    %3159 = vmatpush2.msra.mxu0 0.0
    %3160 = vmatprep.mubr.f32.mxu0 0.0
    %3161 = vmatmul.mubr.f32.gmra.mxu0 %v3091
    %v3162 = vpop.f32.mrf.mxu0
    %v3163 = vadd.f32 0.0, %v3162
    %v3164 = vpop.f32.mrf.mxu0
    %v3165 = vadd.f32 0.0, %v3164
    %3166 = vdwg.mxu0
    %3167 = vmatprep.subr.mxu0 %v2596
    %3168 = vmatpush1.msra.mxu0 %v2595
    %3169 = vmatprep.subr.mxu0 %v2592
    %3170 = vmatpush1.msra.mxu0 %v2591
    %3171 = vmatprep.subr.mxu0 %v2588
    %3172 = vmatpush1.msra.mxu0 %v2587
    %3173 = vmatprep.subr.mxu0 %v2584
    %3174 = vmatpush1.msra.mxu0 %v2583
    %3175 = vmatprep.subr.mxu0 %v2580
    %3176 = vmatpush1.msra.mxu0 %v2579
    %3177 = vmatprep.subr.mxu0 %v2576
    %3178 = vmatpush1.msra.mxu0 %v2575
    %3179 = vmatprep.subr.mxu0 %v2572
    %3180 = vmatpush1.msra.mxu0 %v2571
    %3181 = vmatprep.subr.mxu0 %v2568
    %3182 = vmatpush1.msra.mxu0 %v2567
    %3183 = vmatprep.subr.mxu0 %v2564
    %3184 = vmatpush1.msra.mxu0 %v2563
    %3185 = vmatprep.subr.mxu0 %v2560
    %3186 = vmatpush1.msra.mxu0 %v2559
    %3187 = vmatprep.subr.mxu0 %v2556
    %3188 = vmatpush1.msra.mxu0 %v2555
    %3189 = vmatprep.subr.mxu0 %v2552
    %3190 = vmatpush1.msra.mxu0 %v2551
    %3191 = vmatprep.subr.mxu0 %v2548
    %3192 = vmatpush1.msra.mxu0 %v2547
    %3193 = vmatprep.subr.mxu0 %v2544
    %3194 = vmatpush1.msra.mxu0 %v2543
    %3195 = vmatprep.subr.mxu0 %v2540
    %3196 = vmatpush1.msra.mxu0 %v2539
    %3197 = vmatprep.subr.mxu0 %v2536
    %3198 = vmatpush1.msra.mxu0 %v2535
    %3199 = vmatprep.subr.mxu0 0.0
    %3200 = vmatpush2.msra.mxu0 0.0
    %3201 = vmatprep.subr.mxu0 0.0
    %3202 = vmatpush2.msra.mxu0 0.0
    %3203 = vmatprep.subr.mxu0 0.0
    %3204 = vmatpush2.msra.mxu0 0.0
    %3205 = vmatprep.subr.mxu0 0.0
    %3206 = vmatpush2.msra.mxu0 0.0
    %3207 = vmatprep.subr.mxu0 0.0
    %3208 = vmatpush2.msra.mxu0 0.0
    %3209 = vmatprep.subr.mxu0 0.0
    %3210 = vmatpush2.msra.mxu0 0.0
    %3211 = vmatprep.subr.mxu0 0.0
    %3212 = vmatpush2.msra.mxu0 0.0
    %3213 = vmatprep.subr.mxu0 0.0
    %3214 = vmatpush2.msra.mxu0 0.0
    %3215 = vmatprep.subr.mxu0 0.0
    %3216 = vmatpush2.msra.mxu0 0.0
    %3217 = vmatprep.subr.mxu0 0.0
    %3218 = vmatpush2.msra.mxu0 0.0
    %3219 = vmatprep.subr.mxu0 0.0
    %3220 = vmatpush2.msra.mxu0 0.0
    %3221 = vmatprep.subr.mxu0 0.0
    %3222 = vmatpush2.msra.mxu0 0.0
    %3223 = vmatprep.subr.mxu0 0.0
    %3224 = vmatpush2.msra.mxu0 0.0
    %3225 = vmatprep.subr.mxu0 0.0
    %3226 = vmatpush2.msra.mxu0 0.0
    %3227 = vmatprep.subr.mxu0 0.0
    %3228 = vmatpush2.msra.mxu0 0.0
    %3229 = vmatprep.subr.mxu0 0.0
    %3230 = vmatpush2.msra.mxu0 0.0
    %3231 = vmatprep.mubr.f32.mxu0 0.0
    %3232 = vmatmul.mubr.f32.gmra.mxu0 %v3091
    %v3233 = vpop.f32.mrf.mxu0
    %v3234 = vadd.f32 0.0, %v3233
    %v3235 = vpop.f32.mrf.mxu0
    %v3236 = vadd.f32 0.0, %v3235
    %3237 = vdwg.mxu0
    %v3238 = vadd.f32 %v3092, %v3163
    %v3239 = vadd.f32 %v3093, %v3165
    %v3240 = vadd.f32 %v3094, %v3234
    %v3241 = vadd.f32 %v3095, %v3236
    %v3242 = vtanh.pop %v3238
    %v3243 = vtanh.pop %v3239
    %v3244 = vtanh.pop %v3240
    %v3245 = vtanh.pop %v3241
    %v3246 = vmul.f32 %v3242, 0.5
    %v3247 = vadd.f32 %v3246, 0.5
    %v3248 = vmul.f32 %v3243, 0.5
    %v3249 = vadd.f32 %v3248, 0.5
    %v3250 = vmul.f32 %v3245, 0.5
    %v3251 = vadd.f32 %v3250, 0.5
    %v3252 = vmul.f32 %v3249, %v3089
    %v3253 = vmul.f32 %v3247, %v3244
    %v3254 = vadd.f32 %v3252, %v3253
    %v3255 = vtanh.pop %v3254
    %v3256 = vmul.f32 %v3251, %v3255
    %v3257 = vld [vmem:[%s1166] sm:$0xff]
    %v3258 = vld [vmem:[%s1166 + $0x8] sm:$0xff]
    %v3259 = vld [vmem:[%s1166 + $0x10] sm:$0xff]
    %v3260 = vld [vmem:[%s1166 + $0x18] sm:$0xff]
    %3261 = vmatprep.subr.mxu0 %v2594
    %3262 = vmatpush1.msra.mxu0 %v2593
    %3263 = vmatprep.subr.mxu0 %v2590
    %3264 = vmatpush1.msra.mxu0 %v2589
    %3265 = vmatprep.subr.mxu0 %v2586
    %3266 = vmatpush1.msra.mxu0 %v2585
    %3267 = vmatprep.subr.mxu0 %v2582
    %3268 = vmatpush1.msra.mxu0 %v2581
    %3269 = vmatprep.subr.mxu0 %v2578
    %3270 = vmatpush1.msra.mxu0 %v2577
    %3271 = vmatprep.subr.mxu0 %v2574
    %3272 = vmatpush1.msra.mxu0 %v2573
    %3273 = vmatprep.subr.mxu0 %v2570
    %3274 = vmatpush1.msra.mxu0 %v2569
    %3275 = vmatprep.subr.mxu0 %v2566
    %3276 = vmatpush1.msra.mxu0 %v2565
    %3277 = vmatprep.subr.mxu0 %v2562
    %3278 = vmatpush1.msra.mxu0 %v2561
    %3279 = vmatprep.subr.mxu0 %v2558
    %3280 = vmatpush1.msra.mxu0 %v2557
    %3281 = vmatprep.subr.mxu0 %v2554
    %3282 = vmatpush1.msra.mxu0 %v2553
    %3283 = vmatprep.subr.mxu0 %v2550
    %3284 = vmatpush1.msra.mxu0 %v2549
    %3285 = vmatprep.subr.mxu0 %v2546
    %3286 = vmatpush1.msra.mxu0 %v2545
    %3287 = vmatprep.subr.mxu0 %v2542
    %3288 = vmatpush1.msra.mxu0 %v2541
    %3289 = vmatprep.subr.mxu0 %v2538
    %3290 = vmatpush1.msra.mxu0 %v2537
    %3291 = vmatprep.subr.mxu0 %v2534
    %3292 = vmatpush1.msra.mxu0 %v2533
    %3293 = vmatprep.subr.mxu0 0.0
    %3294 = vmatpush2.msra.mxu0 0.0
    %3295 = vmatprep.subr.mxu0 0.0
    %3296 = vmatpush2.msra.mxu0 0.0
    %3297 = vmatprep.subr.mxu0 0.0
    %3298 = vmatpush2.msra.mxu0 0.0
    %3299 = vmatprep.subr.mxu0 0.0
    %3300 = vmatpush2.msra.mxu0 0.0
    %3301 = vmatprep.subr.mxu0 0.0
    %3302 = vmatpush2.msra.mxu0 0.0
    %3303 = vmatprep.subr.mxu0 0.0
    %3304 = vmatpush2.msra.mxu0 0.0
    %3305 = vmatprep.subr.mxu0 0.0
    %3306 = vmatpush2.msra.mxu0 0.0
    %3307 = vmatprep.subr.mxu0 0.0
    %3308 = vmatpush2.msra.mxu0 0.0
    %3309 = vmatprep.subr.mxu0 0.0
    %3310 = vmatpush2.msra.mxu0 0.0
    %3311 = vmatprep.subr.mxu0 0.0
    %3312 = vmatpush2.msra.mxu0 0.0
    %3313 = vmatprep.subr.mxu0 0.0
    %3314 = vmatpush2.msra.mxu0 0.0
    %3315 = vmatprep.subr.mxu0 0.0
    %3316 = vmatpush2.msra.mxu0 0.0
    %3317 = vmatprep.subr.mxu0 0.0
    %3318 = vmatpush2.msra.mxu0 0.0
    %3319 = vmatprep.subr.mxu0 0.0
    %3320 = vmatpush2.msra.mxu0 0.0
    %3321 = vmatprep.subr.mxu0 0.0
    %3322 = vmatpush2.msra.mxu0 0.0
    %3323 = vmatprep.subr.mxu0 0.0
    %3324 = vmatpush2.msra.mxu0 0.0
    %3325 = vmatprep.mubr.f32.mxu0 0.0
    %3326 = vmatmul.mubr.f32.gmra.mxu0 %v3256
    %v3327 = vpop.f32.mrf.mxu0
    %v3328 = vadd.f32 0.0, %v3327
    %v3329 = vpop.f32.mrf.mxu0
    %v3330 = vadd.f32 0.0, %v3329
    %3331 = vdwg.mxu0
    %3332 = vmatprep.subr.mxu0 %v2596
    %3333 = vmatpush1.msra.mxu0 %v2595
    %3334 = vmatprep.subr.mxu0 %v2592
    %3335 = vmatpush1.msra.mxu0 %v2591
    %3336 = vmatprep.subr.mxu0 %v2588
    %3337 = vmatpush1.msra.mxu0 %v2587
    %3338 = vmatprep.subr.mxu0 %v2584
    %3339 = vmatpush1.msra.mxu0 %v2583
    %3340 = vmatprep.subr.mxu0 %v2580
    %3341 = vmatpush1.msra.mxu0 %v2579
    %3342 = vmatprep.subr.mxu0 %v2576
    %3343 = vmatpush1.msra.mxu0 %v2575
    %3344 = vmatprep.subr.mxu0 %v2572
    %3345 = vmatpush1.msra.mxu0 %v2571
    %3346 = vmatprep.subr.mxu0 %v2568
    %3347 = vmatpush1.msra.mxu0 %v2567
    %3348 = vmatprep.subr.mxu0 %v2564
    %3349 = vmatpush1.msra.mxu0 %v2563
    %3350 = vmatprep.subr.mxu0 %v2560
    %3351 = vmatpush1.msra.mxu0 %v2559
    %3352 = vmatprep.subr.mxu0 %v2556
    %3353 = vmatpush1.msra.mxu0 %v2555
    %3354 = vmatprep.subr.mxu0 %v2552
    %3355 = vmatpush1.msra.mxu0 %v2551
    %3356 = vmatprep.subr.mxu0 %v2548
    %3357 = vmatpush1.msra.mxu0 %v2547
    %3358 = vmatprep.subr.mxu0 %v2544
    %3359 = vmatpush1.msra.mxu0 %v2543
    %3360 = vmatprep.subr.mxu0 %v2540
    %3361 = vmatpush1.msra.mxu0 %v2539
    %3362 = vmatprep.subr.mxu0 %v2536
    %3363 = vmatpush1.msra.mxu0 %v2535
    %3364 = vmatprep.subr.mxu0 0.0
    %3365 = vmatpush2.msra.mxu0 0.0
    %3366 = vmatprep.subr.mxu0 0.0
    %3367 = vmatpush2.msra.mxu0 0.0
    %3368 = vmatprep.subr.mxu0 0.0
    %3369 = vmatpush2.msra.mxu0 0.0
    %3370 = vmatprep.subr.mxu0 0.0
    %3371 = vmatpush2.msra.mxu0 0.0
    %3372 = vmatprep.subr.mxu0 0.0
    %3373 = vmatpush2.msra.mxu0 0.0
    %3374 = vmatprep.subr.mxu0 0.0
    %3375 = vmatpush2.msra.mxu0 0.0
    %3376 = vmatprep.subr.mxu0 0.0
    %3377 = vmatpush2.msra.mxu0 0.0
    %3378 = vmatprep.subr.mxu0 0.0
    %3379 = vmatpush2.msra.mxu0 0.0
    %3380 = vmatprep.subr.mxu0 0.0
    %3381 = vmatpush2.msra.mxu0 0.0
    %3382 = vmatprep.subr.mxu0 0.0
    %3383 = vmatpush2.msra.mxu0 0.0
    %3384 = vmatprep.subr.mxu0 0.0
    %3385 = vmatpush2.msra.mxu0 0.0
    %3386 = vmatprep.subr.mxu0 0.0
    %3387 = vmatpush2.msra.mxu0 0.0
    %3388 = vmatprep.subr.mxu0 0.0
    %3389 = vmatpush2.msra.mxu0 0.0
    %3390 = vmatprep.subr.mxu0 0.0
    %3391 = vmatpush2.msra.mxu0 0.0
    %3392 = vmatprep.subr.mxu0 0.0
    %3393 = vmatpush2.msra.mxu0 0.0
    %3394 = vmatprep.subr.mxu0 0.0
    %3395 = vmatpush2.msra.mxu0 0.0
    %3396 = vmatprep.mubr.f32.mxu0 0.0
    %3397 = vmatmul.mubr.f32.gmra.mxu0 %v3256
    %v3398 = vpop.f32.mrf.mxu0
    %v3399 = vadd.f32 0.0, %v3398
    %v3400 = vpop.f32.mrf.mxu0
    %v3401 = vadd.f32 0.0, %v3400
    %3402 = vdwg.mxu0
    %v3403 = vadd.f32 %v3257, %v3328
    %v3404 = vadd.f32 %v3258, %v3330
    %v3405 = vadd.f32 %v3259, %v3399
    %v3406 = vadd.f32 %v3260, %v3401
    %v3407 = vtanh.pop %v3403
    %v3408 = vtanh.pop %v3404
    %v3409 = vtanh.pop %v3405
    %v3410 = vtanh.pop %v3406
    %v3411 = vmul.f32 %v3407, 0.5
    %v3412 = vadd.f32 %v3411, 0.5
    %v3413 = vmul.f32 %v3408, 0.5
    %v3414 = vadd.f32 %v3413, 0.5
    %v3415 = vmul.f32 %v3410, 0.5
    %v3416 = vadd.f32 %v3415, 0.5
    %v3417 = vmul.f32 %v3414, %v3254
    %v3418 = vmul.f32 %v3412, %v3409
    %v3419 = vadd.f32 %v3417, %v3418
    %v3420 = vtanh.pop %v3419
    %v3421 = vmul.f32 %v3416, %v3420
    %v3422 = vld [vmem:[%s1338] sm:$0xff]
    %v3423 = vld [vmem:[%s1338 + $0x8] sm:$0xff]
    %v3424 = vld [vmem:[%s1338 + $0x10] sm:$0xff]
    %v3425 = vld [vmem:[%s1338 + $0x18] sm:$0xff]
    %3426 = vmatprep.subr.mxu0 %v2594
    %3427 = vmatpush1.msra.mxu0 %v2593
    %3428 = vmatprep.subr.mxu0 %v2590
    %3429 = vmatpush1.msra.mxu0 %v2589
    %3430 = vmatprep.subr.mxu0 %v2586
    %3431 = vmatpush1.msra.mxu0 %v2585
    %3432 = vmatprep.subr.mxu0 %v2582
    %3433 = vmatpush1.msra.mxu0 %v2581
    %3434 = vmatprep.subr.mxu0 %v2578
    %3435 = vmatpush1.msra.mxu0 %v2577
    %3436 = vmatprep.subr.mxu0 %v2574
    %3437 = vmatpush1.msra.mxu0 %v2573
    %3438 = vmatprep.subr.mxu0 %v2570
    %3439 = vmatpush1.msra.mxu0 %v2569
    %3440 = vmatprep.subr.mxu0 %v2566
    %3441 = vmatpush1.msra.mxu0 %v2565
    %3442 = vmatprep.subr.mxu0 %v2562
    %3443 = vmatpush1.msra.mxu0 %v2561
    %3444 = vmatprep.subr.mxu0 %v2558
    %3445 = vmatpush1.msra.mxu0 %v2557
    %3446 = vmatprep.subr.mxu0 %v2554
    %3447 = vmatpush1.msra.mxu0 %v2553
    %3448 = vmatprep.subr.mxu0 %v2550
    %3449 = vmatpush1.msra.mxu0 %v2549
    %3450 = vmatprep.subr.mxu0 %v2546
    %3451 = vmatpush1.msra.mxu0 %v2545
    %3452 = vmatprep.subr.mxu0 %v2542
    %3453 = vmatpush1.msra.mxu0 %v2541
    %3454 = vmatprep.subr.mxu0 %v2538
    %3455 = vmatpush1.msra.mxu0 %v2537
    %3456 = vmatprep.subr.mxu0 %v2534
    %3457 = vmatpush1.msra.mxu0 %v2533
    %3458 = vmatprep.subr.mxu0 0.0
    %3459 = vmatpush2.msra.mxu0 0.0
    %3460 = vmatprep.subr.mxu0 0.0
    %3461 = vmatpush2.msra.mxu0 0.0
    %3462 = vmatprep.subr.mxu0 0.0
    %3463 = vmatpush2.msra.mxu0 0.0
    %3464 = vmatprep.subr.mxu0 0.0
    %3465 = vmatpush2.msra.mxu0 0.0
    %3466 = vmatprep.subr.mxu0 0.0
    %3467 = vmatpush2.msra.mxu0 0.0
    %3468 = vmatprep.subr.mxu0 0.0
    %3469 = vmatpush2.msra.mxu0 0.0
    %3470 = vmatprep.subr.mxu0 0.0
    %3471 = vmatpush2.msra.mxu0 0.0
    %3472 = vmatprep.subr.mxu0 0.0
    %3473 = vmatpush2.msra.mxu0 0.0
    %3474 = vmatprep.subr.mxu0 0.0
    %3475 = vmatpush2.msra.mxu0 0.0
    %3476 = vmatprep.subr.mxu0 0.0
    %3477 = vmatpush2.msra.mxu0 0.0
    %3478 = vmatprep.subr.mxu0 0.0
    %3479 = vmatpush2.msra.mxu0 0.0
    %3480 = vmatprep.subr.mxu0 0.0
    %3481 = vmatpush2.msra.mxu0 0.0
    %3482 = vmatprep.subr.mxu0 0.0
    %3483 = vmatpush2.msra.mxu0 0.0
    %3484 = vmatprep.subr.mxu0 0.0
    %3485 = vmatpush2.msra.mxu0 0.0
    %3486 = vmatprep.subr.mxu0 0.0
    %3487 = vmatpush2.msra.mxu0 0.0
    %3488 = vmatprep.subr.mxu0 0.0
    %3489 = vmatpush2.msra.mxu0 0.0
    %3490 = vmatprep.mubr.f32.mxu0 0.0
    %3491 = vmatmul.mubr.f32.gmra.mxu0 %v3421
    %v3492 = vpop.f32.mrf.mxu0
    %v3493 = vadd.f32 0.0, %v3492
    %v3494 = vpop.f32.mrf.mxu0
    %v3495 = vadd.f32 0.0, %v3494
    %3496 = vdwg.mxu0
    %3497 = vmatprep.subr.mxu0 %v2596
    %3498 = vmatpush1.msra.mxu0 %v2595
    %3499 = vmatprep.subr.mxu0 %v2592
    %3500 = vmatpush1.msra.mxu0 %v2591
    %3501 = vmatprep.subr.mxu0 %v2588
    %3502 = vmatpush1.msra.mxu0 %v2587
    %3503 = vmatprep.subr.mxu0 %v2584
    %3504 = vmatpush1.msra.mxu0 %v2583
    %3505 = vmatprep.subr.mxu0 %v2580
    %3506 = vmatpush1.msra.mxu0 %v2579
    %3507 = vmatprep.subr.mxu0 %v2576
    %3508 = vmatpush1.msra.mxu0 %v2575
    %3509 = vmatprep.subr.mxu0 %v2572
    %3510 = vmatpush1.msra.mxu0 %v2571
    %3511 = vmatprep.subr.mxu0 %v2568
    %3512 = vmatpush1.msra.mxu0 %v2567
    %3513 = vmatprep.subr.mxu0 %v2564
    %3514 = vmatpush1.msra.mxu0 %v2563
    %3515 = vmatprep.subr.mxu0 %v2560
    %3516 = vmatpush1.msra.mxu0 %v2559
    %3517 = vmatprep.subr.mxu0 %v2556
    %3518 = vmatpush1.msra.mxu0 %v2555
    %3519 = vmatprep.subr.mxu0 %v2552
    %3520 = vmatpush1.msra.mxu0 %v2551
    %3521 = vmatprep.subr.mxu0 %v2548
    %3522 = vmatpush1.msra.mxu0 %v2547
    %3523 = vmatprep.subr.mxu0 %v2544
    %3524 = vmatpush1.msra.mxu0 %v2543
    %3525 = vmatprep.subr.mxu0 %v2540
    %3526 = vmatpush1.msra.mxu0 %v2539
    %3527 = vmatprep.subr.mxu0 %v2536
    %3528 = vmatpush1.msra.mxu0 %v2535
    %3529 = vmatprep.subr.mxu0 0.0
    %3530 = vmatpush2.msra.mxu0 0.0
    %3531 = vmatprep.subr.mxu0 0.0
    %3532 = vmatpush2.msra.mxu0 0.0
    %3533 = vmatprep.subr.mxu0 0.0
    %3534 = vmatpush2.msra.mxu0 0.0
    %3535 = vmatprep.subr.mxu0 0.0
    %3536 = vmatpush2.msra.mxu0 0.0
    %3537 = vmatprep.subr.mxu0 0.0
    %3538 = vmatpush2.msra.mxu0 0.0
    %3539 = vmatprep.subr.mxu0 0.0
    %3540 = vmatpush2.msra.mxu0 0.0
    %3541 = vmatprep.subr.mxu0 0.0
    %3542 = vmatpush2.msra.mxu0 0.0
    %3543 = vmatprep.subr.mxu0 0.0
    %3544 = vmatpush2.msra.mxu0 0.0
    %3545 = vmatprep.subr.mxu0 0.0
    %3546 = vmatpush2.msra.mxu0 0.0
    %3547 = vmatprep.subr.mxu0 0.0
    %3548 = vmatpush2.msra.mxu0 0.0
    %3549 = vmatprep.subr.mxu0 0.0
    %3550 = vmatpush2.msra.mxu0 0.0
    %3551 = vmatprep.subr.mxu0 0.0
    %3552 = vmatpush2.msra.mxu0 0.0
    %3553 = vmatprep.subr.mxu0 0.0
    %3554 = vmatpush2.msra.mxu0 0.0
    %3555 = vmatprep.subr.mxu0 0.0
    %3556 = vmatpush2.msra.mxu0 0.0
    %3557 = vmatprep.subr.mxu0 0.0
    %3558 = vmatpush2.msra.mxu0 0.0
    %3559 = vmatprep.subr.mxu0 0.0
    %3560 = vmatpush2.msra.mxu0 0.0
    %3561 = vmatprep.mubr.f32.mxu0 0.0
    %3562 = vmatmul.mubr.f32.gmra.mxu0 %v3421
    %v3563 = vpop.f32.mrf.mxu0
    %v3564 = vadd.f32 0.0, %v3563
    %v3565 = vpop.f32.mrf.mxu0
    %v3566 = vadd.f32 0.0, %v3565
    %3567 = vdwg.mxu0
    %v3568 = vadd.f32 %v3422, %v3493
    %v3569 = vadd.f32 %v3423, %v3495
    %v3570 = vadd.f32 %v3424, %v3564
    %v3571 = vadd.f32 %v3425, %v3566
    %v3572 = vtanh.pop %v3568
    %v3573 = vtanh.pop %v3569
    %v3574 = vtanh.pop %v3570
    %v3575 = vtanh.pop %v3571
    %v3576 = vmul.f32 %v3572, 0.5
    %v3577 = vadd.f32 %v3576, 0.5
    %v3578 = vmul.f32 %v3573, 0.5
    %v3579 = vadd.f32 %v3578, 0.5
    %v3580 = vmul.f32 %v3575, 0.5
    %v3581 = vadd.f32 %v3580, 0.5
    %v3582 = vmul.f32 %v3579, %v3419
    %v3583 = vmul.f32 %v3577, %v3574
    %v3584 = vadd.f32 %v3582, %v3583
    %v3585 = vtanh.pop %v3584
    %v3586 = vmul.f32 %v3581, %v3585
    %v3587 = vld [vmem:[%s1510] sm:$0xff]
    %v3588 = vld [vmem:[%s1510 + $0x8] sm:$0xff]
    %v3589 = vld [vmem:[%s1510 + $0x10] sm:$0xff]
    %v3590 = vld [vmem:[%s1510 + $0x18] sm:$0xff]
    %3591 = vmatprep.subr.mxu0 %v2594
    %3592 = vmatpush1.msra.mxu0 %v2593
    %3593 = vmatprep.subr.mxu0 %v2590
    %3594 = vmatpush1.msra.mxu0 %v2589
    %3595 = vmatprep.subr.mxu0 %v2586
    %3596 = vmatpush1.msra.mxu0 %v2585
    %3597 = vmatprep.subr.mxu0 %v2582
    %3598 = vmatpush1.msra.mxu0 %v2581
    %3599 = vmatprep.subr.mxu0 %v2578
    %3600 = vmatpush1.msra.mxu0 %v2577
    %3601 = vmatprep.subr.mxu0 %v2574
    %3602 = vmatpush1.msra.mxu0 %v2573
    %3603 = vmatprep.subr.mxu0 %v2570
    %3604 = vmatpush1.msra.mxu0 %v2569
    %3605 = vmatprep.subr.mxu0 %v2566
    %3606 = vmatpush1.msra.mxu0 %v2565
    %3607 = vmatprep.subr.mxu0 %v2562
    %3608 = vmatpush1.msra.mxu0 %v2561
    %3609 = vmatprep.subr.mxu0 %v2558
    %3610 = vmatpush1.msra.mxu0 %v2557
    %3611 = vmatprep.subr.mxu0 %v2554
    %3612 = vmatpush1.msra.mxu0 %v2553
    %3613 = vmatprep.subr.mxu0 %v2550
    %3614 = vmatpush1.msra.mxu0 %v2549
    %3615 = vmatprep.subr.mxu0 %v2546
    %3616 = vmatpush1.msra.mxu0 %v2545
    %3617 = vmatprep.subr.mxu0 %v2542
    %3618 = vmatpush1.msra.mxu0 %v2541
    %3619 = vmatprep.subr.mxu0 %v2538
    %3620 = vmatpush1.msra.mxu0 %v2537
    %3621 = vmatprep.subr.mxu0 %v2534
    %3622 = vmatpush1.msra.mxu0 %v2533
    %3623 = vmatprep.subr.mxu0 0.0
    %3624 = vmatpush2.msra.mxu0 0.0
    %3625 = vmatprep.subr.mxu0 0.0
    %3626 = vmatpush2.msra.mxu0 0.0
    %3627 = vmatprep.subr.mxu0 0.0
    %3628 = vmatpush2.msra.mxu0 0.0
    %3629 = vmatprep.subr.mxu0 0.0
    %3630 = vmatpush2.msra.mxu0 0.0
    %3631 = vmatprep.subr.mxu0 0.0
    %3632 = vmatpush2.msra.mxu0 0.0
    %3633 = vmatprep.subr.mxu0 0.0
    %3634 = vmatpush2.msra.mxu0 0.0
    %3635 = vmatprep.subr.mxu0 0.0
    %3636 = vmatpush2.msra.mxu0 0.0
    %3637 = vmatprep.subr.mxu0 0.0
    %3638 = vmatpush2.msra.mxu0 0.0
    %3639 = vmatprep.subr.mxu0 0.0
    %3640 = vmatpush2.msra.mxu0 0.0
    %3641 = vmatprep.subr.mxu0 0.0
    %3642 = vmatpush2.msra.mxu0 0.0
    %3643 = vmatprep.subr.mxu0 0.0
    %3644 = vmatpush2.msra.mxu0 0.0
    %3645 = vmatprep.subr.mxu0 0.0
    %3646 = vmatpush2.msra.mxu0 0.0
    %3647 = vmatprep.subr.mxu0 0.0
    %3648 = vmatpush2.msra.mxu0 0.0
    %3649 = vmatprep.subr.mxu0 0.0
    %3650 = vmatpush2.msra.mxu0 0.0
    %3651 = vmatprep.subr.mxu0 0.0
    %3652 = vmatpush2.msra.mxu0 0.0
    %3653 = vmatprep.subr.mxu0 0.0
    %3654 = vmatpush2.msra.mxu0 0.0
    %3655 = vmatprep.mubr.f32.mxu0 0.0
    %3656 = vmatmul.mubr.f32.gmra.mxu0 %v3586
    %v3657 = vpop.f32.mrf.mxu0
    %v3658 = vadd.f32 0.0, %v3657
    %v3659 = vpop.f32.mrf.mxu0
    %v3660 = vadd.f32 0.0, %v3659
    %3661 = vdwg.mxu0
    %3662 = vmatprep.subr.mxu0 %v2596
    %3663 = vmatpush1.msra.mxu0 %v2595
    %3664 = vmatprep.subr.mxu0 %v2592
    %3665 = vmatpush1.msra.mxu0 %v2591
    %3666 = vmatprep.subr.mxu0 %v2588
    %3667 = vmatpush1.msra.mxu0 %v2587
    %3668 = vmatprep.subr.mxu0 %v2584
    %3669 = vmatpush1.msra.mxu0 %v2583
    %3670 = vmatprep.subr.mxu0 %v2580
    %3671 = vmatpush1.msra.mxu0 %v2579
    %3672 = vmatprep.subr.mxu0 %v2576
    %3673 = vmatpush1.msra.mxu0 %v2575
    %3674 = vmatprep.subr.mxu0 %v2572
    %3675 = vmatpush1.msra.mxu0 %v2571
    %3676 = vmatprep.subr.mxu0 %v2568
    %3677 = vmatpush1.msra.mxu0 %v2567
    %3678 = vmatprep.subr.mxu0 %v2564
    %3679 = vmatpush1.msra.mxu0 %v2563
    %3680 = vmatprep.subr.mxu0 %v2560
    %3681 = vmatpush1.msra.mxu0 %v2559
    %3682 = vmatprep.subr.mxu0 %v2556
    %3683 = vmatpush1.msra.mxu0 %v2555
    %3684 = vmatprep.subr.mxu0 %v2552
    %3685 = vmatpush1.msra.mxu0 %v2551
    %3686 = vmatprep.subr.mxu0 %v2548
    %3687 = vmatpush1.msra.mxu0 %v2547
    %3688 = vmatprep.subr.mxu0 %v2544
    %3689 = vmatpush1.msra.mxu0 %v2543
    %3690 = vmatprep.subr.mxu0 %v2540
    %3691 = vmatpush1.msra.mxu0 %v2539
    %3692 = vmatprep.subr.mxu0 %v2536
    %3693 = vmatpush1.msra.mxu0 %v2535
    %3694 = vmatprep.subr.mxu0 0.0
    %3695 = vmatpush2.msra.mxu0 0.0
    %3696 = vmatprep.subr.mxu0 0.0
    %3697 = vmatpush2.msra.mxu0 0.0
    %3698 = vmatprep.subr.mxu0 0.0
    %3699 = vmatpush2.msra.mxu0 0.0
    %3700 = vmatprep.subr.mxu0 0.0
    %3701 = vmatpush2.msra.mxu0 0.0
    %3702 = vmatprep.subr.mxu0 0.0
    %3703 = vmatpush2.msra.mxu0 0.0
    %3704 = vmatprep.subr.mxu0 0.0
    %3705 = vmatpush2.msra.mxu0 0.0
    %3706 = vmatprep.subr.mxu0 0.0
    %3707 = vmatpush2.msra.mxu0 0.0
    %3708 = vmatprep.subr.mxu0 0.0
    %3709 = vmatpush2.msra.mxu0 0.0
    %3710 = vmatprep.subr.mxu0 0.0
    %3711 = vmatpush2.msra.mxu0 0.0
    %3712 = vmatprep.subr.mxu0 0.0
    %3713 = vmatpush2.msra.mxu0 0.0
    %3714 = vmatprep.subr.mxu0 0.0
    %3715 = vmatpush2.msra.mxu0 0.0
    %3716 = vmatprep.subr.mxu0 0.0
    %3717 = vmatpush2.msra.mxu0 0.0
    %3718 = vmatprep.subr.mxu0 0.0
    %3719 = vmatpush2.msra.mxu0 0.0
    %3720 = vmatprep.subr.mxu0 0.0
    %3721 = vmatpush2.msra.mxu0 0.0
    %3722 = vmatprep.subr.mxu0 0.0
    %3723 = vmatpush2.msra.mxu0 0.0
    %3724 = vmatprep.subr.mxu0 0.0
    %3725 = vmatpush2.msra.mxu0 0.0
    %3726 = vmatprep.mubr.f32.mxu0 0.0
    %3727 = vmatmul.mubr.f32.gmra.mxu0 %v3586
    %v3728 = vpop.f32.mrf.mxu0
    %v3729 = vadd.f32 0.0, %v3728
    %v3730 = vpop.f32.mrf.mxu0
    %v3731 = vadd.f32 0.0, %v3730
    %3732 = vdwg.mxu0
    %v3733 = vadd.f32 %v3587, %v3658
    %v3734 = vadd.f32 %v3588, %v3660
    %v3735 = vadd.f32 %v3589, %v3729
    %v3736 = vadd.f32 %v3590, %v3731
    %v3737 = vtanh.pop %v3733
    %v3738 = vtanh.pop %v3734
    %v3739 = vtanh.pop %v3735
    %v3740 = vtanh.pop %v3736
    %v3741 = vmul.f32 %v3737, 0.5
    %v3742 = vadd.f32 %v3741, 0.5
    %v3743 = vmul.f32 %v3738, 0.5
    %v3744 = vadd.f32 %v3743, 0.5
    %v3745 = vmul.f32 %v3740, 0.5
    %v3746 = vadd.f32 %v3745, 0.5
    %v3747 = vmul.f32 %v3744, %v3584
    %v3748 = vmul.f32 %v3742, %v3739
    %v3749 = vadd.f32 %v3747, %v3748
    %v3750 = vtanh.pop %v3749
    %v3751 = vmul.f32 %v3746, %v3750
    %v3752 = vld [vmem:[%s1682] sm:$0xff]
    %v3753 = vld [vmem:[%s1682 + $0x8] sm:$0xff]
    %v3754 = vld [vmem:[%s1682 + $0x10] sm:$0xff]
    %v3755 = vld [vmem:[%s1682 + $0x18] sm:$0xff]
    %3756 = vmatprep.subr.mxu0 %v2594
    %3757 = vmatpush1.msra.mxu0 %v2593
    %3758 = vmatprep.subr.mxu0 %v2590
    %3759 = vmatpush1.msra.mxu0 %v2589
    %3760 = vmatprep.subr.mxu0 %v2586
    %3761 = vmatpush1.msra.mxu0 %v2585
    %3762 = vmatprep.subr.mxu0 %v2582
    %3763 = vmatpush1.msra.mxu0 %v2581
    %3764 = vmatprep.subr.mxu0 %v2578
    %3765 = vmatpush1.msra.mxu0 %v2577
    %3766 = vmatprep.subr.mxu0 %v2574
    %3767 = vmatpush1.msra.mxu0 %v2573
    %3768 = vmatprep.subr.mxu0 %v2570
    %3769 = vmatpush1.msra.mxu0 %v2569
    %3770 = vmatprep.subr.mxu0 %v2566
    %3771 = vmatpush1.msra.mxu0 %v2565
    %3772 = vmatprep.subr.mxu0 %v2562
    %3773 = vmatpush1.msra.mxu0 %v2561
    %3774 = vmatprep.subr.mxu0 %v2558
    %3775 = vmatpush1.msra.mxu0 %v2557
    %3776 = vmatprep.subr.mxu0 %v2554
    %3777 = vmatpush1.msra.mxu0 %v2553
    %3778 = vmatprep.subr.mxu0 %v2550
    %3779 = vmatpush1.msra.mxu0 %v2549
    %3780 = vmatprep.subr.mxu0 %v2546
    %3781 = vmatpush1.msra.mxu0 %v2545
    %3782 = vmatprep.subr.mxu0 %v2542
    %3783 = vmatpush1.msra.mxu0 %v2541
    %3784 = vmatprep.subr.mxu0 %v2538
    %3785 = vmatpush1.msra.mxu0 %v2537
    %3786 = vmatprep.subr.mxu0 %v2534
    %3787 = vmatpush1.msra.mxu0 %v2533
    %3788 = vmatprep.subr.mxu0 0.0
    %3789 = vmatpush2.msra.mxu0 0.0
    %3790 = vmatprep.subr.mxu0 0.0
    %3791 = vmatpush2.msra.mxu0 0.0
    %3792 = vmatprep.subr.mxu0 0.0
    %3793 = vmatpush2.msra.mxu0 0.0
    %3794 = vmatprep.subr.mxu0 0.0
    %3795 = vmatpush2.msra.mxu0 0.0
    %3796 = vmatprep.subr.mxu0 0.0
    %3797 = vmatpush2.msra.mxu0 0.0
    %3798 = vmatprep.subr.mxu0 0.0
    %3799 = vmatpush2.msra.mxu0 0.0
    %3800 = vmatprep.subr.mxu0 0.0
    %3801 = vmatpush2.msra.mxu0 0.0
    %3802 = vmatprep.subr.mxu0 0.0
    %3803 = vmatpush2.msra.mxu0 0.0
    %3804 = vmatprep.subr.mxu0 0.0
    %3805 = vmatpush2.msra.mxu0 0.0
    %3806 = vmatprep.subr.mxu0 0.0
    %3807 = vmatpush2.msra.mxu0 0.0
    %3808 = vmatprep.subr.mxu0 0.0
    %3809 = vmatpush2.msra.mxu0 0.0
    %3810 = vmatprep.subr.mxu0 0.0
    %3811 = vmatpush2.msra.mxu0 0.0
    %3812 = vmatprep.subr.mxu0 0.0
    %3813 = vmatpush2.msra.mxu0 0.0
    %3814 = vmatprep.subr.mxu0 0.0
    %3815 = vmatpush2.msra.mxu0 0.0
    %3816 = vmatprep.subr.mxu0 0.0
    %3817 = vmatpush2.msra.mxu0 0.0
    %3818 = vmatprep.subr.mxu0 0.0
    %3819 = vmatpush2.msra.mxu0 0.0
    %3820 = vmatprep.mubr.f32.mxu0 0.0
    %3821 = vmatmul.mubr.f32.gmra.mxu0 %v3751
    %v3822 = vpop.f32.mrf.mxu0
    %v3823 = vadd.f32 0.0, %v3822
    %v3824 = vpop.f32.mrf.mxu0
    %v3825 = vadd.f32 0.0, %v3824
    %3826 = vdwg.mxu0
    %3827 = vmatprep.subr.mxu0 %v2596
    %3828 = vmatpush1.msra.mxu0 %v2595
    %3829 = vmatprep.subr.mxu0 %v2592
    %3830 = vmatpush1.msra.mxu0 %v2591
    %3831 = vmatprep.subr.mxu0 %v2588
    %3832 = vmatpush1.msra.mxu0 %v2587
    %3833 = vmatprep.subr.mxu0 %v2584
    %3834 = vmatpush1.msra.mxu0 %v2583
    %3835 = vmatprep.subr.mxu0 %v2580
    %3836 = vmatpush1.msra.mxu0 %v2579
    %3837 = vmatprep.subr.mxu0 %v2576
    %3838 = vmatpush1.msra.mxu0 %v2575
    %3839 = vmatprep.subr.mxu0 %v2572
    %3840 = vmatpush1.msra.mxu0 %v2571
    %3841 = vmatprep.subr.mxu0 %v2568
    %3842 = vmatpush1.msra.mxu0 %v2567
    %3843 = vmatprep.subr.mxu0 %v2564
    %3844 = vmatpush1.msra.mxu0 %v2563
    %3845 = vmatprep.subr.mxu0 %v2560
    %3846 = vmatpush1.msra.mxu0 %v2559
    %3847 = vmatprep.subr.mxu0 %v2556
    %3848 = vmatpush1.msra.mxu0 %v2555
    %3849 = vmatprep.subr.mxu0 %v2552
    %3850 = vmatpush1.msra.mxu0 %v2551
    %3851 = vmatprep.subr.mxu0 %v2548
    %3852 = vmatpush1.msra.mxu0 %v2547
    %3853 = vmatprep.subr.mxu0 %v2544
    %3854 = vmatpush1.msra.mxu0 %v2543
    %3855 = vmatprep.subr.mxu0 %v2540
    %3856 = vmatpush1.msra.mxu0 %v2539
    %3857 = vmatprep.subr.mxu0 %v2536
    %3858 = vmatpush1.msra.mxu0 %v2535
    %3859 = vmatprep.subr.mxu0 0.0
    %3860 = vmatpush2.msra.mxu0 0.0
    %3861 = vmatprep.subr.mxu0 0.0
    %3862 = vmatpush2.msra.mxu0 0.0
    %3863 = vmatprep.subr.mxu0 0.0
    %3864 = vmatpush2.msra.mxu0 0.0
    %3865 = vmatprep.subr.mxu0 0.0
    %3866 = vmatpush2.msra.mxu0 0.0
    %3867 = vmatprep.subr.mxu0 0.0
    %3868 = vmatpush2.msra.mxu0 0.0
    %3869 = vmatprep.subr.mxu0 0.0
    %3870 = vmatpush2.msra.mxu0 0.0
    %3871 = vmatprep.subr.mxu0 0.0
    %3872 = vmatpush2.msra.mxu0 0.0
    %3873 = vmatprep.subr.mxu0 0.0
    %3874 = vmatpush2.msra.mxu0 0.0
    %3875 = vmatprep.subr.mxu0 0.0
    %3876 = vmatpush2.msra.mxu0 0.0
    %3877 = vmatprep.subr.mxu0 0.0
    %3878 = vmatpush2.msra.mxu0 0.0
    %3879 = vmatprep.subr.mxu0 0.0
    %3880 = vmatpush2.msra.mxu0 0.0
    %3881 = vmatprep.subr.mxu0 0.0
    %3882 = vmatpush2.msra.mxu0 0.0
    %3883 = vmatprep.subr.mxu0 0.0
    %3884 = vmatpush2.msra.mxu0 0.0
    %3885 = vmatprep.subr.mxu0 0.0
    %3886 = vmatpush2.msra.mxu0 0.0
    %3887 = vmatprep.subr.mxu0 0.0
    %3888 = vmatpush2.msra.mxu0 0.0
    %3889 = vmatprep.subr.mxu0 0.0
    %3890 = vmatpush2.msra.mxu0 0.0
    %3891 = vmatprep.mubr.f32.mxu0 0.0
    %3892 = vmatmul.mubr.f32.gmra.mxu0 %v3751
    %v3893 = vpop.f32.mrf.mxu0
    %v3894 = vadd.f32 0.0, %v3893
    %v3895 = vpop.f32.mrf.mxu0
    %v3896 = vadd.f32 0.0, %v3895
    %3897 = vdwg.mxu0
    %v3898 = vadd.f32 %v3752, %v3823
    %v3899 = vadd.f32 %v3753, %v3825
    %v3900 = vadd.f32 %v3754, %v3894
    %v3901 = vadd.f32 %v3755, %v3896
    %v3902 = vtanh.pop %v3898
    %v3903 = vtanh.pop %v3899
    %v3904 = vtanh.pop %v3900
    %v3905 = vtanh.pop %v3901
    %v3906 = vmul.f32 %v3902, 0.5
    %v3907 = vadd.f32 %v3906, 0.5
    %v3908 = vmul.f32 %v3903, 0.5
    %v3909 = vadd.f32 %v3908, 0.5
    %v3910 = vmul.f32 %v3905, 0.5
    %v3911 = vadd.f32 %v3910, 0.5
    %v3912 = vmul.f32 %v3909, %v3749
    %v3913 = vmul.f32 %v3907, %v3904
    %v3914 = vadd.f32 %v3912, %v3913
    %v3915 = vtanh.pop %v3914
    %v3916 = vmul.f32 %v3911, %v3915
    %3917 = vst [vmem:[#allocation13] sm:$0xff] %v3916
    // Predicated region
    $region58: #{tpu_custom_call.1} parent=1 // pred_check
      _
    $region59: #{tpu_custom_call.1} parent=1 // pred_check_branch
      %3919 = sbr.rel (0) target = $region61
    $region60: #{tpu_custom_call.1} parent=1 // pred_region
      %s3921 = ssub.s32 128, 128
      %3922 = vsyncadd [#allocation7], %s3921
      %s3924 = sshll.u32 [#allocation13], 4
      %s3925 = int_to_ptr.vmem [resolvable:$true] %s3924
      %3927 = dma.vmem_to_hbm [thread:$0]  %s3925, 128, %s10, [#allocation7]
    $region61: #{tpu_custom_call.1} parent=1 // pred_fallthru
      _
    // Predicated region
    $region62: #{tpu_custom_call.1} parent=1 // pred_check
      _
    $region63: #{tpu_custom_call.1} parent=1 // pred_check_branch
      %3929 = sbr.rel (0) target = $region65
    $region64: #{tpu_custom_call.1} parent=1 // pred_region
      %3930 = dma.done [#allocation7], 128
    $region65: #{tpu_custom_call.1} parent=1 // pred_fallthru
      _
    %3931 = vsyncpa [#allocation6], 1
    %3932 = vsyncpa [#allocation9], 1
    %3933 = vsyncpa [#allocation12], 1
    %3934 = vsyncpa [#allocation7], 1

</llo_original>
